<compile_context>
chip_gen: v6e
topology: v6e:2x2x1
jax: 0.10.0
libtpu: 0.0.40
codegen_flags: <defaults>
</compile_context>

<pallas_src>
import functools

import jax
import jax.numpy as jnp
from jax import lax
from jax.experimental import pallas as pl
from jax.experimental.pallas import tpu as pltpu


def _round_up(x, m):
    return (x + m - 1) // m * m


# ---------------------------------------------------------------------------
# Fused Generator kernel: all GRU layers + Linear + Sigmoid in one call.
#   x_ref   : (T*Bp, Hp)        time-major padded input (zeros beyond F / B)
#   wih_ref : (L, Hp, 3*Hp)     gate-packed input weights (transposed, padded)
#   whh_ref : (L, Hp, 3*Hp)     gate-packed hidden weights (transposed, padded)
#   bih_ref : (L, 1, 3*Hp)      input biases  (gate order r, z, n)
#   bhh_ref : (L, 1, 3*Hp)      hidden biases
#   fcw_ref : (Hp, Hp)          FC weight (transposed, padded)
#   fcb_ref : (1, Hp)           FC bias
#   out_ref : (T*Bp, Hp)        sigmoid(FC(last-layer activations))
# Scratch:
#   act_ref : (T*Bp, Hp)        current layer's output for all timesteps
#   gi_ref  : (T*Bp, 3*Hp)      hoisted input projection (all gates, all steps)
# ---------------------------------------------------------------------------
def _generator_kernel(x_ref, wih_ref, whh_ref, bih_ref, bhh_ref, fcw_ref,
                      fcb_ref, out_ref, act_ref, gi_ref,
                      *, T, Bp, Hp, L, unroll):
    for l in range(L):                                    # static layer loop
        x_in = x_ref[...] if l == 0 else act_ref[...]     # (T*Bp, Hp)

        # -- hoisted input projection for ALL timesteps, one packed matmul ---
        gi_ref[...] = jnp.dot(x_in, wih_ref[l],
                              preferred_element_type=jnp.float32) + bih_ref[l]

        # -- serial recurrence: one packed hidden matmul + gate math / step --
        def step(t, h_prev):                              # h_prev: (Bp, Hp)
            off = pl.multiple_of(t * Bp, Bp)
            # Re-load loop-invariant weights from VMEM inside the loop (cheap,
            # hidden under matmul latency; avoids 48 live vregs across unroll).
            gh = jnp.dot(h_prev, whh_ref[l],
                         preferred_element_type=jnp.float32) + bhh_ref[l]
            gi = gi_ref[pl.ds(off, Bp), :]                # (Bp, 3*Hp)
            r = jax.nn.sigmoid(gi[:, :Hp] + gh[:, :Hp])
            z = jax.nn.sigmoid(gi[:, Hp:2 * Hp] + gh[:, Hp:2 * Hp])
            n = jnp.tanh(gi[:, 2 * Hp:] + r * gh[:, 2 * Hp:])
            h_new = (1.0 - z) * n + z * h_prev
            act_ref[pl.ds(off, Bp), :] = h_new            # lane-dense store
            return h_new                                  # carried in vregs

        h0 = jnp.zeros((Bp, Hp), jnp.float32)
        lax.fori_loop(0, T, step, h0, unroll=unroll)

    # -- fused Linear + Sigmoid over all (T*Bp) rows, one lane-dense store ---
    y = jnp.dot(act_ref[...], fcw_ref[...],
                preferred_element_type=jnp.float32) + fcb_ref[...]
    out_ref[...] = jax.nn.sigmoid(y)


# ---------------------------------------------------------------------------
# Wrapper: pad/pack to lane-aligned layouts, single pallas_call, unpad.
# ---------------------------------------------------------------------------
def generator_forward(Z_btf, params):
    """Z_btf: (B, T, feat_dim) batch-first, like PyTorch. Returns (B, T, latent)."""
    Z = jnp.asarray(Z_btf, jnp.float32)
    B, T, F = Z.shape
    layers = params["gru"]
    L = len(layers)
    H = params["fc_w"].shape[0]

    Hp = _round_up(max(H, F), 128)   # lane padding (gates + features share it)
    Bp = _round_up(B, 8)             # sublane padding

    # ---- pack weights: gate-packed (r,z,n at lane offsets 0/Hp/2Hp), --------
    # ---- transposed, zero-padded --------------------------------------------
    wih = jnp.zeros((L, Hp, 3 * Hp), jnp.float32)
    whh = jnp.zeros((L, Hp, 3 * Hp), jnp.float32)
    bih = jnp.zeros((L, 1, 3 * Hp), jnp.float32)
    bhh = jnp.zeros((L, 1, 3 * Hp), jnp.float32)
    for l, layer in enumerate(layers):
        d_in = F if l == 0 else H
        for k in range(3):                       # PyTorch gate order: r, z, n
            wih = wih.at[l, :d_in, k * Hp:k * Hp + H].set(
                layer["w_ih"][k * H:(k + 1) * H, :].T)
            whh = whh.at[l, :H, k * Hp:k * Hp + H].set(
                layer["w_hh"][k * H:(k + 1) * H, :].T)
            bih = bih.at[l, 0, k * Hp:k * Hp + H].set(
                layer["b_ih"][k * H:(k + 1) * H])
            bhh = bhh.at[l, 0, k * Hp:k * Hp + H].set(
                layer["b_hh"][k * H:(k + 1) * H])
    fcw = jnp.zeros((Hp, Hp), jnp.float32).at[:H, :H].set(params["fc_w"].T)
    fcb = jnp.zeros((1, Hp), jnp.float32).at[0, :H].set(params["fc_b"])

    # ---- time-major, padded, flattened input: (T*Bp, Hp) -------------------
    x = jnp.transpose(Z, (1, 0, 2))                          # (T, B, F)
    x = jnp.zeros((T, Bp, Hp), jnp.float32).at[:, :B, :F].set(x)
    x = x.reshape(T * Bp, Hp)

    # ---- explicit VMEM budget (keeps kernel portable to v7x 64 MiB) --------
    resident_bytes = 4 * (
        2 * T * Bp * Hp                 # x + out
        + T * Bp * Hp                   # act scratch
        + T * Bp * 3 * Hp               # gi scratch
        + 2 * L * Hp * 3 * Hp           # wih + whh
        + 2 * L * 3 * Hp                # biases
        + Hp * Hp + Hp)                 # fc
    vmem_limit = int(min(128 << 20, max(4 << 20, 2 * resident_bytes)))

    vmem = pl.BlockSpec(memory_space=pltpu.MemorySpace.VMEM)
    kernel = functools.partial(_generator_kernel, T=T, Bp=Bp, Hp=Hp, L=L,
                               unroll=min(T, 8))
    out = pl.pallas_call(
        kernel,
        out_shape=jax.ShapeDtypeStruct((T * Bp, Hp), jnp.float32),
        in_specs=[vmem] * 7,
        out_specs=vmem,
        scratch_shapes=[
            pltpu.VMEM((T * Bp, Hp), jnp.float32),       # act (layer output)
            pltpu.VMEM((T * Bp, 3 * Hp), jnp.float32),   # gi  (packed gates)
        ],
        compiler_params=pltpu.CompilerParams(vmem_limit_bytes=vmem_limit),
    )(x, wih, whh, bih, bhh, fcw, fcb)

    out = out.reshape(T, Bp, Hp)[:, :B, :H]                  # strip padding
    return jnp.transpose(out, (1, 0, 2))                     # (B, T, H)


# ---------------------------------------------------------------------------
# Deterministic parameter init (PyTorch GRU/Linear shapes & gate order r,z,n)
# ---------------------------------------------------------------------------
def init_params(key, feat_dim, latent_dim, num_layers):
    H = latent_dim
    bound = 1.0 / float(H) ** 0.5
    gru_layers = []
    for l in range(num_layers):
        d_in = feat_dim if l == 0 else H
        key, k1, k2, k3, k4 = jax.random.split(key, 5)
        gru_layers.append(dict(
            w_ih=jax.random.uniform(k1, (3 * H, d_in), jnp.float32, -bound, bound),
            w_hh=jax.random.uniform(k2, (3 * H, H), jnp.float32, -bound, bound),
            b_ih=jax.random.uniform(k3, (3 * H,), jnp.float32, -bound, bound),
            b_hh=jax.random.uniform(k4, (3 * H,), jnp.float32, -bound, bound)))
    key, k5, k6 = jax.random.split(key, 3)
    fc_w = jax.random.uniform(k5, (H, H), jnp.float32, -bound, bound)   # (out, in)
    fc_b = jax.random.uniform(k6, (H,), jnp.float32, -bound, bound)
    return dict(gru=gru_layers, fc_w=fc_w, fc_b=fc_b)


# ---------------------------------------------------------------------------
# Pure-JAX reference (same math, lax.scan) for correctness check.
# ---------------------------------------------------------------------------
def generator_reference(Z_btf, params):
    x = jnp.transpose(jnp.asarray(Z_btf, jnp.float32), (1, 0, 2))   # (T, B, F)
    B = x.shape[1]
    H = params["fc_w"].shape[0]
    for layer in params["gru"]:
        w_ih_t, w_hh_t = layer["w_ih"].T, layer["w_hh"].T
        b_ih, b_hh = layer["b_ih"], layer["b_hh"]

        def step(h, x_t, w_ih_t=w_ih_t, w_hh_t=w_hh_t, b_ih=b_ih, b_hh=b_hh):
            gi = x_t @ w_ih_t + b_ih
            gh = h @ w_hh_t + b_hh
            r = jax.nn.sigmoid(gi[:, :H] + gh[:, :H])
            z = jax.nn.sigmoid(gi[:, H:2 * H] + gh[:, H:2 * H])
            n = jnp.tanh(gi[:, 2 * H:] + r * gh[:, 2 * H:])
            h_new = (1.0 - z) * n + z * h
            return h_new, h_new

        h0 = jnp.zeros((B, H), jnp.float32)
        _, x = lax.scan(step, h0, x)
    y = jax.nn.sigmoid(x @ params["fc_w"].T + params["fc_b"])
    return jnp.transpose(y, (1, 0, 2))


if __name__ == "__main__":
    # Small shapes consistent with Generator(module_name='gru', ...)
    batch, seq_len, feat_dim, latent_dim, num_layers = 2, 8, 4, 32, 2

    key = jax.random.PRNGKey(0)
    key, kz, kp = jax.random.split(key, 3)
    Z = jax.random.normal(kz, (batch, seq_len, feat_dim), jnp.float32)
    params = init_params(kp, feat_dim, latent_dim, num_layers)

    fwd = jax.jit(generator_forward)
    out = jax.block_until_ready(fwd(Z, params))
    ref = jax.block_until_ready(generator_reference(Z, params))

    assert out.shape == (batch, seq_len, latent_dim)
    assert jnp.allclose(out, ref, atol=1e-5, rtol=1e-5)

    print("KERNEL_OK")
</pallas_src>

<mosaic_0001>
module attributes {stable_mosaic.version = 11 : i64} {
  func.func @_generator_kernel(%arg0: memref<64x128xf32, #tpu.memory_space<vmem>>, %arg1: memref<2x128x384xf32, #tpu.memory_space<vmem>>, %arg2: memref<2x128x384xf32, #tpu.memory_space<vmem>>, %arg3: memref<2x1x384xf32, #tpu.memory_space<vmem>>, %arg4: memref<2x1x384xf32, #tpu.memory_space<vmem>>, %arg5: memref<128x128xf32, #tpu.memory_space<vmem>>, %arg6: memref<1x128xf32, #tpu.memory_space<vmem>>, %arg7: memref<64x128xf32, #tpu.memory_space<vmem>>, %arg8: memref<64x128xf32, #tpu.memory_space<vmem>>, %arg9: memref<64x384xf32, #tpu.memory_space<vmem>>) attributes {dimension_semantics = [], scalar_prefetch = 0 : i64, scratch_operands = 2 : i64, tpu.core_type = #tpu.core_type<tc>} {
    %c0 = arith.constant 0 : index
    %c0_0 = arith.constant 0 : index
    %0 = vector.load %arg0[%c0, %c0_0] : memref<64x128xf32, #tpu.memory_space<vmem>>, vector<64x128xf32>
    %c0_1 = arith.constant 0 : index
    %c0_2 = arith.constant 0 : index
    %c0_3 = arith.constant 0 : index
    %1 = vector.load %arg1[%c0_1, %c0_2, %c0_3] : memref<2x128x384xf32, #tpu.memory_space<vmem>>, vector<1x128x384xf32>
    %2 = vector.shape_cast %1 : vector<1x128x384xf32> to vector<128x384xf32>
    %cst = arith.constant dense<0.000000e+00> : vector<64x384xf32>
    %3 = tpu.matmul %0, %2, %cst {dimension_numbers = #tpu.dot_dimension_numbers<[1], [0], [0], [1], [0, 0, 1, 1], [], []>} : vector<64x128xf32>, vector<128x384xf32>, vector<64x384xf32> -> vector<64x384xf32>
    %c0_4 = arith.constant 0 : index
    %c0_5 = arith.constant 0 : index
    %c0_6 = arith.constant 0 : index
    %4 = vector.load %arg3[%c0_4, %c0_5, %c0_6] : memref<2x1x384xf32, #tpu.memory_space<vmem>>, vector<1x1x384xf32>
    %5 = vector.shape_cast %4 : vector<1x1x384xf32> to vector<1x384xf32>
    %6 = vector.broadcast %5 : vector<1x384xf32> to vector<64x384xf32>
    %7 = arith.addf %3, %6 : vector<64x384xf32>
    %c0_7 = arith.constant 0 : index
    %c0_8 = arith.constant 0 : index
    %8 = vector.load %arg9[%c0_7, %c0_8] : memref<64x384xf32, #tpu.memory_space<vmem>>, vector<64x384xf32>
    tpu.vector_store %arg9[%c0_7, %c0_8], %7 {strides = array<i32>} : memref<64x384xf32, #tpu.memory_space<vmem>>, vector<64x384xf32>,
    %cst_9 = arith.constant 0.000000e+00 : f32
    %9 = vector.broadcast %cst_9 : f32 to vector<8x128xf32>
    %c0_i32 = arith.constant 0 : i32
    %c8_i32 = arith.constant 8 : i32
    %10 = arith.muli %c0_i32, %c8_i32 : i32
    %11 = tpu.assume_multiple %10, 8 : i32
    %c0_10 = arith.constant 0 : index
    %c0_11 = arith.constant 0 : index
    %c0_12 = arith.constant 0 : index
    %12 = vector.load %arg2[%c0_10, %c0_11, %c0_12] : memref<2x128x384xf32, #tpu.memory_space<vmem>>, vector<1x128x384xf32>
    %13 = vector.shape_cast %12 : vector<1x128x384xf32> to vector<128x384xf32>
    %cst_13 = arith.constant dense<0.000000e+00> : vector<8x384xf32>
    %14 = tpu.matmul %9, %13, %cst_13 {dimension_numbers = #tpu.dot_dimension_numbers<[1], [0], [0], [1], [0, 0, 1, 1], [], []>} : vector<8x128xf32>, vector<128x384xf32>, vector<8x384xf32> -> vector<8x384xf32>
    %c0_14 = arith.constant 0 : index
    %c0_15 = arith.constant 0 : index
    %c0_16 = arith.constant 0 : index
    %15 = vector.load %arg4[%c0_14, %c0_15, %c0_16] : memref<2x1x384xf32, #tpu.memory_space<vmem>>, vector<1x1x384xf32>
    %16 = vector.shape_cast %15 : vector<1x1x384xf32> to vector<1x384xf32>
    %17 = vector.broadcast %16 : vector<1x384xf32> to vector<8x384xf32>
    %18 = arith.addf %14, %17 : vector<8x384xf32>
    %19 = arith.index_cast %11 : i32 to index
    %c0_17 = arith.constant 0 : index
    %20 = vector.load %arg9[%19, %c0_17] : memref<64x384xf32, #tpu.memory_space<vmem>>, vector<8x384xf32>
    %21 = vector.extract_strided_slice %20 {offsets = [0, 0], sizes = [8, 128], strides = [1, 1]} : vector<8x384xf32> to vector<8x128xf32>
    %22 = vector.extract_strided_slice %18 {offsets = [0, 0], sizes = [8, 128], strides = [1, 1]} : vector<8x384xf32> to vector<8x128xf32>
    %23 = arith.addf %21, %22 : vector<8x128xf32>
    %24 = arith.negf %23 : vector<8x128xf32>
    %25 = math.exp %24 : vector<8x128xf32>
    %cst_18 = arith.constant 1.000000e+00 : f32
    %26 = vector.broadcast %cst_18 : f32 to vector<8x128xf32>
    %27 = arith.addf %26, %25 : vector<8x128xf32>
    %28 = arith.divf %26, %27 : vector<8x128xf32>
    %29 = vector.extract_strided_slice %20 {offsets = [0, 128], sizes = [8, 128], strides = [1, 1]} : vector<8x384xf32> to vector<8x128xf32>
    %30 = vector.extract_strided_slice %18 {offsets = [0, 128], sizes = [8, 128], strides = [1, 1]} : vector<8x384xf32> to vector<8x128xf32>
    %31 = arith.addf %29, %30 : vector<8x128xf32>
    %32 = arith.negf %31 : vector<8x128xf32>
    %33 = math.exp %32 : vector<8x128xf32>
    %cst_19 = arith.constant 1.000000e+00 : f32
    %34 = vector.broadcast %cst_19 : f32 to vector<8x128xf32>
    %35 = arith.addf %34, %33 : vector<8x128xf32>
    %36 = arith.divf %34, %35 : vector<8x128xf32>
    %37 = vector.extract_strided_slice %20 {offsets = [0, 256], sizes = [8, 128], strides = [1, 1]} : vector<8x384xf32> to vector<8x128xf32>
    %38 = vector.extract_strided_slice %18 {offsets = [0, 256], sizes = [8, 128], strides = [1, 1]} : vector<8x384xf32> to vector<8x128xf32>
    %39 = arith.mulf %28, %38 : vector<8x128xf32>
    %40 = arith.addf %37, %39 : vector<8x128xf32>
    %41 = math.tanh %40 : vector<8x128xf32>
    %cst_20 = arith.constant 1.000000e+00 : f32
    %42 = vector.broadcast %cst_20 : f32 to vector<8x128xf32>
    %43 = arith.subf %42, %36 : vector<8x128xf32>
    %44 = arith.mulf %43, %41 : vector<8x128xf32>
    %45 = arith.mulf %36, %9 : vector<8x128xf32>
    %46 = arith.addf %44, %45 : vector<8x128xf32>
    %47 = arith.index_cast %11 : i32 to index
    %c0_21 = arith.constant 0 : index
    %48 = vector.load %arg8[%47, %c0_21] : memref<64x128xf32, #tpu.memory_space<vmem>>, vector<8x128xf32>
    tpu.vector_store %arg8[%47, %c0_21], %46 {strides = array<i32>} : memref<64x128xf32, #tpu.memory_space<vmem>>, vector<8x128xf32>,
    %c1_i32 = arith.constant 1 : i32
    %c8_i32_22 = arith.constant 8 : i32
    %49 = arith.muli %c1_i32, %c8_i32_22 : i32
    %50 = tpu.assume_multiple %49, 8 : i32
    %c0_23 = arith.constant 0 : index
    %c0_24 = arith.constant 0 : index
    %c0_25 = arith.constant 0 : index
    %51 = vector.load %arg2[%c0_23, %c0_24, %c0_25] : memref<2x128x384xf32, #tpu.memory_space<vmem>>, vector<1x128x384xf32>
    %52 = vector.shape_cast %51 : vector<1x128x384xf32> to vector<128x384xf32>
    %cst_26 = arith.constant dense<0.000000e+00> : vector<8x384xf32>
    %53 = tpu.matmul %46, %52, %cst_26 {dimension_numbers = #tpu.dot_dimension_numbers<[1], [0], [0], [1], [0, 0, 1, 1], [], []>} : vector<8x128xf32>, vector<128x384xf32>, vector<8x384xf32> -> vector<8x384xf32>
    %c0_27 = arith.constant 0 : index
    %c0_28 = arith.constant 0 : index
    %c0_29 = arith.constant 0 : index
    %54 = vector.load %arg4[%c0_27, %c0_28, %c0_29] : memref<2x1x384xf32, #tpu.memory_space<vmem>>, vector<1x1x384xf32>
    %55 = vector.shape_cast %54 : vector<1x1x384xf32> to vector<1x384xf32>
    %56 = vector.broadcast %55 : vector<1x384xf32> to vector<8x384xf32>
    %57 = arith.addf %53, %56 : vector<8x384xf32>
    %58 = arith.index_cast %50 : i32 to index
    %c0_30 = arith.constant 0 : index
    %59 = vector.load %arg9[%58, %c0_30] : memref<64x384xf32, #tpu.memory_space<vmem>>, vector<8x384xf32>
    %60 = vector.extract_strided_slice %59 {offsets = [0, 0], sizes = [8, 128], strides = [1, 1]} : vector<8x384xf32> to vector<8x128xf32>
    %61 = vector.extract_strided_slice %57 {offsets = [0, 0], sizes = [8, 128], strides = [1, 1]} : vector<8x384xf32> to vector<8x128xf32>
    %62 = arith.addf %60, %61 : vector<8x128xf32>
    %63 = arith.negf %62 : vector<8x128xf32>
    %64 = math.exp %63 : vector<8x128xf32>
    %cst_31 = arith.constant 1.000000e+00 : f32
    %65 = vector.broadcast %cst_31 : f32 to vector<8x128xf32>
    %66 = arith.addf %65, %64 : vector<8x128xf32>
    %67 = arith.divf %65, %66 : vector<8x128xf32>
    %68 = vector.extract_strided_slice %59 {offsets = [0, 128], sizes = [8, 128], strides = [1, 1]} : vector<8x384xf32> to vector<8x128xf32>
    %69 = vector.extract_strided_slice %57 {offsets = [0, 128], sizes = [8, 128], strides = [1, 1]} : vector<8x384xf32> to vector<8x128xf32>
    %70 = arith.addf %68, %69 : vector<8x128xf32>
    %71 = arith.negf %70 : vector<8x128xf32>
    %72 = math.exp %71 : vector<8x128xf32>
    %cst_32 = arith.constant 1.000000e+00 : f32
    %73 = vector.broadcast %cst_32 : f32 to vector<8x128xf32>
    %74 = arith.addf %73, %72 : vector<8x128xf32>
    %75 = arith.divf %73, %74 : vector<8x128xf32>
    %76 = vector.extract_strided_slice %59 {offsets = [0, 256], sizes = [8, 128], strides = [1, 1]} : vector<8x384xf32> to vector<8x128xf32>
    %77 = vector.extract_strided_slice %57 {offsets = [0, 256], sizes = [8, 128], strides = [1, 1]} : vector<8x384xf32> to vector<8x128xf32>
    %78 = arith.mulf %67, %77 : vector<8x128xf32>
    %79 = arith.addf %76, %78 : vector<8x128xf32>
    %80 = math.tanh %79 : vector<8x128xf32>
    %cst_33 = arith.constant 1.000000e+00 : f32
    %81 = vector.broadcast %cst_33 : f32 to vector<8x128xf32>
    %82 = arith.subf %81, %75 : vector<8x128xf32>
    %83 = arith.mulf %82, %80 : vector<8x128xf32>
    %84 = arith.mulf %75, %46 : vector<8x128xf32>
    %85 = arith.addf %83, %84 : vector<8x128xf32>
    %86 = arith.index_cast %50 : i32 to index
    %c0_34 = arith.constant 0 : index
    %87 = vector.load %arg8[%86, %c0_34] : memref<64x128xf32, #tpu.memory_space<vmem>>, vector<8x128xf32>
    tpu.vector_store %arg8[%86, %c0_34], %85 {strides = array<i32>} : memref<64x128xf32, #tpu.memory_space<vmem>>, vector<8x128xf32>,
    %c2_i32 = arith.constant 2 : i32
    %c8_i32_35 = arith.constant 8 : i32
    %88 = arith.muli %c2_i32, %c8_i32_35 : i32
    %89 = tpu.assume_multiple %88, 8 : i32
    %c0_36 = arith.constant 0 : index
    %c0_37 = arith.constant 0 : index
    %c0_38 = arith.constant 0 : index
    %90 = vector.load %arg2[%c0_36, %c0_37, %c0_38] : memref<2x128x384xf32, #tpu.memory_space<vmem>>, vector<1x128x384xf32>
    %91 = vector.shape_cast %90 : vector<1x128x384xf32> to vector<128x384xf32>
    %cst_39 = arith.constant dense<0.000000e+00> : vector<8x384xf32>
    %92 = tpu.matmul %85, %91, %cst_39 {dimension_numbers = #tpu.dot_dimension_numbers<[1], [0], [0], [1], [0, 0, 1, 1], [], []>} : vector<8x128xf32>, vector<128x384xf32>, vector<8x384xf32> -> vector<8x384xf32>
    %c0_40 = arith.constant 0 : index
    %c0_41 = arith.constant 0 : index
    %c0_42 = arith.constant 0 : index
    %93 = vector.load %arg4[%c0_40, %c0_41, %c0_42] : memref<2x1x384xf32, #tpu.memory_space<vmem>>, vector<1x1x384xf32>
    %94 = vector.shape_cast %93 : vector<1x1x384xf32> to vector<1x384xf32>
    %95 = vector.broadcast %94 : vector<1x384xf32> to vector<8x384xf32>
    %96 = arith.addf %92, %95 : vector<8x384xf32>
    %97 = arith.index_cast %89 : i32 to index
    %c0_43 = arith.constant 0 : index
    %98 = vector.load %arg9[%97, %c0_43] : memref<64x384xf32, #tpu.memory_space<vmem>>, vector<8x384xf32>
    %99 = vector.extract_strided_slice %98 {offsets = [0, 0], sizes = [8, 128], strides = [1, 1]} : vector<8x384xf32> to vector<8x128xf32>
    %100 = vector.extract_strided_slice %96 {offsets = [0, 0], sizes = [8, 128], strides = [1, 1]} : vector<8x384xf32> to vector<8x128xf32>
    %101 = arith.addf %99, %100 : vector<8x128xf32>
    %102 = arith.negf %101 : vector<8x128xf32>
    %103 = math.exp %102 : vector<8x128xf32>
    %cst_44 = arith.constant 1.000000e+00 : f32
    %104 = vector.broadcast %cst_44 : f32 to vector<8x128xf32>
    %105 = arith.addf %104, %103 : vector<8x128xf32>
    %106 = arith.divf %104, %105 : vector<8x128xf32>
    %107 = vector.extract_strided_slice %98 {offsets = [0, 128], sizes = [8, 128], strides = [1, 1]} : vector<8x384xf32> to vector<8x128xf32>
    %108 = vector.extract_strided_slice %96 {offsets = [0, 128], sizes = [8, 128], strides = [1, 1]} : vector<8x384xf32> to vector<8x128xf32>
    %109 = arith.addf %107, %108 : vector<8x128xf32>
    %110 = arith.negf %109 : vector<8x128xf32>
    %111 = math.exp %110 : vector<8x128xf32>
    %cst_45 = arith.constant 1.000000e+00 : f32
    %112 = vector.broadcast %cst_45 : f32 to vector<8x128xf32>
    %113 = arith.addf %112, %111 : vector<8x128xf32>
    %114 = arith.divf %112, %113 : vector<8x128xf32>
    %115 = vector.extract_strided_slice %98 {offsets = [0, 256], sizes = [8, 128], strides = [1, 1]} : vector<8x384xf32> to vector<8x128xf32>
    %116 = vector.extract_strided_slice %96 {offsets = [0, 256], sizes = [8, 128], strides = [1, 1]} : vector<8x384xf32> to vector<8x128xf32>
    %117 = arith.mulf %106, %116 : vector<8x128xf32>
    %118 = arith.addf %115, %117 : vector<8x128xf32>
    %119 = math.tanh %118 : vector<8x128xf32>
    %cst_46 = arith.constant 1.000000e+00 : f32
    %120 = vector.broadcast %cst_46 : f32 to vector<8x128xf32>
    %121 = arith.subf %120, %114 : vector<8x128xf32>
    %122 = arith.mulf %121, %119 : vector<8x128xf32>
    %123 = arith.mulf %114, %85 : vector<8x128xf32>
    %124 = arith.addf %122, %123 : vector<8x128xf32>
    %125 = arith.index_cast %89 : i32 to index
    %c0_47 = arith.constant 0 : index
    %126 = vector.load %arg8[%125, %c0_47] : memref<64x128xf32, #tpu.memory_space<vmem>>, vector<8x128xf32>
    tpu.vector_store %arg8[%125, %c0_47], %124 {strides = array<i32>} : memref<64x128xf32, #tpu.memory_space<vmem>>, vector<8x128xf32>,
    %c3_i32 = arith.constant 3 : i32
    %c8_i32_48 = arith.constant 8 : i32
    %127 = arith.muli %c3_i32, %c8_i32_48 : i32
    %128 = tpu.assume_multiple %127, 8 : i32
    %c0_49 = arith.constant 0 : index
    %c0_50 = arith.constant 0 : index
    %c0_51 = arith.constant 0 : index
    %129 = vector.load %arg2[%c0_49, %c0_50, %c0_51] : memref<2x128x384xf32, #tpu.memory_space<vmem>>, vector<1x128x384xf32>
    %130 = vector.shape_cast %129 : vector<1x128x384xf32> to vector<128x384xf32>
    %cst_52 = arith.constant dense<0.000000e+00> : vector<8x384xf32>
    %131 = tpu.matmul %124, %130, %cst_52 {dimension_numbers = #tpu.dot_dimension_numbers<[1], [0], [0], [1], [0, 0, 1, 1], [], []>} : vector<8x128xf32>, vector<128x384xf32>, vector<8x384xf32> -> vector<8x384xf32>
    %c0_53 = arith.constant 0 : index
    %c0_54 = arith.constant 0 : index
    %c0_55 = arith.constant 0 : index
    %132 = vector.load %arg4[%c0_53, %c0_54, %c0_55] : memref<2x1x384xf32, #tpu.memory_space<vmem>>, vector<1x1x384xf32>
    %133 = vector.shape_cast %132 : vector<1x1x384xf32> to vector<1x384xf32>
    %134 = vector.broadcast %133 : vector<1x384xf32> to vector<8x384xf32>
    %135 = arith.addf %131, %134 : vector<8x384xf32>
    %136 = arith.index_cast %128 : i32 to index
    %c0_56 = arith.constant 0 : index
    %137 = vector.load %arg9[%136, %c0_56] : memref<64x384xf32, #tpu.memory_space<vmem>>, vector<8x384xf32>
    %138 = vector.extract_strided_slice %137 {offsets = [0, 0], sizes = [8, 128], strides = [1, 1]} : vector<8x384xf32> to vector<8x128xf32>
    %139 = vector.extract_strided_slice %135 {offsets = [0, 0], sizes = [8, 128], strides = [1, 1]} : vector<8x384xf32> to vector<8x128xf32>
    %140 = arith.addf %138, %139 : vector<8x128xf32>
    %141 = arith.negf %140 : vector<8x128xf32>
    %142 = math.exp %141 : vector<8x128xf32>
    %cst_57 = arith.constant 1.000000e+00 : f32
    %143 = vector.broadcast %cst_57 : f32 to vector<8x128xf32>
    %144 = arith.addf %143, %142 : vector<8x128xf32>
    %145 = arith.divf %143, %144 : vector<8x128xf32>
    %146 = vector.extract_strided_slice %137 {offsets = [0, 128], sizes = [8, 128], strides = [1, 1]} : vector<8x384xf32> to vector<8x128xf32>
    %147 = vector.extract_strided_slice %135 {offsets = [0, 128], sizes = [8, 128], strides = [1, 1]} : vector<8x384xf32> to vector<8x128xf32>
    %148 = arith.addf %146, %147 : vector<8x128xf32>
    %149 = arith.negf %148 : vector<8x128xf32>
    %150 = math.exp %149 : vector<8x128xf32>
    %cst_58 = arith.constant 1.000000e+00 : f32
    %151 = vector.broadcast %cst_58 : f32 to vector<8x128xf32>
    %152 = arith.addf %151, %150 : vector<8x128xf32>
    %153 = arith.divf %151, %152 : vector<8x128xf32>
    %154 = vector.extract_strided_slice %137 {offsets = [0, 256], sizes = [8, 128], strides = [1, 1]} : vector<8x384xf32> to vector<8x128xf32>
    %155 = vector.extract_strided_slice %135 {offsets = [0, 256], sizes = [8, 128], strides = [1, 1]} : vector<8x384xf32> to vector<8x128xf32>
    %156 = arith.mulf %145, %155 : vector<8x128xf32>
    %157 = arith.addf %154, %156 : vector<8x128xf32>
    %158 = math.tanh %157 : vector<8x128xf32>
    %cst_59 = arith.constant 1.000000e+00 : f32
    %159 = vector.broadcast %cst_59 : f32 to vector<8x128xf32>
    %160 = arith.subf %159, %153 : vector<8x128xf32>
    %161 = arith.mulf %160, %158 : vector<8x128xf32>
    %162 = arith.mulf %153, %124 : vector<8x128xf32>
    %163 = arith.addf %161, %162 : vector<8x128xf32>
    %164 = arith.index_cast %128 : i32 to index
    %c0_60 = arith.constant 0 : index
    %165 = vector.load %arg8[%164, %c0_60] : memref<64x128xf32, #tpu.memory_space<vmem>>, vector<8x128xf32>
    tpu.vector_store %arg8[%164, %c0_60], %163 {strides = array<i32>} : memref<64x128xf32, #tpu.memory_space<vmem>>, vector<8x128xf32>,
    %c4_i32 = arith.constant 4 : i32
    %c8_i32_61 = arith.constant 8 : i32
    %166 = arith.muli %c4_i32, %c8_i32_61 : i32
    %167 = tpu.assume_multiple %166, 8 : i32
    %c0_62 = arith.constant 0 : index
    %c0_63 = arith.constant 0 : index
    %c0_64 = arith.constant 0 : index
    %168 = vector.load %arg2[%c0_62, %c0_63, %c0_64] : memref<2x128x384xf32, #tpu.memory_space<vmem>>, vector<1x128x384xf32>
    %169 = vector.shape_cast %168 : vector<1x128x384xf32> to vector<128x384xf32>
    %cst_65 = arith.constant dense<0.000000e+00> : vector<8x384xf32>
    %170 = tpu.matmul %163, %169, %cst_65 {dimension_numbers = #tpu.dot_dimension_numbers<[1], [0], [0], [1], [0, 0, 1, 1], [], []>} : vector<8x128xf32>, vector<128x384xf32>, vector<8x384xf32> -> vector<8x384xf32>
    %c0_66 = arith.constant 0 : index
    %c0_67 = arith.constant 0 : index
    %c0_68 = arith.constant 0 : index
    %171 = vector.load %arg4[%c0_66, %c0_67, %c0_68] : memref<2x1x384xf32, #tpu.memory_space<vmem>>, vector<1x1x384xf32>
    %172 = vector.shape_cast %171 : vector<1x1x384xf32> to vector<1x384xf32>
    %173 = vector.broadcast %172 : vector<1x384xf32> to vector<8x384xf32>
    %174 = arith.addf %170, %173 : vector<8x384xf32>
    %175 = arith.index_cast %167 : i32 to index
    %c0_69 = arith.constant 0 : index
    %176 = vector.load %arg9[%175, %c0_69] : memref<64x384xf32, #tpu.memory_space<vmem>>, vector<8x384xf32>
    %177 = vector.extract_strided_slice %176 {offsets = [0, 0], sizes = [8, 128], strides = [1, 1]} : vector<8x384xf32> to vector<8x128xf32>
    %178 = vector.extract_strided_slice %174 {offsets = [0, 0], sizes = [8, 128], strides = [1, 1]} : vector<8x384xf32> to vector<8x128xf32>
    %179 = arith.addf %177, %178 : vector<8x128xf32>
    %180 = arith.negf %179 : vector<8x128xf32>
    %181 = math.exp %180 : vector<8x128xf32>
    %cst_70 = arith.constant 1.000000e+00 : f32
    %182 = vector.broadcast %cst_70 : f32 to vector<8x128xf32>
    %183 = arith.addf %182, %181 : vector<8x128xf32>
    %184 = arith.divf %182, %183 : vector<8x128xf32>
    %185 = vector.extract_strided_slice %176 {offsets = [0, 128], sizes = [8, 128], strides = [1, 1]} : vector<8x384xf32> to vector<8x128xf32>
    %186 = vector.extract_strided_slice %174 {offsets = [0, 128], sizes = [8, 128], strides = [1, 1]} : vector<8x384xf32> to vector<8x128xf32>
    %187 = arith.addf %185, %186 : vector<8x128xf32>
    %188 = arith.negf %187 : vector<8x128xf32>
    %189 = math.exp %188 : vector<8x128xf32>
    %cst_71 = arith.constant 1.000000e+00 : f32
    %190 = vector.broadcast %cst_71 : f32 to vector<8x128xf32>
    %191 = arith.addf %190, %189 : vector<8x128xf32>
    %192 = arith.divf %190, %191 : vector<8x128xf32>
    %193 = vector.extract_strided_slice %176 {offsets = [0, 256], sizes = [8, 128], strides = [1, 1]} : vector<8x384xf32> to vector<8x128xf32>
    %194 = vector.extract_strided_slice %174 {offsets = [0, 256], sizes = [8, 128], strides = [1, 1]} : vector<8x384xf32> to vector<8x128xf32>
    %195 = arith.mulf %184, %194 : vector<8x128xf32>
    %196 = arith.addf %193, %195 : vector<8x128xf32>
    %197 = math.tanh %196 : vector<8x128xf32>
    %cst_72 = arith.constant 1.000000e+00 : f32
    %198 = vector.broadcast %cst_72 : f32 to vector<8x128xf32>
    %199 = arith.subf %198, %192 : vector<8x128xf32>
    %200 = arith.mulf %199, %197 : vector<8x128xf32>
    %201 = arith.mulf %192, %163 : vector<8x128xf32>
    %202 = arith.addf %200, %201 : vector<8x128xf32>
    %203 = arith.index_cast %167 : i32 to index
    %c0_73 = arith.constant 0 : index
    %204 = vector.load %arg8[%203, %c0_73] : memref<64x128xf32, #tpu.memory_space<vmem>>, vector<8x128xf32>
    tpu.vector_store %arg8[%203, %c0_73], %202 {strides = array<i32>} : memref<64x128xf32, #tpu.memory_space<vmem>>, vector<8x128xf32>,
    %c5_i32 = arith.constant 5 : i32
    %c8_i32_74 = arith.constant 8 : i32
    %205 = arith.muli %c5_i32, %c8_i32_74 : i32
    %206 = tpu.assume_multiple %205, 8 : i32
    %c0_75 = arith.constant 0 : index
    %c0_76 = arith.constant 0 : index
    %c0_77 = arith.constant 0 : index
    %207 = vector.load %arg2[%c0_75, %c0_76, %c0_77] : memref<2x128x384xf32, #tpu.memory_space<vmem>>, vector<1x128x384xf32>
    %208 = vector.shape_cast %207 : vector<1x128x384xf32> to vector<128x384xf32>
    %cst_78 = arith.constant dense<0.000000e+00> : vector<8x384xf32>
    %209 = tpu.matmul %202, %208, %cst_78 {dimension_numbers = #tpu.dot_dimension_numbers<[1], [0], [0], [1], [0, 0, 1, 1], [], []>} : vector<8x128xf32>, vector<128x384xf32>, vector<8x384xf32> -> vector<8x384xf32>
    %c0_79 = arith.constant 0 : index
    %c0_80 = arith.constant 0 : index
    %c0_81 = arith.constant 0 : index
    %210 = vector.load %arg4[%c0_79, %c0_80, %c0_81] : memref<2x1x384xf32, #tpu.memory_space<vmem>>, vector<1x1x384xf32>
    %211 = vector.shape_cast %210 : vector<1x1x384xf32> to vector<1x384xf32>
    %212 = vector.broadcast %211 : vector<1x384xf32> to vector<8x384xf32>
    %213 = arith.addf %209, %212 : vector<8x384xf32>
    %214 = arith.index_cast %206 : i32 to index
    %c0_82 = arith.constant 0 : index
    %215 = vector.load %arg9[%214, %c0_82] : memref<64x384xf32, #tpu.memory_space<vmem>>, vector<8x384xf32>
    %216 = vector.extract_strided_slice %215 {offsets = [0, 0], sizes = [8, 128], strides = [1, 1]} : vector<8x384xf32> to vector<8x128xf32>
    %217 = vector.extract_strided_slice %213 {offsets = [0, 0], sizes = [8, 128], strides = [1, 1]} : vector<8x384xf32> to vector<8x128xf32>
    %218 = arith.addf %216, %217 : vector<8x128xf32>
    %219 = arith.negf %218 : vector<8x128xf32>
    %220 = math.exp %219 : vector<8x128xf32>
    %cst_83 = arith.constant 1.000000e+00 : f32
    %221 = vector.broadcast %cst_83 : f32 to vector<8x128xf32>
    %222 = arith.addf %221, %220 : vector<8x128xf32>
    %223 = arith.divf %221, %222 : vector<8x128xf32>
    %224 = vector.extract_strided_slice %215 {offsets = [0, 128], sizes = [8, 128], strides = [1, 1]} : vector<8x384xf32> to vector<8x128xf32>
    %225 = vector.extract_strided_slice %213 {offsets = [0, 128], sizes = [8, 128], strides = [1, 1]} : vector<8x384xf32> to vector<8x128xf32>
    %226 = arith.addf %224, %225 : vector<8x128xf32>
    %227 = arith.negf %226 : vector<8x128xf32>
    %228 = math.exp %227 : vector<8x128xf32>
    %cst_84 = arith.constant 1.000000e+00 : f32
    %229 = vector.broadcast %cst_84 : f32 to vector<8x128xf32>
    %230 = arith.addf %229, %228 : vector<8x128xf32>
    %231 = arith.divf %229, %230 : vector<8x128xf32>
    %232 = vector.extract_strided_slice %215 {offsets = [0, 256], sizes = [8, 128], strides = [1, 1]} : vector<8x384xf32> to vector<8x128xf32>
    %233 = vector.extract_strided_slice %213 {offsets = [0, 256], sizes = [8, 128], strides = [1, 1]} : vector<8x384xf32> to vector<8x128xf32>
    %234 = arith.mulf %223, %233 : vector<8x128xf32>
    %235 = arith.addf %232, %234 : vector<8x128xf32>
    %236 = math.tanh %235 : vector<8x128xf32>
    %cst_85 = arith.constant 1.000000e+00 : f32
    %237 = vector.broadcast %cst_85 : f32 to vector<8x128xf32>
    %238 = arith.subf %237, %231 : vector<8x128xf32>
    %239 = arith.mulf %238, %236 : vector<8x128xf32>
    %240 = arith.mulf %231, %202 : vector<8x128xf32>
    %241 = arith.addf %239, %240 : vector<8x128xf32>
    %242 = arith.index_cast %206 : i32 to index
    %c0_86 = arith.constant 0 : index
    %243 = vector.load %arg8[%242, %c0_86] : memref<64x128xf32, #tpu.memory_space<vmem>>, vector<8x128xf32>
    tpu.vector_store %arg8[%242, %c0_86], %241 {strides = array<i32>} : memref<64x128xf32, #tpu.memory_space<vmem>>, vector<8x128xf32>,
    %c6_i32 = arith.constant 6 : i32
    %c8_i32_87 = arith.constant 8 : i32
    %244 = arith.muli %c6_i32, %c8_i32_87 : i32
    %245 = tpu.assume_multiple %244, 8 : i32
    %c0_88 = arith.constant 0 : index
    %c0_89 = arith.constant 0 : index
    %c0_90 = arith.constant 0 : index
    %246 = vector.load %arg2[%c0_88, %c0_89, %c0_90] : memref<2x128x384xf32, #tpu.memory_space<vmem>>, vector<1x128x384xf32>
    %247 = vector.shape_cast %246 : vector<1x128x384xf32> to vector<128x384xf32>
    %cst_91 = arith.constant dense<0.000000e+00> : vector<8x384xf32>
    %248 = tpu.matmul %241, %247, %cst_91 {dimension_numbers = #tpu.dot_dimension_numbers<[1], [0], [0], [1], [0, 0, 1, 1], [], []>} : vector<8x128xf32>, vector<128x384xf32>, vector<8x384xf32> -> vector<8x384xf32>
    %c0_92 = arith.constant 0 : index
    %c0_93 = arith.constant 0 : index
    %c0_94 = arith.constant 0 : index
    %249 = vector.load %arg4[%c0_92, %c0_93, %c0_94] : memref<2x1x384xf32, #tpu.memory_space<vmem>>, vector<1x1x384xf32>
    %250 = vector.shape_cast %249 : vector<1x1x384xf32> to vector<1x384xf32>
    %251 = vector.broadcast %250 : vector<1x384xf32> to vector<8x384xf32>
    %252 = arith.addf %248, %251 : vector<8x384xf32>
    %253 = arith.index_cast %245 : i32 to index
    %c0_95 = arith.constant 0 : index
    %254 = vector.load %arg9[%253, %c0_95] : memref<64x384xf32, #tpu.memory_space<vmem>>, vector<8x384xf32>
    %255 = vector.extract_strided_slice %254 {offsets = [0, 0], sizes = [8, 128], strides = [1, 1]} : vector<8x384xf32> to vector<8x128xf32>
    %256 = vector.extract_strided_slice %252 {offsets = [0, 0], sizes = [8, 128], strides = [1, 1]} : vector<8x384xf32> to vector<8x128xf32>
    %257 = arith.addf %255, %256 : vector<8x128xf32>
    %258 = arith.negf %257 : vector<8x128xf32>
    %259 = math.exp %258 : vector<8x128xf32>
    %cst_96 = arith.constant 1.000000e+00 : f32
    %260 = vector.broadcast %cst_96 : f32 to vector<8x128xf32>
    %261 = arith.addf %260, %259 : vector<8x128xf32>
    %262 = arith.divf %260, %261 : vector<8x128xf32>
    %263 = vector.extract_strided_slice %254 {offsets = [0, 128], sizes = [8, 128], strides = [1, 1]} : vector<8x384xf32> to vector<8x128xf32>
    %264 = vector.extract_strided_slice %252 {offsets = [0, 128], sizes = [8, 128], strides = [1, 1]} : vector<8x384xf32> to vector<8x128xf32>
    %265 = arith.addf %263, %264 : vector<8x128xf32>
    %266 = arith.negf %265 : vector<8x128xf32>
    %267 = math.exp %266 : vector<8x128xf32>
    %cst_97 = arith.constant 1.000000e+00 : f32
    %268 = vector.broadcast %cst_97 : f32 to vector<8x128xf32>
    %269 = arith.addf %268, %267 : vector<8x128xf32>
    %270 = arith.divf %268, %269 : vector<8x128xf32>
    %271 = vector.extract_strided_slice %254 {offsets = [0, 256], sizes = [8, 128], strides = [1, 1]} : vector<8x384xf32> to vector<8x128xf32>
    %272 = vector.extract_strided_slice %252 {offsets = [0, 256], sizes = [8, 128], strides = [1, 1]} : vector<8x384xf32> to vector<8x128xf32>
    %273 = arith.mulf %262, %272 : vector<8x128xf32>
    %274 = arith.addf %271, %273 : vector<8x128xf32>
    %275 = math.tanh %274 : vector<8x128xf32>
    %cst_98 = arith.constant 1.000000e+00 : f32
    %276 = vector.broadcast %cst_98 : f32 to vector<8x128xf32>
    %277 = arith.subf %276, %270 : vector<8x128xf32>
    %278 = arith.mulf %277, %275 : vector<8x128xf32>
    %279 = arith.mulf %270, %241 : vector<8x128xf32>
    %280 = arith.addf %278, %279 : vector<8x128xf32>
    %281 = arith.index_cast %245 : i32 to index
    %c0_99 = arith.constant 0 : index
    %282 = vector.load %arg8[%281, %c0_99] : memref<64x128xf32, #tpu.memory_space<vmem>>, vector<8x128xf32>
    tpu.vector_store %arg8[%281, %c0_99], %280 {strides = array<i32>} : memref<64x128xf32, #tpu.memory_space<vmem>>, vector<8x128xf32>,
    %c7_i32 = arith.constant 7 : i32
    %c8_i32_100 = arith.constant 8 : i32
    %283 = arith.muli %c7_i32, %c8_i32_100 : i32
    %284 = tpu.assume_multiple %283, 8 : i32
    %c0_101 = arith.constant 0 : index
    %c0_102 = arith.constant 0 : index
    %c0_103 = arith.constant 0 : index
    %285 = vector.load %arg2[%c0_101, %c0_102, %c0_103] : memref<2x128x384xf32, #tpu.memory_space<vmem>>, vector<1x128x384xf32>
    %286 = vector.shape_cast %285 : vector<1x128x384xf32> to vector<128x384xf32>
    %cst_104 = arith.constant dense<0.000000e+00> : vector<8x384xf32>
    %287 = tpu.matmul %280, %286, %cst_104 {dimension_numbers = #tpu.dot_dimension_numbers<[1], [0], [0], [1], [0, 0, 1, 1], [], []>} : vector<8x128xf32>, vector<128x384xf32>, vector<8x384xf32> -> vector<8x384xf32>
    %c0_105 = arith.constant 0 : index
    %c0_106 = arith.constant 0 : index
    %c0_107 = arith.constant 0 : index
    %288 = vector.load %arg4[%c0_105, %c0_106, %c0_107] : memref<2x1x384xf32, #tpu.memory_space<vmem>>, vector<1x1x384xf32>
    %289 = vector.shape_cast %288 : vector<1x1x384xf32> to vector<1x384xf32>
    %290 = vector.broadcast %289 : vector<1x384xf32> to vector<8x384xf32>
    %291 = arith.addf %287, %290 : vector<8x384xf32>
    %292 = arith.index_cast %284 : i32 to index
    %c0_108 = arith.constant 0 : index
    %293 = vector.load %arg9[%292, %c0_108] : memref<64x384xf32, #tpu.memory_space<vmem>>, vector<8x384xf32>
    %294 = vector.extract_strided_slice %293 {offsets = [0, 0], sizes = [8, 128], strides = [1, 1]} : vector<8x384xf32> to vector<8x128xf32>
    %295 = vector.extract_strided_slice %291 {offsets = [0, 0], sizes = [8, 128], strides = [1, 1]} : vector<8x384xf32> to vector<8x128xf32>
    %296 = arith.addf %294, %295 : vector<8x128xf32>
    %297 = arith.negf %296 : vector<8x128xf32>
    %298 = math.exp %297 : vector<8x128xf32>
    %cst_109 = arith.constant 1.000000e+00 : f32
    %299 = vector.broadcast %cst_109 : f32 to vector<8x128xf32>
    %300 = arith.addf %299, %298 : vector<8x128xf32>
    %301 = arith.divf %299, %300 : vector<8x128xf32>
    %302 = vector.extract_strided_slice %293 {offsets = [0, 128], sizes = [8, 128], strides = [1, 1]} : vector<8x384xf32> to vector<8x128xf32>
    %303 = vector.extract_strided_slice %291 {offsets = [0, 128], sizes = [8, 128], strides = [1, 1]} : vector<8x384xf32> to vector<8x128xf32>
    %304 = arith.addf %302, %303 : vector<8x128xf32>
    %305 = arith.negf %304 : vector<8x128xf32>
    %306 = math.exp %305 : vector<8x128xf32>
    %cst_110 = arith.constant 1.000000e+00 : f32
    %307 = vector.broadcast %cst_110 : f32 to vector<8x128xf32>
    %308 = arith.addf %307, %306 : vector<8x128xf32>
    %309 = arith.divf %307, %308 : vector<8x128xf32>
    %310 = vector.extract_strided_slice %293 {offsets = [0, 256], sizes = [8, 128], strides = [1, 1]} : vector<8x384xf32> to vector<8x128xf32>
    %311 = vector.extract_strided_slice %291 {offsets = [0, 256], sizes = [8, 128], strides = [1, 1]} : vector<8x384xf32> to vector<8x128xf32>
    %312 = arith.mulf %301, %311 : vector<8x128xf32>
    %313 = arith.addf %310, %312 : vector<8x128xf32>
    %314 = math.tanh %313 : vector<8x128xf32>
    %cst_111 = arith.constant 1.000000e+00 : f32
    %315 = vector.broadcast %cst_111 : f32 to vector<8x128xf32>
    %316 = arith.subf %315, %309 : vector<8x128xf32>
    %317 = arith.mulf %316, %314 : vector<8x128xf32>
    %318 = arith.mulf %309, %280 : vector<8x128xf32>
    %319 = arith.addf %317, %318 : vector<8x128xf32>
    %320 = arith.index_cast %284 : i32 to index
    %c0_112 = arith.constant 0 : index
    %321 = vector.load %arg8[%320, %c0_112] : memref<64x128xf32, #tpu.memory_space<vmem>>, vector<8x128xf32>
    tpu.vector_store %arg8[%320, %c0_112], %319 {strides = array<i32>} : memref<64x128xf32, #tpu.memory_space<vmem>>, vector<8x128xf32>,
    %c8_i32_113 = arith.constant 8 : i32
    %c0_114 = arith.constant 0 : index
    %c0_115 = arith.constant 0 : index
    %322 = vector.load %arg8[%c0_114, %c0_115] : memref<64x128xf32, #tpu.memory_space<vmem>>, vector<64x128xf32>
    %c1 = arith.constant 1 : index
    %c0_116 = arith.constant 0 : index
    %c0_117 = arith.constant 0 : index
    %323 = vector.load %arg1[%c1, %c0_116, %c0_117] : memref<2x128x384xf32, #tpu.memory_space<vmem>>, vector<1x128x384xf32>
    %324 = vector.shape_cast %323 : vector<1x128x384xf32> to vector<128x384xf32>
    %cst_118 = arith.constant dense<0.000000e+00> : vector<64x384xf32>
    %325 = tpu.matmul %322, %324, %cst_118 {dimension_numbers = #tpu.dot_dimension_numbers<[1], [0], [0], [1], [0, 0, 1, 1], [], []>} : vector<64x128xf32>, vector<128x384xf32>, vector<64x384xf32> -> vector<64x384xf32>
    %c1_119 = arith.constant 1 : index
    %c0_120 = arith.constant 0 : index
    %c0_121 = arith.constant 0 : index
    %326 = vector.load %arg3[%c1_119, %c0_120, %c0_121] : memref<2x1x384xf32, #tpu.memory_space<vmem>>, vector<1x1x384xf32>
    %327 = vector.shape_cast %326 : vector<1x1x384xf32> to vector<1x384xf32>
    %328 = vector.broadcast %327 : vector<1x384xf32> to vector<64x384xf32>
    %329 = arith.addf %325, %328 : vector<64x384xf32>
    %c0_122 = arith.constant 0 : index
    %c0_123 = arith.constant 0 : index
    %330 = vector.load %arg9[%c0_122, %c0_123] : memref<64x384xf32, #tpu.memory_space<vmem>>, vector<64x384xf32>
    tpu.vector_store %arg9[%c0_122, %c0_123], %329 {strides = array<i32>} : memref<64x384xf32, #tpu.memory_space<vmem>>, vector<64x384xf32>,
    %cst_124 = arith.constant 0.000000e+00 : f32
    %331 = vector.broadcast %cst_124 : f32 to vector<8x128xf32>
    %c0_i32_125 = arith.constant 0 : i32
    %c8_i32_126 = arith.constant 8 : i32
    %332 = arith.muli %c0_i32_125, %c8_i32_126 : i32
    %333 = tpu.assume_multiple %332, 8 : i32
    %c1_127 = arith.constant 1 : index
    %c0_128 = arith.constant 0 : index
    %c0_129 = arith.constant 0 : index
    %334 = vector.load %arg2[%c1_127, %c0_128, %c0_129] : memref<2x128x384xf32, #tpu.memory_space<vmem>>, vector<1x128x384xf32>
    %335 = vector.shape_cast %334 : vector<1x128x384xf32> to vector<128x384xf32>
    %cst_130 = arith.constant dense<0.000000e+00> : vector<8x384xf32>
    %336 = tpu.matmul %331, %335, %cst_130 {dimension_numbers = #tpu.dot_dimension_numbers<[1], [0], [0], [1], [0, 0, 1, 1], [], []>} : vector<8x128xf32>, vector<128x384xf32>, vector<8x384xf32> -> vector<8x384xf32>
    %c1_131 = arith.constant 1 : index
    %c0_132 = arith.constant 0 : index
    %c0_133 = arith.constant 0 : index
    %337 = vector.load %arg4[%c1_131, %c0_132, %c0_133] : memref<2x1x384xf32, #tpu.memory_space<vmem>>, vector<1x1x384xf32>
    %338 = vector.shape_cast %337 : vector<1x1x384xf32> to vector<1x384xf32>
    %339 = vector.broadcast %338 : vector<1x384xf32> to vector<8x384xf32>
    %340 = arith.addf %336, %339 : vector<8x384xf32>
    %341 = arith.index_cast %333 : i32 to index
    %c0_134 = arith.constant 0 : index
    %342 = vector.load %arg9[%341, %c0_134] : memref<64x384xf32, #tpu.memory_space<vmem>>, vector<8x384xf32>
    %343 = vector.extract_strided_slice %342 {offsets = [0, 0], sizes = [8, 128], strides = [1, 1]} : vector<8x384xf32> to vector<8x128xf32>
    %344 = vector.extract_strided_slice %340 {offsets = [0, 0], sizes = [8, 128], strides = [1, 1]} : vector<8x384xf32> to vector<8x128xf32>
    %345 = arith.addf %343, %344 : vector<8x128xf32>
    %346 = arith.negf %345 : vector<8x128xf32>
    %347 = math.exp %346 : vector<8x128xf32>
    %cst_135 = arith.constant 1.000000e+00 : f32
    %348 = vector.broadcast %cst_135 : f32 to vector<8x128xf32>
    %349 = arith.addf %348, %347 : vector<8x128xf32>
    %350 = arith.divf %348, %349 : vector<8x128xf32>
    %351 = vector.extract_strided_slice %342 {offsets = [0, 128], sizes = [8, 128], strides = [1, 1]} : vector<8x384xf32> to vector<8x128xf32>
    %352 = vector.extract_strided_slice %340 {offsets = [0, 128], sizes = [8, 128], strides = [1, 1]} : vector<8x384xf32> to vector<8x128xf32>
    %353 = arith.addf %351, %352 : vector<8x128xf32>
    %354 = arith.negf %353 : vector<8x128xf32>
    %355 = math.exp %354 : vector<8x128xf32>
    %cst_136 = arith.constant 1.000000e+00 : f32
    %356 = vector.broadcast %cst_136 : f32 to vector<8x128xf32>
    %357 = arith.addf %356, %355 : vector<8x128xf32>
    %358 = arith.divf %356, %357 : vector<8x128xf32>
    %359 = vector.extract_strided_slice %342 {offsets = [0, 256], sizes = [8, 128], strides = [1, 1]} : vector<8x384xf32> to vector<8x128xf32>
    %360 = vector.extract_strided_slice %340 {offsets = [0, 256], sizes = [8, 128], strides = [1, 1]} : vector<8x384xf32> to vector<8x128xf32>
    %361 = arith.mulf %350, %360 : vector<8x128xf32>
    %362 = arith.addf %359, %361 : vector<8x128xf32>
    %363 = math.tanh %362 : vector<8x128xf32>
    %cst_137 = arith.constant 1.000000e+00 : f32
    %364 = vector.broadcast %cst_137 : f32 to vector<8x128xf32>
    %365 = arith.subf %364, %358 : vector<8x128xf32>
    %366 = arith.mulf %365, %363 : vector<8x128xf32>
    %367 = arith.mulf %358, %331 : vector<8x128xf32>
    %368 = arith.addf %366, %367 : vector<8x128xf32>
    %369 = arith.index_cast %333 : i32 to index
    %c0_138 = arith.constant 0 : index
    %370 = vector.load %arg8[%369, %c0_138] : memref<64x128xf32, #tpu.memory_space<vmem>>, vector<8x128xf32>
    tpu.vector_store %arg8[%369, %c0_138], %368 {strides = array<i32>} : memref<64x128xf32, #tpu.memory_space<vmem>>, vector<8x128xf32>,
    %c1_i32_139 = arith.constant 1 : i32
    %c8_i32_140 = arith.constant 8 : i32
    %371 = arith.muli %c1_i32_139, %c8_i32_140 : i32
    %372 = tpu.assume_multiple %371, 8 : i32
    %c1_141 = arith.constant 1 : index
    %c0_142 = arith.constant 0 : index
    %c0_143 = arith.constant 0 : index
    %373 = vector.load %arg2[%c1_141, %c0_142, %c0_143] : memref<2x128x384xf32, #tpu.memory_space<vmem>>, vector<1x128x384xf32>
    %374 = vector.shape_cast %373 : vector<1x128x384xf32> to vector<128x384xf32>
    %cst_144 = arith.constant dense<0.000000e+00> : vector<8x384xf32>
    %375 = tpu.matmul %368, %374, %cst_144 {dimension_numbers = #tpu.dot_dimension_numbers<[1], [0], [0], [1], [0, 0, 1, 1], [], []>} : vector<8x128xf32>, vector<128x384xf32>, vector<8x384xf32> -> vector<8x384xf32>
    %c1_145 = arith.constant 1 : index
    %c0_146 = arith.constant 0 : index
    %c0_147 = arith.constant 0 : index
    %376 = vector.load %arg4[%c1_145, %c0_146, %c0_147] : memref<2x1x384xf32, #tpu.memory_space<vmem>>, vector<1x1x384xf32>
    %377 = vector.shape_cast %376 : vector<1x1x384xf32> to vector<1x384xf32>
    %378 = vector.broadcast %377 : vector<1x384xf32> to vector<8x384xf32>
    %379 = arith.addf %375, %378 : vector<8x384xf32>
    %380 = arith.index_cast %372 : i32 to index
    %c0_148 = arith.constant 0 : index
    %381 = vector.load %arg9[%380, %c0_148] : memref<64x384xf32, #tpu.memory_space<vmem>>, vector<8x384xf32>
    %382 = vector.extract_strided_slice %381 {offsets = [0, 0], sizes = [8, 128], strides = [1, 1]} : vector<8x384xf32> to vector<8x128xf32>
    %383 = vector.extract_strided_slice %379 {offsets = [0, 0], sizes = [8, 128], strides = [1, 1]} : vector<8x384xf32> to vector<8x128xf32>
    %384 = arith.addf %382, %383 : vector<8x128xf32>
    %385 = arith.negf %384 : vector<8x128xf32>
    %386 = math.exp %385 : vector<8x128xf32>
    %cst_149 = arith.constant 1.000000e+00 : f32
    %387 = vector.broadcast %cst_149 : f32 to vector<8x128xf32>
    %388 = arith.addf %387, %386 : vector<8x128xf32>
    %389 = arith.divf %387, %388 : vector<8x128xf32>
    %390 = vector.extract_strided_slice %381 {offsets = [0, 128], sizes = [8, 128], strides = [1, 1]} : vector<8x384xf32> to vector<8x128xf32>
    %391 = vector.extract_strided_slice %379 {offsets = [0, 128], sizes = [8, 128], strides = [1, 1]} : vector<8x384xf32> to vector<8x128xf32>
    %392 = arith.addf %390, %391 : vector<8x128xf32>
    %393 = arith.negf %392 : vector<8x128xf32>
    %394 = math.exp %393 : vector<8x128xf32>
    %cst_150 = arith.constant 1.000000e+00 : f32
    %395 = vector.broadcast %cst_150 : f32 to vector<8x128xf32>
    %396 = arith.addf %395, %394 : vector<8x128xf32>
    %397 = arith.divf %395, %396 : vector<8x128xf32>
    %398 = vector.extract_strided_slice %381 {offsets = [0, 256], sizes = [8, 128], strides = [1, 1]} : vector<8x384xf32> to vector<8x128xf32>
    %399 = vector.extract_strided_slice %379 {offsets = [0, 256], sizes = [8, 128], strides = [1, 1]} : vector<8x384xf32> to vector<8x128xf32>
    %400 = arith.mulf %389, %399 : vector<8x128xf32>
    %401 = arith.addf %398, %400 : vector<8x128xf32>
    %402 = math.tanh %401 : vector<8x128xf32>
    %cst_151 = arith.constant 1.000000e+00 : f32
    %403 = vector.broadcast %cst_151 : f32 to vector<8x128xf32>
    %404 = arith.subf %403, %397 : vector<8x128xf32>
    %405 = arith.mulf %404, %402 : vector<8x128xf32>
    %406 = arith.mulf %397, %368 : vector<8x128xf32>
    %407 = arith.addf %405, %406 : vector<8x128xf32>
    %408 = arith.index_cast %372 : i32 to index
    %c0_152 = arith.constant 0 : index
    %409 = vector.load %arg8[%408, %c0_152] : memref<64x128xf32, #tpu.memory_space<vmem>>, vector<8x128xf32>
    tpu.vector_store %arg8[%408, %c0_152], %407 {strides = array<i32>} : memref<64x128xf32, #tpu.memory_space<vmem>>, vector<8x128xf32>,
    %c2_i32_153 = arith.constant 2 : i32
    %c8_i32_154 = arith.constant 8 : i32
    %410 = arith.muli %c2_i32_153, %c8_i32_154 : i32
    %411 = tpu.assume_multiple %410, 8 : i32
    %c1_155 = arith.constant 1 : index
    %c0_156 = arith.constant 0 : index
    %c0_157 = arith.constant 0 : index
    %412 = vector.load %arg2[%c1_155, %c0_156, %c0_157] : memref<2x128x384xf32, #tpu.memory_space<vmem>>, vector<1x128x384xf32>
    %413 = vector.shape_cast %412 : vector<1x128x384xf32> to vector<128x384xf32>
    %cst_158 = arith.constant dense<0.000000e+00> : vector<8x384xf32>
    %414 = tpu.matmul %407, %413, %cst_158 {dimension_numbers = #tpu.dot_dimension_numbers<[1], [0], [0], [1], [0, 0, 1, 1], [], []>} : vector<8x128xf32>, vector<128x384xf32>, vector<8x384xf32> -> vector<8x384xf32>
    %c1_159 = arith.constant 1 : index
    %c0_160 = arith.constant 0 : index
    %c0_161 = arith.constant 0 : index
    %415 = vector.load %arg4[%c1_159, %c0_160, %c0_161] : memref<2x1x384xf32, #tpu.memory_space<vmem>>, vector<1x1x384xf32>
    %416 = vector.shape_cast %415 : vector<1x1x384xf32> to vector<1x384xf32>
    %417 = vector.broadcast %416 : vector<1x384xf32> to vector<8x384xf32>
    %418 = arith.addf %414, %417 : vector<8x384xf32>
    %419 = arith.index_cast %411 : i32 to index
    %c0_162 = arith.constant 0 : index
    %420 = vector.load %arg9[%419, %c0_162] : memref<64x384xf32, #tpu.memory_space<vmem>>, vector<8x384xf32>
    %421 = vector.extract_strided_slice %420 {offsets = [0, 0], sizes = [8, 128], strides = [1, 1]} : vector<8x384xf32> to vector<8x128xf32>
    %422 = vector.extract_strided_slice %418 {offsets = [0, 0], sizes = [8, 128], strides = [1, 1]} : vector<8x384xf32> to vector<8x128xf32>
    %423 = arith.addf %421, %422 : vector<8x128xf32>
    %424 = arith.negf %423 : vector<8x128xf32>
    %425 = math.exp %424 : vector<8x128xf32>
    %cst_163 = arith.constant 1.000000e+00 : f32
    %426 = vector.broadcast %cst_163 : f32 to vector<8x128xf32>
    %427 = arith.addf %426, %425 : vector<8x128xf32>
    %428 = arith.divf %426, %427 : vector<8x128xf32>
    %429 = vector.extract_strided_slice %420 {offsets = [0, 128], sizes = [8, 128], strides = [1, 1]} : vector<8x384xf32> to vector<8x128xf32>
    %430 = vector.extract_strided_slice %418 {offsets = [0, 128], sizes = [8, 128], strides = [1, 1]} : vector<8x384xf32> to vector<8x128xf32>
    %431 = arith.addf %429, %430 : vector<8x128xf32>
    %432 = arith.negf %431 : vector<8x128xf32>
    %433 = math.exp %432 : vector<8x128xf32>
    %cst_164 = arith.constant 1.000000e+00 : f32
    %434 = vector.broadcast %cst_164 : f32 to vector<8x128xf32>
    %435 = arith.addf %434, %433 : vector<8x128xf32>
    %436 = arith.divf %434, %435 : vector<8x128xf32>
    %437 = vector.extract_strided_slice %420 {offsets = [0, 256], sizes = [8, 128], strides = [1, 1]} : vector<8x384xf32> to vector<8x128xf32>
    %438 = vector.extract_strided_slice %418 {offsets = [0, 256], sizes = [8, 128], strides = [1, 1]} : vector<8x384xf32> to vector<8x128xf32>
    %439 = arith.mulf %428, %438 : vector<8x128xf32>
    %440 = arith.addf %437, %439 : vector<8x128xf32>
    %441 = math.tanh %440 : vector<8x128xf32>
    %cst_165 = arith.constant 1.000000e+00 : f32
    %442 = vector.broadcast %cst_165 : f32 to vector<8x128xf32>
    %443 = arith.subf %442, %436 : vector<8x128xf32>
    %444 = arith.mulf %443, %441 : vector<8x128xf32>
    %445 = arith.mulf %436, %407 : vector<8x128xf32>
    %446 = arith.addf %444, %445 : vector<8x128xf32>
    %447 = arith.index_cast %411 : i32 to index
    %c0_166 = arith.constant 0 : index
    %448 = vector.load %arg8[%447, %c0_166] : memref<64x128xf32, #tpu.memory_space<vmem>>, vector<8x128xf32>
    tpu.vector_store %arg8[%447, %c0_166], %446 {strides = array<i32>} : memref<64x128xf32, #tpu.memory_space<vmem>>, vector<8x128xf32>,
    %c3_i32_167 = arith.constant 3 : i32
    %c8_i32_168 = arith.constant 8 : i32
    %449 = arith.muli %c3_i32_167, %c8_i32_168 : i32
    %450 = tpu.assume_multiple %449, 8 : i32
    %c1_169 = arith.constant 1 : index
    %c0_170 = arith.constant 0 : index
    %c0_171 = arith.constant 0 : index
    %451 = vector.load %arg2[%c1_169, %c0_170, %c0_171] : memref<2x128x384xf32, #tpu.memory_space<vmem>>, vector<1x128x384xf32>
    %452 = vector.shape_cast %451 : vector<1x128x384xf32> to vector<128x384xf32>
    %cst_172 = arith.constant dense<0.000000e+00> : vector<8x384xf32>
    %453 = tpu.matmul %446, %452, %cst_172 {dimension_numbers = #tpu.dot_dimension_numbers<[1], [0], [0], [1], [0, 0, 1, 1], [], []>} : vector<8x128xf32>, vector<128x384xf32>, vector<8x384xf32> -> vector<8x384xf32>
    %c1_173 = arith.constant 1 : index
    %c0_174 = arith.constant 0 : index
    %c0_175 = arith.constant 0 : index
    %454 = vector.load %arg4[%c1_173, %c0_174, %c0_175] : memref<2x1x384xf32, #tpu.memory_space<vmem>>, vector<1x1x384xf32>
    %455 = vector.shape_cast %454 : vector<1x1x384xf32> to vector<1x384xf32>
    %456 = vector.broadcast %455 : vector<1x384xf32> to vector<8x384xf32>
    %457 = arith.addf %453, %456 : vector<8x384xf32>
    %458 = arith.index_cast %450 : i32 to index
    %c0_176 = arith.constant 0 : index
    %459 = vector.load %arg9[%458, %c0_176] : memref<64x384xf32, #tpu.memory_space<vmem>>, vector<8x384xf32>
    %460 = vector.extract_strided_slice %459 {offsets = [0, 0], sizes = [8, 128], strides = [1, 1]} : vector<8x384xf32> to vector<8x128xf32>
    %461 = vector.extract_strided_slice %457 {offsets = [0, 0], sizes = [8, 128], strides = [1, 1]} : vector<8x384xf32> to vector<8x128xf32>
    %462 = arith.addf %460, %461 : vector<8x128xf32>
    %463 = arith.negf %462 : vector<8x128xf32>
    %464 = math.exp %463 : vector<8x128xf32>
    %cst_177 = arith.constant 1.000000e+00 : f32
    %465 = vector.broadcast %cst_177 : f32 to vector<8x128xf32>
    %466 = arith.addf %465, %464 : vector<8x128xf32>
    %467 = arith.divf %465, %466 : vector<8x128xf32>
    %468 = vector.extract_strided_slice %459 {offsets = [0, 128], sizes = [8, 128], strides = [1, 1]} : vector<8x384xf32> to vector<8x128xf32>
    %469 = vector.extract_strided_slice %457 {offsets = [0, 128], sizes = [8, 128], strides = [1, 1]} : vector<8x384xf32> to vector<8x128xf32>
    %470 = arith.addf %468, %469 : vector<8x128xf32>
    %471 = arith.negf %470 : vector<8x128xf32>
    %472 = math.exp %471 : vector<8x128xf32>
    %cst_178 = arith.constant 1.000000e+00 : f32
    %473 = vector.broadcast %cst_178 : f32 to vector<8x128xf32>
    %474 = arith.addf %473, %472 : vector<8x128xf32>
    %475 = arith.divf %473, %474 : vector<8x128xf32>
    %476 = vector.extract_strided_slice %459 {offsets = [0, 256], sizes = [8, 128], strides = [1, 1]} : vector<8x384xf32> to vector<8x128xf32>
    %477 = vector.extract_strided_slice %457 {offsets = [0, 256], sizes = [8, 128], strides = [1, 1]} : vector<8x384xf32> to vector<8x128xf32>
    %478 = arith.mulf %467, %477 : vector<8x128xf32>
    %479 = arith.addf %476, %478 : vector<8x128xf32>
    %480 = math.tanh %479 : vector<8x128xf32>
    %cst_179 = arith.constant 1.000000e+00 : f32
    %481 = vector.broadcast %cst_179 : f32 to vector<8x128xf32>
    %482 = arith.subf %481, %475 : vector<8x128xf32>
    %483 = arith.mulf %482, %480 : vector<8x128xf32>
    %484 = arith.mulf %475, %446 : vector<8x128xf32>
    %485 = arith.addf %483, %484 : vector<8x128xf32>
    %486 = arith.index_cast %450 : i32 to index
    %c0_180 = arith.constant 0 : index
    %487 = vector.load %arg8[%486, %c0_180] : memref<64x128xf32, #tpu.memory_space<vmem>>, vector<8x128xf32>
    tpu.vector_store %arg8[%486, %c0_180], %485 {strides = array<i32>} : memref<64x128xf32, #tpu.memory_space<vmem>>, vector<8x128xf32>,
    %c4_i32_181 = arith.constant 4 : i32
    %c8_i32_182 = arith.constant 8 : i32
    %488 = arith.muli %c4_i32_181, %c8_i32_182 : i32
    %489 = tpu.assume_multiple %488, 8 : i32
    %c1_183 = arith.constant 1 : index
    %c0_184 = arith.constant 0 : index
    %c0_185 = arith.constant 0 : index
    %490 = vector.load %arg2[%c1_183, %c0_184, %c0_185] : memref<2x128x384xf32, #tpu.memory_space<vmem>>, vector<1x128x384xf32>
    %491 = vector.shape_cast %490 : vector<1x128x384xf32> to vector<128x384xf32>
    %cst_186 = arith.constant dense<0.000000e+00> : vector<8x384xf32>
    %492 = tpu.matmul %485, %491, %cst_186 {dimension_numbers = #tpu.dot_dimension_numbers<[1], [0], [0], [1], [0, 0, 1, 1], [], []>} : vector<8x128xf32>, vector<128x384xf32>, vector<8x384xf32> -> vector<8x384xf32>
    %c1_187 = arith.constant 1 : index
    %c0_188 = arith.constant 0 : index
    %c0_189 = arith.constant 0 : index
    %493 = vector.load %arg4[%c1_187, %c0_188, %c0_189] : memref<2x1x384xf32, #tpu.memory_space<vmem>>, vector<1x1x384xf32>
    %494 = vector.shape_cast %493 : vector<1x1x384xf32> to vector<1x384xf32>
    %495 = vector.broadcast %494 : vector<1x384xf32> to vector<8x384xf32>
    %496 = arith.addf %492, %495 : vector<8x384xf32>
    %497 = arith.index_cast %489 : i32 to index
    %c0_190 = arith.constant 0 : index
    %498 = vector.load %arg9[%497, %c0_190] : memref<64x384xf32, #tpu.memory_space<vmem>>, vector<8x384xf32>
    %499 = vector.extract_strided_slice %498 {offsets = [0, 0], sizes = [8, 128], strides = [1, 1]} : vector<8x384xf32> to vector<8x128xf32>
    %500 = vector.extract_strided_slice %496 {offsets = [0, 0], sizes = [8, 128], strides = [1, 1]} : vector<8x384xf32> to vector<8x128xf32>
    %501 = arith.addf %499, %500 : vector<8x128xf32>
    %502 = arith.negf %501 : vector<8x128xf32>
    %503 = math.exp %502 : vector<8x128xf32>
    %cst_191 = arith.constant 1.000000e+00 : f32
    %504 = vector.broadcast %cst_191 : f32 to vector<8x128xf32>
    %505 = arith.addf %504, %503 : vector<8x128xf32>
    %506 = arith.divf %504, %505 : vector<8x128xf32>
    %507 = vector.extract_strided_slice %498 {offsets = [0, 128], sizes = [8, 128], strides = [1, 1]} : vector<8x384xf32> to vector<8x128xf32>
    %508 = vector.extract_strided_slice %496 {offsets = [0, 128], sizes = [8, 128], strides = [1, 1]} : vector<8x384xf32> to vector<8x128xf32>
    %509 = arith.addf %507, %508 : vector<8x128xf32>
    %510 = arith.negf %509 : vector<8x128xf32>
    %511 = math.exp %510 : vector<8x128xf32>
    %cst_192 = arith.constant 1.000000e+00 : f32
    %512 = vector.broadcast %cst_192 : f32 to vector<8x128xf32>
    %513 = arith.addf %512, %511 : vector<8x128xf32>
    %514 = arith.divf %512, %513 : vector<8x128xf32>
    %515 = vector.extract_strided_slice %498 {offsets = [0, 256], sizes = [8, 128], strides = [1, 1]} : vector<8x384xf32> to vector<8x128xf32>
    %516 = vector.extract_strided_slice %496 {offsets = [0, 256], sizes = [8, 128], strides = [1, 1]} : vector<8x384xf32> to vector<8x128xf32>
    %517 = arith.mulf %506, %516 : vector<8x128xf32>
    %518 = arith.addf %515, %517 : vector<8x128xf32>
    %519 = math.tanh %518 : vector<8x128xf32>
    %cst_193 = arith.constant 1.000000e+00 : f32
    %520 = vector.broadcast %cst_193 : f32 to vector<8x128xf32>
    %521 = arith.subf %520, %514 : vector<8x128xf32>
    %522 = arith.mulf %521, %519 : vector<8x128xf32>
    %523 = arith.mulf %514, %485 : vector<8x128xf32>
    %524 = arith.addf %522, %523 : vector<8x128xf32>
    %525 = arith.index_cast %489 : i32 to index
    %c0_194 = arith.constant 0 : index
    %526 = vector.load %arg8[%525, %c0_194] : memref<64x128xf32, #tpu.memory_space<vmem>>, vector<8x128xf32>
    tpu.vector_store %arg8[%525, %c0_194], %524 {strides = array<i32>} : memref<64x128xf32, #tpu.memory_space<vmem>>, vector<8x128xf32>,
    %c5_i32_195 = arith.constant 5 : i32
    %c8_i32_196 = arith.constant 8 : i32
    %527 = arith.muli %c5_i32_195, %c8_i32_196 : i32
    %528 = tpu.assume_multiple %527, 8 : i32
    %c1_197 = arith.constant 1 : index
    %c0_198 = arith.constant 0 : index
    %c0_199 = arith.constant 0 : index
    %529 = vector.load %arg2[%c1_197, %c0_198, %c0_199] : memref<2x128x384xf32, #tpu.memory_space<vmem>>, vector<1x128x384xf32>
    %530 = vector.shape_cast %529 : vector<1x128x384xf32> to vector<128x384xf32>
    %cst_200 = arith.constant dense<0.000000e+00> : vector<8x384xf32>
    %531 = tpu.matmul %524, %530, %cst_200 {dimension_numbers = #tpu.dot_dimension_numbers<[1], [0], [0], [1], [0, 0, 1, 1], [], []>} : vector<8x128xf32>, vector<128x384xf32>, vector<8x384xf32> -> vector<8x384xf32>
    %c1_201 = arith.constant 1 : index
    %c0_202 = arith.constant 0 : index
    %c0_203 = arith.constant 0 : index
    %532 = vector.load %arg4[%c1_201, %c0_202, %c0_203] : memref<2x1x384xf32, #tpu.memory_space<vmem>>, vector<1x1x384xf32>
    %533 = vector.shape_cast %532 : vector<1x1x384xf32> to vector<1x384xf32>
    %534 = vector.broadcast %533 : vector<1x384xf32> to vector<8x384xf32>
    %535 = arith.addf %531, %534 : vector<8x384xf32>
    %536 = arith.index_cast %528 : i32 to index
    %c0_204 = arith.constant 0 : index
    %537 = vector.load %arg9[%536, %c0_204] : memref<64x384xf32, #tpu.memory_space<vmem>>, vector<8x384xf32>
    %538 = vector.extract_strided_slice %537 {offsets = [0, 0], sizes = [8, 128], strides = [1, 1]} : vector<8x384xf32> to vector<8x128xf32>
    %539 = vector.extract_strided_slice %535 {offsets = [0, 0], sizes = [8, 128], strides = [1, 1]} : vector<8x384xf32> to vector<8x128xf32>
    %540 = arith.addf %538, %539 : vector<8x128xf32>
    %541 = arith.negf %540 : vector<8x128xf32>
    %542 = math.exp %541 : vector<8x128xf32>
    %cst_205 = arith.constant 1.000000e+00 : f32
    %543 = vector.broadcast %cst_205 : f32 to vector<8x128xf32>
    %544 = arith.addf %543, %542 : vector<8x128xf32>
    %545 = arith.divf %543, %544 : vector<8x128xf32>
    %546 = vector.extract_strided_slice %537 {offsets = [0, 128], sizes = [8, 128], strides = [1, 1]} : vector<8x384xf32> to vector<8x128xf32>
    %547 = vector.extract_strided_slice %535 {offsets = [0, 128], sizes = [8, 128], strides = [1, 1]} : vector<8x384xf32> to vector<8x128xf32>
    %548 = arith.addf %546, %547 : vector<8x128xf32>
    %549 = arith.negf %548 : vector<8x128xf32>
    %550 = math.exp %549 : vector<8x128xf32>
    %cst_206 = arith.constant 1.000000e+00 : f32
    %551 = vector.broadcast %cst_206 : f32 to vector<8x128xf32>
    %552 = arith.addf %551, %550 : vector<8x128xf32>
    %553 = arith.divf %551, %552 : vector<8x128xf32>
    %554 = vector.extract_strided_slice %537 {offsets = [0, 256], sizes = [8, 128], strides = [1, 1]} : vector<8x384xf32> to vector<8x128xf32>
    %555 = vector.extract_strided_slice %535 {offsets = [0, 256], sizes = [8, 128], strides = [1, 1]} : vector<8x384xf32> to vector<8x128xf32>
    %556 = arith.mulf %545, %555 : vector<8x128xf32>
    %557 = arith.addf %554, %556 : vector<8x128xf32>
    %558 = math.tanh %557 : vector<8x128xf32>
    %cst_207 = arith.constant 1.000000e+00 : f32
    %559 = vector.broadcast %cst_207 : f32 to vector<8x128xf32>
    %560 = arith.subf %559, %553 : vector<8x128xf32>
    %561 = arith.mulf %560, %558 : vector<8x128xf32>
    %562 = arith.mulf %553, %524 : vector<8x128xf32>
    %563 = arith.addf %561, %562 : vector<8x128xf32>
    %564 = arith.index_cast %528 : i32 to index
    %c0_208 = arith.constant 0 : index
    %565 = vector.load %arg8[%564, %c0_208] : memref<64x128xf32, #tpu.memory_space<vmem>>, vector<8x128xf32>
    tpu.vector_store %arg8[%564, %c0_208], %563 {strides = array<i32>} : memref<64x128xf32, #tpu.memory_space<vmem>>, vector<8x128xf32>,
    %c6_i32_209 = arith.constant 6 : i32
    %c8_i32_210 = arith.constant 8 : i32
    %566 = arith.muli %c6_i32_209, %c8_i32_210 : i32
    %567 = tpu.assume_multiple %566, 8 : i32
    %c1_211 = arith.constant 1 : index
    %c0_212 = arith.constant 0 : index
    %c0_213 = arith.constant 0 : index
    %568 = vector.load %arg2[%c1_211, %c0_212, %c0_213] : memref<2x128x384xf32, #tpu.memory_space<vmem>>, vector<1x128x384xf32>
    %569 = vector.shape_cast %568 : vector<1x128x384xf32> to vector<128x384xf32>
    %cst_214 = arith.constant dense<0.000000e+00> : vector<8x384xf32>
    %570 = tpu.matmul %563, %569, %cst_214 {dimension_numbers = #tpu.dot_dimension_numbers<[1], [0], [0], [1], [0, 0, 1, 1], [], []>} : vector<8x128xf32>, vector<128x384xf32>, vector<8x384xf32> -> vector<8x384xf32>
    %c1_215 = arith.constant 1 : index
    %c0_216 = arith.constant 0 : index
    %c0_217 = arith.constant 0 : index
    %571 = vector.load %arg4[%c1_215, %c0_216, %c0_217] : memref<2x1x384xf32, #tpu.memory_space<vmem>>, vector<1x1x384xf32>
    %572 = vector.shape_cast %571 : vector<1x1x384xf32> to vector<1x384xf32>
    %573 = vector.broadcast %572 : vector<1x384xf32> to vector<8x384xf32>
    %574 = arith.addf %570, %573 : vector<8x384xf32>
    %575 = arith.index_cast %567 : i32 to index
    %c0_218 = arith.constant 0 : index
    %576 = vector.load %arg9[%575, %c0_218] : memref<64x384xf32, #tpu.memory_space<vmem>>, vector<8x384xf32>
    %577 = vector.extract_strided_slice %576 {offsets = [0, 0], sizes = [8, 128], strides = [1, 1]} : vector<8x384xf32> to vector<8x128xf32>
    %578 = vector.extract_strided_slice %574 {offsets = [0, 0], sizes = [8, 128], strides = [1, 1]} : vector<8x384xf32> to vector<8x128xf32>
    %579 = arith.addf %577, %578 : vector<8x128xf32>
    %580 = arith.negf %579 : vector<8x128xf32>
    %581 = math.exp %580 : vector<8x128xf32>
    %cst_219 = arith.constant 1.000000e+00 : f32
    %582 = vector.broadcast %cst_219 : f32 to vector<8x128xf32>
    %583 = arith.addf %582, %581 : vector<8x128xf32>
    %584 = arith.divf %582, %583 : vector<8x128xf32>
    %585 = vector.extract_strided_slice %576 {offsets = [0, 128], sizes = [8, 128], strides = [1, 1]} : vector<8x384xf32> to vector<8x128xf32>
    %586 = vector.extract_strided_slice %574 {offsets = [0, 128], sizes = [8, 128], strides = [1, 1]} : vector<8x384xf32> to vector<8x128xf32>
    %587 = arith.addf %585, %586 : vector<8x128xf32>
    %588 = arith.negf %587 : vector<8x128xf32>
    %589 = math.exp %588 : vector<8x128xf32>
    %cst_220 = arith.constant 1.000000e+00 : f32
    %590 = vector.broadcast %cst_220 : f32 to vector<8x128xf32>
    %591 = arith.addf %590, %589 : vector<8x128xf32>
    %592 = arith.divf %590, %591 : vector<8x128xf32>
    %593 = vector.extract_strided_slice %576 {offsets = [0, 256], sizes = [8, 128], strides = [1, 1]} : vector<8x384xf32> to vector<8x128xf32>
    %594 = vector.extract_strided_slice %574 {offsets = [0, 256], sizes = [8, 128], strides = [1, 1]} : vector<8x384xf32> to vector<8x128xf32>
    %595 = arith.mulf %584, %594 : vector<8x128xf32>
    %596 = arith.addf %593, %595 : vector<8x128xf32>
    %597 = math.tanh %596 : vector<8x128xf32>
    %cst_221 = arith.constant 1.000000e+00 : f32
    %598 = vector.broadcast %cst_221 : f32 to vector<8x128xf32>
    %599 = arith.subf %598, %592 : vector<8x128xf32>
    %600 = arith.mulf %599, %597 : vector<8x128xf32>
    %601 = arith.mulf %592, %563 : vector<8x128xf32>
    %602 = arith.addf %600, %601 : vector<8x128xf32>
    %603 = arith.index_cast %567 : i32 to index
    %c0_222 = arith.constant 0 : index
    %604 = vector.load %arg8[%603, %c0_222] : memref<64x128xf32, #tpu.memory_space<vmem>>, vector<8x128xf32>
    tpu.vector_store %arg8[%603, %c0_222], %602 {strides = array<i32>} : memref<64x128xf32, #tpu.memory_space<vmem>>, vector<8x128xf32>,
    %c7_i32_223 = arith.constant 7 : i32
    %c8_i32_224 = arith.constant 8 : i32
    %605 = arith.muli %c7_i32_223, %c8_i32_224 : i32
    %606 = tpu.assume_multiple %605, 8 : i32
    %c1_225 = arith.constant 1 : index
    %c0_226 = arith.constant 0 : index
    %c0_227 = arith.constant 0 : index
    %607 = vector.load %arg2[%c1_225, %c0_226, %c0_227] : memref<2x128x384xf32, #tpu.memory_space<vmem>>, vector<1x128x384xf32>
    %608 = vector.shape_cast %607 : vector<1x128x384xf32> to vector<128x384xf32>
    %cst_228 = arith.constant dense<0.000000e+00> : vector<8x384xf32>
    %609 = tpu.matmul %602, %608, %cst_228 {dimension_numbers = #tpu.dot_dimension_numbers<[1], [0], [0], [1], [0, 0, 1, 1], [], []>} : vector<8x128xf32>, vector<128x384xf32>, vector<8x384xf32> -> vector<8x384xf32>
    %c1_229 = arith.constant 1 : index
    %c0_230 = arith.constant 0 : index
    %c0_231 = arith.constant 0 : index
    %610 = vector.load %arg4[%c1_229, %c0_230, %c0_231] : memref<2x1x384xf32, #tpu.memory_space<vmem>>, vector<1x1x384xf32>
    %611 = vector.shape_cast %610 : vector<1x1x384xf32> to vector<1x384xf32>
    %612 = vector.broadcast %611 : vector<1x384xf32> to vector<8x384xf32>
    %613 = arith.addf %609, %612 : vector<8x384xf32>
    %614 = arith.index_cast %606 : i32 to index
    %c0_232 = arith.constant 0 : index
    %615 = vector.load %arg9[%614, %c0_232] : memref<64x384xf32, #tpu.memory_space<vmem>>, vector<8x384xf32>
    %616 = vector.extract_strided_slice %615 {offsets = [0, 0], sizes = [8, 128], strides = [1, 1]} : vector<8x384xf32> to vector<8x128xf32>
    %617 = vector.extract_strided_slice %613 {offsets = [0, 0], sizes = [8, 128], strides = [1, 1]} : vector<8x384xf32> to vector<8x128xf32>
    %618 = arith.addf %616, %617 : vector<8x128xf32>
    %619 = arith.negf %618 : vector<8x128xf32>
    %620 = math.exp %619 : vector<8x128xf32>
    %cst_233 = arith.constant 1.000000e+00 : f32
    %621 = vector.broadcast %cst_233 : f32 to vector<8x128xf32>
    %622 = arith.addf %621, %620 : vector<8x128xf32>
    %623 = arith.divf %621, %622 : vector<8x128xf32>
    %624 = vector.extract_strided_slice %615 {offsets = [0, 128], sizes = [8, 128], strides = [1, 1]} : vector<8x384xf32> to vector<8x128xf32>
    %625 = vector.extract_strided_slice %613 {offsets = [0, 128], sizes = [8, 128], strides = [1, 1]} : vector<8x384xf32> to vector<8x128xf32>
    %626 = arith.addf %624, %625 : vector<8x128xf32>
    %627 = arith.negf %626 : vector<8x128xf32>
    %628 = math.exp %627 : vector<8x128xf32>
    %cst_234 = arith.constant 1.000000e+00 : f32
    %629 = vector.broadcast %cst_234 : f32 to vector<8x128xf32>
    %630 = arith.addf %629, %628 : vector<8x128xf32>
    %631 = arith.divf %629, %630 : vector<8x128xf32>
    %632 = vector.extract_strided_slice %615 {offsets = [0, 256], sizes = [8, 128], strides = [1, 1]} : vector<8x384xf32> to vector<8x128xf32>
    %633 = vector.extract_strided_slice %613 {offsets = [0, 256], sizes = [8, 128], strides = [1, 1]} : vector<8x384xf32> to vector<8x128xf32>
    %634 = arith.mulf %623, %633 : vector<8x128xf32>
    %635 = arith.addf %632, %634 : vector<8x128xf32>
    %636 = math.tanh %635 : vector<8x128xf32>
    %cst_235 = arith.constant 1.000000e+00 : f32
    %637 = vector.broadcast %cst_235 : f32 to vector<8x128xf32>
    %638 = arith.subf %637, %631 : vector<8x128xf32>
    %639 = arith.mulf %638, %636 : vector<8x128xf32>
    %640 = arith.mulf %631, %602 : vector<8x128xf32>
    %641 = arith.addf %639, %640 : vector<8x128xf32>
    %642 = arith.index_cast %606 : i32 to index
    %c0_236 = arith.constant 0 : index
    %643 = vector.load %arg8[%642, %c0_236] : memref<64x128xf32, #tpu.memory_space<vmem>>, vector<8x128xf32>
    tpu.vector_store %arg8[%642, %c0_236], %641 {strides = array<i32>} : memref<64x128xf32, #tpu.memory_space<vmem>>, vector<8x128xf32>,
    %c8_i32_237 = arith.constant 8 : i32
    %c0_238 = arith.constant 0 : index
    %c0_239 = arith.constant 0 : index
    %644 = vector.load %arg8[%c0_238, %c0_239] : memref<64x128xf32, #tpu.memory_space<vmem>>, vector<64x128xf32>
    %c0_240 = arith.constant 0 : index
    %c0_241 = arith.constant 0 : index
    %645 = vector.load %arg5[%c0_240, %c0_241] : memref<128x128xf32, #tpu.memory_space<vmem>>, vector<128x128xf32>
    %cst_242 = arith.constant dense<0.000000e+00> : vector<64x128xf32>
    %646 = tpu.matmul %644, %645, %cst_242 {dimension_numbers = #tpu.dot_dimension_numbers<[1], [0], [0], [1], [0, 0, 1, 1], [], []>} : vector<64x128xf32>, vector<128x128xf32>, vector<64x128xf32> -> vector<64x128xf32>
    %c0_243 = arith.constant 0 : index
    %c0_244 = arith.constant 0 : index
    %647 = vector.load %arg6[%c0_243, %c0_244] : memref<1x128xf32, #tpu.memory_space<vmem>>, vector<1x128xf32>
    %648 = vector.broadcast %647 : vector<1x128xf32> to vector<64x128xf32>
    %649 = arith.addf %646, %648 : vector<64x128xf32>
    %650 = arith.negf %649 : vector<64x128xf32>
    %651 = math.exp %650 : vector<64x128xf32>
    %cst_245 = arith.constant 1.000000e+00 : f32
    %652 = vector.broadcast %cst_245 : f32 to vector<64x128xf32>
    %653 = arith.addf %652, %651 : vector<64x128xf32>
    %654 = arith.divf %652, %653 : vector<64x128xf32>
    %c0_246 = arith.constant 0 : index
    %c0_247 = arith.constant 0 : index
    %655 = vector.load %arg7[%c0_246, %c0_247] : memref<64x128xf32, #tpu.memory_space<vmem>>, vector<64x128xf32>
    tpu.vector_store %arg7[%c0_246, %c0_247], %654 {strides = array<i32>} : memref<64x128xf32, #tpu.memory_space<vmem>>, vector<64x128xf32>,
    return
  }
}

</mosaic_0001>

<llo_original>
// kernel: generator_forward.1
$region0: #{generator_forward.1}
  #allocation0 [shape = 'u32[]', space=smem, size = 0x4, offset = 0x4, fixed_abs, tag = 'smem constant byte address 0x4 - core index']
  #allocation1 [shape = 'u32[144,128]{1,0:T(1,128)}', space=vmem, size = 0x12000, scoped, tag = 'internal scratch']
  #allocation2 [shape = 'f32[64,128]{1,0:T(8,128)}', space=vmem, size = 0x8000, scoped, tag = 'scratch operand']
  #allocation3 [shape = 'f32[64,384]{1,0:T(8,128)}', space=vmem, size = 0x18000, scoped, tag = 'scratch operand']
  %s0 = inlined_call_operand.vmem [shape: f32[64,128], index: 0, kind: input, shape index: {}]
  %s1 = inlined_call_operand.vmem [shape: f32[2,128,384], index: 1, kind: input, shape index: {}]
  %s2 = inlined_call_operand.vmem [shape: f32[2,128,384], index: 2, kind: input, shape index: {}]
  %s3 = inlined_call_operand.vmem [shape: f32[2,1,384], index: 3, kind: input, shape index: {}]
  %s4 = inlined_call_operand.vmem [shape: f32[2,1,384], index: 4, kind: input, shape index: {}]
  %s5 = inlined_call_operand.vmem [shape: f32[128,128], index: 5, kind: input, shape index: {}]
  %s6 = inlined_call_operand.vmem [shape: f32[1,128], index: 6, kind: input, shape index: {}]
  %s7 = inlined_call_operand.vmem [shape: f32[64,128], index: 7, kind: output, shape index: {}]
  %s8 = sld [smem:[#allocation0]]
  $region38: #{generator_forward.1} parent=0
    _
  %s10 = ssub.s32 1, %s8
  %s11 = scalar_select 0, %s10, %s8
  // Predicated region
  $region2: #{generator_forward.1} parent=0 // pred_check
    _
  $region3: #{generator_forward.1} parent=0 // pred_check_branch
    %13 = sbr.rel (0) target = $region5
  $region4: #{generator_forward.1} parent=0 // pred_region
    _
  $region5: #{generator_forward.1} parent=0 // pred_fallthru
    _
  // Predicated region
  $region6: #{generator_forward.1} parent=0 // pred_check
    _
  $region7: #{generator_forward.1} parent=0 // pred_check_branch
    %15 = sbr.rel (0) target = $region9
  $region8: #{generator_forward.1} parent=0 // pred_region
    _
  $region9: #{generator_forward.1} parent=0 // pred_fallthru
    _
  // Predicated region
  $region10: #{generator_forward.1} parent=0 // pred_check
    _
  $region11: #{generator_forward.1} parent=0 // pred_check_branch
    %17 = sbr.rel (0) target = $region13
  $region12: #{generator_forward.1} parent=0 // pred_region
    _
  $region13: #{generator_forward.1} parent=0 // pred_fallthru
    _
  // Predicated region
  $region14: #{generator_forward.1} parent=0 // pred_check
    _
  $region15: #{generator_forward.1} parent=0 // pred_check_branch
    %19 = sbr.rel (0) target = $region17
  $region16: #{generator_forward.1} parent=0 // pred_region
    _
  $region17: #{generator_forward.1} parent=0 // pred_fallthru
    _
  // Predicated region
  $region18: #{generator_forward.1} parent=0 // pred_check
    _
  $region19: #{generator_forward.1} parent=0 // pred_check_branch
    %21 = sbr.rel (0) target = $region21
  $region20: #{generator_forward.1} parent=0 // pred_region
    _
  $region21: #{generator_forward.1} parent=0 // pred_fallthru
    _
  // Predicated region
  $region22: #{generator_forward.1} parent=0 // pred_check
    _
  $region23: #{generator_forward.1} parent=0 // pred_check_branch
    %23 = sbr.rel (0) target = $region25
  $region24: #{generator_forward.1} parent=0 // pred_region
    _
  $region25: #{generator_forward.1} parent=0 // pred_fallthru
    _
  // Predicated region
  $region26: #{generator_forward.1} parent=0 // pred_check
    _
  $region27: #{generator_forward.1} parent=0 // pred_check_branch
    %25 = sbr.rel (0) target = $region29
  $region28: #{generator_forward.1} parent=0 // pred_region
    _
  $region29: #{generator_forward.1} parent=0 // pred_fallthru
    _
  %v26 = vld [vmem:[%s0] sm:$0xff]
  %v27 = vld [vmem:[%s0 + $0x8] sm:$0xff]
  %v28 = vld [vmem:[%s0 + $0x10] sm:$0xff]
  %v29 = vld [vmem:[%s0 + $0x18] sm:$0xff]
  %v30 = vld [vmem:[%s0 + $0x20] sm:$0xff]
  %v31 = vld [vmem:[%s0 + $0x28] sm:$0xff]
  %v32 = vld [vmem:[%s0 + $0x30] sm:$0xff]
  %v33 = vld [vmem:[%s0 + $0x38] sm:$0xff]
  %v34 = vld [vmem:[%s1] sm:$0xff]
  %v35 = vld [vmem:[%s1 + $0x8] sm:$0xff]
  %v36 = vld [vmem:[%s1 + $0x10] sm:$0xff]
  %v37 = vld [vmem:[%s1 + $0x18] sm:$0xff]
  %v38 = vld [vmem:[%s1 + $0x20] sm:$0xff]
  %v39 = vld [vmem:[%s1 + $0x28] sm:$0xff]
  %v40 = vld [vmem:[%s1 + $0x30] sm:$0xff]
  %v41 = vld [vmem:[%s1 + $0x38] sm:$0xff]
  %v42 = vld [vmem:[%s1 + $0x40] sm:$0xff]
  %v43 = vld [vmem:[%s1 + $0x48] sm:$0xff]
  %v44 = vld [vmem:[%s1 + $0x50] sm:$0xff]
  %v45 = vld [vmem:[%s1 + $0x58] sm:$0xff]
  %v46 = vld [vmem:[%s1 + $0x60] sm:$0xff]
  %v47 = vld [vmem:[%s1 + $0x68] sm:$0xff]
  %v48 = vld [vmem:[%s1 + $0x70] sm:$0xff]
  %v49 = vld [vmem:[%s1 + $0x78] sm:$0xff]
  %v50 = vld [vmem:[%s1 + $0x80] sm:$0xff]
  %v51 = vld [vmem:[%s1 + $0x88] sm:$0xff]
  %v52 = vld [vmem:[%s1 + $0x90] sm:$0xff]
  %v53 = vld [vmem:[%s1 + $0x98] sm:$0xff]
  %v54 = vld [vmem:[%s1 + $0xa0] sm:$0xff]
  %v55 = vld [vmem:[%s1 + $0xa8] sm:$0xff]
  %v56 = vld [vmem:[%s1 + $0xb0] sm:$0xff]
  %v57 = vld [vmem:[%s1 + $0xb8] sm:$0xff]
  %v58 = vld [vmem:[%s1 + $0xc0] sm:$0xff]
  %v59 = vld [vmem:[%s1 + $0xc8] sm:$0xff]
  %v60 = vld [vmem:[%s1 + $0xd0] sm:$0xff]
  %v61 = vld [vmem:[%s1 + $0xd8] sm:$0xff]
  %v62 = vld [vmem:[%s1 + $0xe0] sm:$0xff]
  %v63 = vld [vmem:[%s1 + $0xe8] sm:$0xff]
  %v64 = vld [vmem:[%s1 + $0xf0] sm:$0xff]
  %v65 = vld [vmem:[%s1 + $0xf8] sm:$0xff]
  %v66 = vld [vmem:[%s1 + $0x100] sm:$0xff]
  %v67 = vld [vmem:[%s1 + $0x108] sm:$0xff]
  %v68 = vld [vmem:[%s1 + $0x110] sm:$0xff]
  %v69 = vld [vmem:[%s1 + $0x118] sm:$0xff]
  %v70 = vld [vmem:[%s1 + $0x120] sm:$0xff]
  %v71 = vld [vmem:[%s1 + $0x128] sm:$0xff]
  %v72 = vld [vmem:[%s1 + $0x130] sm:$0xff]
  %v73 = vld [vmem:[%s1 + $0x138] sm:$0xff]
  %v74 = vld [vmem:[%s1 + $0x140] sm:$0xff]
  %v75 = vld [vmem:[%s1 + $0x148] sm:$0xff]
  %v76 = vld [vmem:[%s1 + $0x150] sm:$0xff]
  %v77 = vld [vmem:[%s1 + $0x158] sm:$0xff]
  %v78 = vld [vmem:[%s1 + $0x160] sm:$0xff]
  %v79 = vld [vmem:[%s1 + $0x168] sm:$0xff]
  %v80 = vld [vmem:[%s1 + $0x170] sm:$0xff]
  %v81 = vld [vmem:[%s1 + $0x178] sm:$0xff]
  %v82 = vld [vmem:[%s3] sm:$0x7]
  %v84 = vlaneseq
  %v85 = vshrl.u32 %v84, 7
  %v86 = vsub.s32 0, %v85
  %v87 = vrot.slane %v82, %v86
  %v88 = vlaneseq
  %v89 = vshrl.u32 %v88, 7
  %v90 = vsub.s32 1, %v89
  %v91 = vrot.slane %v82, %v90
  %v92 = vlaneseq
  %v93 = vshrl.u32 %v92, 7
  %v94 = vsub.s32 2, %v93
  %v95 = vrot.slane %v82, %v94
  %99 = vmatprep.subr.mxu0 %v80
  %100 = vmatpush1.msra.mxu0 %v79
  %101 = vmatprep.subr.mxu0 %v77
  %102 = vmatpush1.msra.mxu0 %v76
  %103 = vmatprep.subr.mxu0 %v74
  %104 = vmatpush1.msra.mxu0 %v73
  %105 = vmatprep.subr.mxu0 %v71
  %106 = vmatpush1.msra.mxu0 %v70
  %107 = vmatprep.subr.mxu0 %v68
  %108 = vmatpush1.msra.mxu0 %v67
  %109 = vmatprep.subr.mxu0 %v65
  %110 = vmatpush1.msra.mxu0 %v64
  %111 = vmatprep.subr.mxu0 %v62
  %112 = vmatpush1.msra.mxu0 %v61
  %113 = vmatprep.subr.mxu0 %v59
  %114 = vmatpush1.msra.mxu0 %v58
  %115 = vmatprep.subr.mxu0 %v56
  %116 = vmatpush1.msra.mxu0 %v55
  %117 = vmatprep.subr.mxu0 %v53
  %118 = vmatpush1.msra.mxu0 %v52
  %119 = vmatprep.subr.mxu0 %v50
  %120 = vmatpush1.msra.mxu0 %v49
  %121 = vmatprep.subr.mxu0 %v47
  %122 = vmatpush1.msra.mxu0 %v46
  %123 = vmatprep.subr.mxu0 %v44
  %124 = vmatpush1.msra.mxu0 %v43
  %125 = vmatprep.subr.mxu0 %v41
  %126 = vmatpush1.msra.mxu0 %v40
  %127 = vmatprep.subr.mxu0 %v38
  %128 = vmatpush1.msra.mxu0 %v37
  %129 = vmatprep.subr.mxu0 %v35
  %130 = vmatpush1.msra.mxu0 %v34
  %131 = vmatprep.subr.mxu0 0.0
  %132 = vmatpush2.msra.mxu0 0.0
  %133 = vmatprep.subr.mxu0 0.0
  %134 = vmatpush2.msra.mxu0 0.0
  %135 = vmatprep.subr.mxu0 0.0
  %136 = vmatpush2.msra.mxu0 0.0
  %137 = vmatprep.subr.mxu0 0.0
  %138 = vmatpush2.msra.mxu0 0.0
  %139 = vmatprep.subr.mxu0 0.0
  %140 = vmatpush2.msra.mxu0 0.0
  %141 = vmatprep.subr.mxu0 0.0
  %142 = vmatpush2.msra.mxu0 0.0
  %143 = vmatprep.subr.mxu0 0.0
  %144 = vmatpush2.msra.mxu0 0.0
  %145 = vmatprep.subr.mxu0 0.0
  %146 = vmatpush2.msra.mxu0 0.0
  %147 = vmatprep.subr.mxu0 0.0
  %148 = vmatpush2.msra.mxu0 0.0
  %149 = vmatprep.subr.mxu0 0.0
  %150 = vmatpush2.msra.mxu0 0.0
  %151 = vmatprep.subr.mxu0 0.0
  %152 = vmatpush2.msra.mxu0 0.0
  %153 = vmatprep.subr.mxu0 0.0
  %154 = vmatpush2.msra.mxu0 0.0
  %155 = vmatprep.subr.mxu0 0.0
  %156 = vmatpush2.msra.mxu0 0.0
  %157 = vmatprep.subr.mxu0 0.0
  %158 = vmatpush2.msra.mxu0 0.0
  %159 = vmatprep.subr.mxu0 0.0
  %160 = vmatpush2.msra.mxu0 0.0
  %161 = vmatprep.subr.mxu0 0.0
  %162 = vmatpush2.msra.mxu0 0.0
  %163 = vmatprep.mubr.f32.mxu0 0.0
  %164 = vmatmul.mubr.f32.gmra.mxu0 %v26
  %v165 = vpop.f32.mrf.mxu0
  %v166 = vadd.f32 %v87, %v165
  %v167 = vpop.f32.mrf.mxu0
  %v168 = vadd.f32 %v91, %v167
  %169 = vmatprep.mubr.f32.mxu0 0.0
  %170 = vmatmul.mubr.f32.gmra.mxu0 %v27
  %v171 = vpop.f32.mrf.mxu0
  %v172 = vadd.f32 %v87, %v171
  %v173 = vpop.f32.mrf.mxu0
  %v174 = vadd.f32 %v91, %v173
  %175 = vmatprep.mubr.f32.mxu0 0.0
  %176 = vmatmul.mubr.f32.gmra.mxu0 %v28
  %v177 = vpop.f32.mrf.mxu0
  %v178 = vadd.f32 %v87, %v177
  %v179 = vpop.f32.mrf.mxu0
  %v180 = vadd.f32 %v91, %v179
  %181 = vmatprep.mubr.f32.mxu0 0.0
  %182 = vmatmul.mubr.f32.gmra.mxu0 %v29
  %v183 = vpop.f32.mrf.mxu0
  %v184 = vadd.f32 %v87, %v183
  %v185 = vpop.f32.mrf.mxu0
  %v186 = vadd.f32 %v91, %v185
  %187 = vmatprep.mubr.f32.mxu0 0.0
  %188 = vmatmul.mubr.f32.gmra.mxu0 %v30
  %v189 = vpop.f32.mrf.mxu0
  %v190 = vadd.f32 %v87, %v189
  %v191 = vpop.f32.mrf.mxu0
  %v192 = vadd.f32 %v91, %v191
  %193 = vmatprep.mubr.f32.mxu0 0.0
  %194 = vmatmul.mubr.f32.gmra.mxu0 %v31
  %v195 = vpop.f32.mrf.mxu0
  %v196 = vadd.f32 %v87, %v195
  %v197 = vpop.f32.mrf.mxu0
  %v198 = vadd.f32 %v91, %v197
  %199 = vmatprep.mubr.f32.mxu0 0.0
  %200 = vmatmul.mubr.f32.gmra.mxu0 %v32
  %v201 = vpop.f32.mrf.mxu0
  %v202 = vadd.f32 %v87, %v201
  %v203 = vpop.f32.mrf.mxu0
  %v204 = vadd.f32 %v91, %v203
  %205 = vmatprep.mubr.f32.mxu0 0.0
  %206 = vmatmul.mubr.f32.gmra.mxu0 %v33
  %v207 = vpop.f32.mrf.mxu0
  %v208 = vadd.f32 %v87, %v207
  %v209 = vpop.f32.mrf.mxu0
  %v210 = vadd.f32 %v91, %v209
  %211 = vdwg.mxu0
  %212 = vmatprep.subr.mxu0 0.0
  %213 = vmatpush1.msra.mxu0 %v81
  %214 = vmatprep.subr.mxu0 0.0
  %215 = vmatpush1.msra.mxu0 %v78
  %216 = vmatprep.subr.mxu0 0.0
  %217 = vmatpush1.msra.mxu0 %v75
  %218 = vmatprep.subr.mxu0 0.0
  %219 = vmatpush1.msra.mxu0 %v72
  %220 = vmatprep.subr.mxu0 0.0
  %221 = vmatpush1.msra.mxu0 %v69
  %222 = vmatprep.subr.mxu0 0.0
  %223 = vmatpush1.msra.mxu0 %v66
  %224 = vmatprep.subr.mxu0 0.0
  %225 = vmatpush1.msra.mxu0 %v63
  %226 = vmatprep.subr.mxu0 0.0
  %227 = vmatpush1.msra.mxu0 %v60
  %228 = vmatprep.subr.mxu0 0.0
  %229 = vmatpush1.msra.mxu0 %v57
  %230 = vmatprep.subr.mxu0 0.0
  %231 = vmatpush1.msra.mxu0 %v54
  %232 = vmatprep.subr.mxu0 0.0
  %233 = vmatpush1.msra.mxu0 %v51
  %234 = vmatprep.subr.mxu0 0.0
  %235 = vmatpush1.msra.mxu0 %v48
  %236 = vmatprep.subr.mxu0 0.0
  %237 = vmatpush1.msra.mxu0 %v45
  %238 = vmatprep.subr.mxu0 0.0
  %239 = vmatpush1.msra.mxu0 %v42
  %240 = vmatprep.subr.mxu0 0.0
  %241 = vmatpush1.msra.mxu0 %v39
  %242 = vmatprep.subr.mxu0 0.0
  %243 = vmatpush1.msra.mxu0 %v36
  %244 = vmatprep.subr.mxu0 0.0
  %245 = vmatpush2.msra.mxu0 0.0
  %246 = vmatprep.subr.mxu0 0.0
  %247 = vmatpush2.msra.mxu0 0.0
  %248 = vmatprep.subr.mxu0 0.0
  %249 = vmatpush2.msra.mxu0 0.0
  %250 = vmatprep.subr.mxu0 0.0
  %251 = vmatpush2.msra.mxu0 0.0
  %252 = vmatprep.subr.mxu0 0.0
  %253 = vmatpush2.msra.mxu0 0.0
  %254 = vmatprep.subr.mxu0 0.0
  %255 = vmatpush2.msra.mxu0 0.0
  %256 = vmatprep.subr.mxu0 0.0
  %257 = vmatpush2.msra.mxu0 0.0
  %258 = vmatprep.subr.mxu0 0.0
  %259 = vmatpush2.msra.mxu0 0.0
  %260 = vmatprep.subr.mxu0 0.0
  %261 = vmatpush2.msra.mxu0 0.0
  %262 = vmatprep.subr.mxu0 0.0
  %263 = vmatpush2.msra.mxu0 0.0
  %264 = vmatprep.subr.mxu0 0.0
  %265 = vmatpush2.msra.mxu0 0.0
  %266 = vmatprep.subr.mxu0 0.0
  %267 = vmatpush2.msra.mxu0 0.0
  %268 = vmatprep.subr.mxu0 0.0
  %269 = vmatpush2.msra.mxu0 0.0
  %270 = vmatprep.subr.mxu0 0.0
  %271 = vmatpush2.msra.mxu0 0.0
  %272 = vmatprep.subr.mxu0 0.0
  %273 = vmatpush2.msra.mxu0 0.0
  %274 = vmatprep.subr.mxu0 0.0
  %275 = vmatpush2.msra.mxu0 0.0
  %276 = vmatprep.mubr.f32.mxu0 0.0
  %277 = vmatmul.mubr.f32.gmra.mxu0 %v26
  %v278 = vpop.f32.mrf.mxu0
  %v279 = vadd.f32 %v95, %v278
  %v280 = vpop.f32.mrf.mxu0
  %281 = vmatprep.mubr.f32.mxu0 0.0
  %282 = vmatmul.mubr.f32.gmra.mxu0 %v27
  %v283 = vpop.f32.mrf.mxu0
  %v284 = vadd.f32 %v95, %v283
  %v285 = vpop.f32.mrf.mxu0
  %286 = vmatprep.mubr.f32.mxu0 0.0
  %287 = vmatmul.mubr.f32.gmra.mxu0 %v28
  %v288 = vpop.f32.mrf.mxu0
  %v289 = vadd.f32 %v95, %v288
  %v290 = vpop.f32.mrf.mxu0
  %291 = vmatprep.mubr.f32.mxu0 0.0
  %292 = vmatmul.mubr.f32.gmra.mxu0 %v29
  %v293 = vpop.f32.mrf.mxu0
  %v294 = vadd.f32 %v95, %v293
  %v295 = vpop.f32.mrf.mxu0
  %296 = vmatprep.mubr.f32.mxu0 0.0
  %297 = vmatmul.mubr.f32.gmra.mxu0 %v30
  %v298 = vpop.f32.mrf.mxu0
  %v299 = vadd.f32 %v95, %v298
  %v300 = vpop.f32.mrf.mxu0
  %301 = vmatprep.mubr.f32.mxu0 0.0
  %302 = vmatmul.mubr.f32.gmra.mxu0 %v31
  %v303 = vpop.f32.mrf.mxu0
  %v304 = vadd.f32 %v95, %v303
  %v305 = vpop.f32.mrf.mxu0
  %306 = vmatprep.mubr.f32.mxu0 0.0
  %307 = vmatmul.mubr.f32.gmra.mxu0 %v32
  %v308 = vpop.f32.mrf.mxu0
  %v309 = vadd.f32 %v95, %v308
  %v310 = vpop.f32.mrf.mxu0
  %311 = vmatprep.mubr.f32.mxu0 0.0
  %312 = vmatmul.mubr.f32.gmra.mxu0 %v33
  %v313 = vpop.f32.mrf.mxu0
  %v314 = vadd.f32 %v95, %v313
  %v315 = vpop.f32.mrf.mxu0
  %316 = vdwg.mxu0
  %317 = vst [vmem:[#allocation3] sm:$0xff] %v166
  %318 = vst [vmem:[#allocation3 + $0x8] sm:$0xff] %v168
  %319 = vst [vmem:[#allocation3 + $0x10] sm:$0xff] %v279
  %320 = vst [vmem:[#allocation3 + $0x18] sm:$0xff] %v172
  %321 = vst [vmem:[#allocation3 + $0x20] sm:$0xff] %v174
  %322 = vst [vmem:[#allocation3 + $0x28] sm:$0xff] %v284
  %323 = vst [vmem:[#allocation3 + $0x30] sm:$0xff] %v178
  %324 = vst [vmem:[#allocation3 + $0x38] sm:$0xff] %v180
  %325 = vst [vmem:[#allocation3 + $0x40] sm:$0xff] %v289
  %326 = vst [vmem:[#allocation3 + $0x48] sm:$0xff] %v184
  %327 = vst [vmem:[#allocation3 + $0x50] sm:$0xff] %v186
  %328 = vst [vmem:[#allocation3 + $0x58] sm:$0xff] %v294
  %329 = vst [vmem:[#allocation3 + $0x60] sm:$0xff] %v190
  %330 = vst [vmem:[#allocation3 + $0x68] sm:$0xff] %v192
  %331 = vst [vmem:[#allocation3 + $0x70] sm:$0xff] %v299
  %332 = vst [vmem:[#allocation3 + $0x78] sm:$0xff] %v196
  %333 = vst [vmem:[#allocation3 + $0x80] sm:$0xff] %v198
  %334 = vst [vmem:[#allocation3 + $0x88] sm:$0xff] %v304
  %335 = vst [vmem:[#allocation3 + $0x90] sm:$0xff] %v202
  %336 = vst [vmem:[#allocation3 + $0x98] sm:$0xff] %v204
  %337 = vst [vmem:[#allocation3 + $0xa0] sm:$0xff] %v309
  %338 = vst [vmem:[#allocation3 + $0xa8] sm:$0xff] %v208
  %339 = vst [vmem:[#allocation3 + $0xb0] sm:$0xff] %v210
  %340 = vst [vmem:[#allocation3 + $0xb8] sm:$0xff] %v314
  %v341 = vld [vmem:[%s2] sm:$0xff]
  %v342 = vld [vmem:[%s2 + $0x8] sm:$0xff]
  %v343 = vld [vmem:[%s2 + $0x10] sm:$0xff]
  %v344 = vld [vmem:[%s2 + $0x18] sm:$0xff]
  %v345 = vld [vmem:[%s2 + $0x20] sm:$0xff]
  %v346 = vld [vmem:[%s2 + $0x28] sm:$0xff]
  %v347 = vld [vmem:[%s2 + $0x30] sm:$0xff]
  %v348 = vld [vmem:[%s2 + $0x38] sm:$0xff]
  %v349 = vld [vmem:[%s2 + $0x40] sm:$0xff]
  %v350 = vld [vmem:[%s2 + $0x48] sm:$0xff]
  %v351 = vld [vmem:[%s2 + $0x50] sm:$0xff]
  %v352 = vld [vmem:[%s2 + $0x58] sm:$0xff]
  %v353 = vld [vmem:[%s2 + $0x60] sm:$0xff]
  %v354 = vld [vmem:[%s2 + $0x68] sm:$0xff]
  %v355 = vld [vmem:[%s2 + $0x70] sm:$0xff]
  %v356 = vld [vmem:[%s2 + $0x78] sm:$0xff]
  %v357 = vld [vmem:[%s2 + $0x80] sm:$0xff]
  %v358 = vld [vmem:[%s2 + $0x88] sm:$0xff]
  %v359 = vld [vmem:[%s2 + $0x90] sm:$0xff]
  %v360 = vld [vmem:[%s2 + $0x98] sm:$0xff]
  %v361 = vld [vmem:[%s2 + $0xa0] sm:$0xff]
  %v362 = vld [vmem:[%s2 + $0xa8] sm:$0xff]
  %v363 = vld [vmem:[%s2 + $0xb0] sm:$0xff]
  %v364 = vld [vmem:[%s2 + $0xb8] sm:$0xff]
  %v365 = vld [vmem:[%s2 + $0xc0] sm:$0xff]
  %v366 = vld [vmem:[%s2 + $0xc8] sm:$0xff]
  %v367 = vld [vmem:[%s2 + $0xd0] sm:$0xff]
  %v368 = vld [vmem:[%s2 + $0xd8] sm:$0xff]
  %v369 = vld [vmem:[%s2 + $0xe0] sm:$0xff]
  %v370 = vld [vmem:[%s2 + $0xe8] sm:$0xff]
  %v371 = vld [vmem:[%s2 + $0xf0] sm:$0xff]
  %v372 = vld [vmem:[%s2 + $0xf8] sm:$0xff]
  %v373 = vld [vmem:[%s2 + $0x100] sm:$0xff]
  %v374 = vld [vmem:[%s2 + $0x108] sm:$0xff]
  %v375 = vld [vmem:[%s2 + $0x110] sm:$0xff]
  %v376 = vld [vmem:[%s2 + $0x118] sm:$0xff]
  %v377 = vld [vmem:[%s2 + $0x120] sm:$0xff]
  %v378 = vld [vmem:[%s2 + $0x128] sm:$0xff]
  %v379 = vld [vmem:[%s2 + $0x130] sm:$0xff]
  %v380 = vld [vmem:[%s2 + $0x138] sm:$0xff]
  %v381 = vld [vmem:[%s2 + $0x140] sm:$0xff]
  %v382 = vld [vmem:[%s2 + $0x148] sm:$0xff]
  %v383 = vld [vmem:[%s2 + $0x150] sm:$0xff]
  %v384 = vld [vmem:[%s2 + $0x158] sm:$0xff]
  %v385 = vld [vmem:[%s2 + $0x160] sm:$0xff]
  %v386 = vld [vmem:[%s2 + $0x168] sm:$0xff]
  %v387 = vld [vmem:[%s2 + $0x170] sm:$0xff]
  %v388 = vld [vmem:[%s2 + $0x178] sm:$0xff]
  %v389 = vld [vmem:[%s4] sm:$0x7]
  %v391 = vlaneseq
  %v392 = vshrl.u32 %v391, 7
  %v393 = vsub.s32 0, %v392
  %v394 = vrot.slane %v389, %v393
  %v395 = vlaneseq
  %v396 = vshrl.u32 %v395, 7
  %v397 = vsub.s32 1, %v396
  %v398 = vrot.slane %v389, %v397
  %v399 = vlaneseq
  %v400 = vshrl.u32 %v399, 7
  %v401 = vsub.s32 2, %v400
  %v402 = vrot.slane %v389, %v401
  %406 = vmatprep.subr.mxu0 %v387
  %407 = vmatpush1.msra.mxu0 %v386
  %408 = vmatprep.subr.mxu0 %v384
  %409 = vmatpush1.msra.mxu0 %v383
  %410 = vmatprep.subr.mxu0 %v381
  %411 = vmatpush1.msra.mxu0 %v380
  %412 = vmatprep.subr.mxu0 %v378
  %413 = vmatpush1.msra.mxu0 %v377
  %414 = vmatprep.subr.mxu0 %v375
  %415 = vmatpush1.msra.mxu0 %v374
  %416 = vmatprep.subr.mxu0 %v372
  %417 = vmatpush1.msra.mxu0 %v371
  %418 = vmatprep.subr.mxu0 %v369
  %419 = vmatpush1.msra.mxu0 %v368
  %420 = vmatprep.subr.mxu0 %v366
  %421 = vmatpush1.msra.mxu0 %v365
  %422 = vmatprep.subr.mxu0 %v363
  %423 = vmatpush1.msra.mxu0 %v362
  %424 = vmatprep.subr.mxu0 %v360
  %425 = vmatpush1.msra.mxu0 %v359
  %426 = vmatprep.subr.mxu0 %v357
  %427 = vmatpush1.msra.mxu0 %v356
  %428 = vmatprep.subr.mxu0 %v354
  %429 = vmatpush1.msra.mxu0 %v353
  %430 = vmatprep.subr.mxu0 %v351
  %431 = vmatpush1.msra.mxu0 %v350
  %432 = vmatprep.subr.mxu0 %v348
  %433 = vmatpush1.msra.mxu0 %v347
  %434 = vmatprep.subr.mxu0 %v345
  %435 = vmatpush1.msra.mxu0 %v344
  %436 = vmatprep.subr.mxu0 %v342
  %437 = vmatpush1.msra.mxu0 %v341
  %438 = vmatprep.subr.mxu0 0.0
  %439 = vmatpush2.msra.mxu0 0.0
  %440 = vmatprep.subr.mxu0 0.0
  %441 = vmatpush2.msra.mxu0 0.0
  %442 = vmatprep.subr.mxu0 0.0
  %443 = vmatpush2.msra.mxu0 0.0
  %444 = vmatprep.subr.mxu0 0.0
  %445 = vmatpush2.msra.mxu0 0.0
  %446 = vmatprep.subr.mxu0 0.0
  %447 = vmatpush2.msra.mxu0 0.0
  %448 = vmatprep.subr.mxu0 0.0
  %449 = vmatpush2.msra.mxu0 0.0
  %450 = vmatprep.subr.mxu0 0.0
  %451 = vmatpush2.msra.mxu0 0.0
  %452 = vmatprep.subr.mxu0 0.0
  %453 = vmatpush2.msra.mxu0 0.0
  %454 = vmatprep.subr.mxu0 0.0
  %455 = vmatpush2.msra.mxu0 0.0
  %456 = vmatprep.subr.mxu0 0.0
  %457 = vmatpush2.msra.mxu0 0.0
  %458 = vmatprep.subr.mxu0 0.0
  %459 = vmatpush2.msra.mxu0 0.0
  %460 = vmatprep.subr.mxu0 0.0
  %461 = vmatpush2.msra.mxu0 0.0
  %462 = vmatprep.subr.mxu0 0.0
  %463 = vmatpush2.msra.mxu0 0.0
  %464 = vmatprep.subr.mxu0 0.0
  %465 = vmatpush2.msra.mxu0 0.0
  %466 = vmatprep.subr.mxu0 0.0
  %467 = vmatpush2.msra.mxu0 0.0
  %468 = vmatprep.subr.mxu0 0.0
  %469 = vmatpush2.msra.mxu0 0.0
  %470 = vmatprep.mubr.f32.mxu0 0.0
  %471 = vmatmul.mubr.f32.gmra.mxu0 0.0
  %v472 = vpop.f32.mrf.mxu0
  %v473 = vadd.f32 %v394, %v472
  %v474 = vpop.f32.mrf.mxu0
  %v475 = vadd.f32 %v398, %v474
  %476 = vdwg.mxu0
  %477 = vmatprep.subr.mxu0 0.0
  %478 = vmatpush1.msra.mxu0 %v388
  %479 = vmatprep.subr.mxu0 0.0
  %480 = vmatpush1.msra.mxu0 %v385
  %481 = vmatprep.subr.mxu0 0.0
  %482 = vmatpush1.msra.mxu0 %v382
  %483 = vmatprep.subr.mxu0 0.0
  %484 = vmatpush1.msra.mxu0 %v379
  %485 = vmatprep.subr.mxu0 0.0
  %486 = vmatpush1.msra.mxu0 %v376
  %487 = vmatprep.subr.mxu0 0.0
  %488 = vmatpush1.msra.mxu0 %v373
  %489 = vmatprep.subr.mxu0 0.0
  %490 = vmatpush1.msra.mxu0 %v370
  %491 = vmatprep.subr.mxu0 0.0
  %492 = vmatpush1.msra.mxu0 %v367
  %493 = vmatprep.subr.mxu0 0.0
  %494 = vmatpush1.msra.mxu0 %v364
  %495 = vmatprep.subr.mxu0 0.0
  %496 = vmatpush1.msra.mxu0 %v361
  %497 = vmatprep.subr.mxu0 0.0
  %498 = vmatpush1.msra.mxu0 %v358
  %499 = vmatprep.subr.mxu0 0.0
  %500 = vmatpush1.msra.mxu0 %v355
  %501 = vmatprep.subr.mxu0 0.0
  %502 = vmatpush1.msra.mxu0 %v352
  %503 = vmatprep.subr.mxu0 0.0
  %504 = vmatpush1.msra.mxu0 %v349
  %505 = vmatprep.subr.mxu0 0.0
  %506 = vmatpush1.msra.mxu0 %v346
  %507 = vmatprep.subr.mxu0 0.0
  %508 = vmatpush1.msra.mxu0 %v343
  %509 = vmatprep.subr.mxu0 0.0
  %510 = vmatpush2.msra.mxu0 0.0
  %511 = vmatprep.subr.mxu0 0.0
  %512 = vmatpush2.msra.mxu0 0.0
  %513 = vmatprep.subr.mxu0 0.0
  %514 = vmatpush2.msra.mxu0 0.0
  %515 = vmatprep.subr.mxu0 0.0
  %516 = vmatpush2.msra.mxu0 0.0
  %517 = vmatprep.subr.mxu0 0.0
  %518 = vmatpush2.msra.mxu0 0.0
  %519 = vmatprep.subr.mxu0 0.0
  %520 = vmatpush2.msra.mxu0 0.0
  %521 = vmatprep.subr.mxu0 0.0
  %522 = vmatpush2.msra.mxu0 0.0
  %523 = vmatprep.subr.mxu0 0.0
  %524 = vmatpush2.msra.mxu0 0.0
  %525 = vmatprep.subr.mxu0 0.0
  %526 = vmatpush2.msra.mxu0 0.0
  %527 = vmatprep.subr.mxu0 0.0
  %528 = vmatpush2.msra.mxu0 0.0
  %529 = vmatprep.subr.mxu0 0.0
  %530 = vmatpush2.msra.mxu0 0.0
  %531 = vmatprep.subr.mxu0 0.0
  %532 = vmatpush2.msra.mxu0 0.0
  %533 = vmatprep.subr.mxu0 0.0
  %534 = vmatpush2.msra.mxu0 0.0
  %535 = vmatprep.subr.mxu0 0.0
  %536 = vmatpush2.msra.mxu0 0.0
  %537 = vmatprep.subr.mxu0 0.0
  %538 = vmatpush2.msra.mxu0 0.0
  %539 = vmatprep.subr.mxu0 0.0
  %540 = vmatpush2.msra.mxu0 0.0
  %541 = vmatprep.mubr.f32.mxu0 0.0
  %542 = vmatmul.mubr.f32.gmra.mxu0 0.0
  %v543 = vpop.f32.mrf.mxu0
  %v544 = vadd.f32 %v402, %v543
  %v545 = vpop.f32.mrf.mxu0
  %546 = vdwg.mxu0
  %s547 = smul.u32 0, 3
  %s548 = smul.addr %s547, 8
  %s549 = scalar_lea.vmem [#allocation3], %s548
  %v550 = vld [vmem:[%s549] sm:$0xff]
  %v551 = vld [vmem:[%s549 + $0x8] sm:$0xff]
  %v552 = vld [vmem:[%s549 + $0x10] sm:$0xff]
  %v553 = vadd.f32 %v550, %v473
  %v554 = vxor.u32 %v553, 2147483648
  %v555 = vmul.f32 %v554, 1.442695
  %v556 = vpow.pop %v555
  %v557 = vadd.f32 %v556, 1.0
  %v558 = vrcp.pop %v557
  %v559 = vmul.f32 1.0, %v558
  %v560 = vadd.f32 %v551, %v475
  %v561 = vxor.u32 %v560, 2147483648
  %v562 = vmul.f32 %v561, 1.442695
  %v563 = vpow.pop %v562
  %v564 = vadd.f32 %v563, 1.0
  %v565 = vrcp.pop %v564
  %v566 = vmul.f32 1.0, %v565
  %v567 = vmul.f32 %v559, %v544
  %v568 = vadd.f32 %v552, %v567
  %v569 = vtanh.pop %v568
  %v570 = vsub.f32 1.0, %v566
  %v571 = vmul.f32 %v570, %v569
  %v572 = vmul.f32 %v566, 0.0
  %v573 = vadd.f32 %v571, %v572
  %574 = vst [vmem:[#allocation2] sm:$0xff] %v573
  %v575 = vld [vmem:[%s2] sm:$0xff]
  %v576 = vld [vmem:[%s2 + $0x8] sm:$0xff]
  %v577 = vld [vmem:[%s2 + $0x10] sm:$0xff]
  %v578 = vld [vmem:[%s2 + $0x18] sm:$0xff]
  %v579 = vld [vmem:[%s2 + $0x20] sm:$0xff]
  %v580 = vld [vmem:[%s2 + $0x28] sm:$0xff]
  %v581 = vld [vmem:[%s2 + $0x30] sm:$0xff]
  %v582 = vld [vmem:[%s2 + $0x38] sm:$0xff]
  %v583 = vld [vmem:[%s2 + $0x40] sm:$0xff]
  %v584 = vld [vmem:[%s2 + $0x48] sm:$0xff]
  %v585 = vld [vmem:[%s2 + $0x50] sm:$0xff]
  %v586 = vld [vmem:[%s2 + $0x58] sm:$0xff]
  %v587 = vld [vmem:[%s2 + $0x60] sm:$0xff]
  %v588 = vld [vmem:[%s2 + $0x68] sm:$0xff]
  %v589 = vld [vmem:[%s2 + $0x70] sm:$0xff]
  %v590 = vld [vmem:[%s2 + $0x78] sm:$0xff]
  %v591 = vld [vmem:[%s2 + $0x80] sm:$0xff]
  %v592 = vld [vmem:[%s2 + $0x88] sm:$0xff]
  %v593 = vld [vmem:[%s2 + $0x90] sm:$0xff]
  %v594 = vld [vmem:[%s2 + $0x98] sm:$0xff]
  %v595 = vld [vmem:[%s2 + $0xa0] sm:$0xff]
  %v596 = vld [vmem:[%s2 + $0xa8] sm:$0xff]
  %v597 = vld [vmem:[%s2 + $0xb0] sm:$0xff]
  %v598 = vld [vmem:[%s2 + $0xb8] sm:$0xff]
  %v599 = vld [vmem:[%s2 + $0xc0] sm:$0xff]
  %v600 = vld [vmem:[%s2 + $0xc8] sm:$0xff]
  %v601 = vld [vmem:[%s2 + $0xd0] sm:$0xff]
  %v602 = vld [vmem:[%s2 + $0xd8] sm:$0xff]
  %v603 = vld [vmem:[%s2 + $0xe0] sm:$0xff]
  %v604 = vld [vmem:[%s2 + $0xe8] sm:$0xff]
  %v605 = vld [vmem:[%s2 + $0xf0] sm:$0xff]
  %v606 = vld [vmem:[%s2 + $0xf8] sm:$0xff]
  %v607 = vld [vmem:[%s2 + $0x100] sm:$0xff]
  %v608 = vld [vmem:[%s2 + $0x108] sm:$0xff]
  %v609 = vld [vmem:[%s2 + $0x110] sm:$0xff]
  %v610 = vld [vmem:[%s2 + $0x118] sm:$0xff]
  %v611 = vld [vmem:[%s2 + $0x120] sm:$0xff]
  %v612 = vld [vmem:[%s2 + $0x128] sm:$0xff]
  %v613 = vld [vmem:[%s2 + $0x130] sm:$0xff]
  %v614 = vld [vmem:[%s2 + $0x138] sm:$0xff]
  %v615 = vld [vmem:[%s2 + $0x140] sm:$0xff]
  %v616 = vld [vmem:[%s2 + $0x148] sm:$0xff]
  %v617 = vld [vmem:[%s2 + $0x150] sm:$0xff]
  %v618 = vld [vmem:[%s2 + $0x158] sm:$0xff]
  %v619 = vld [vmem:[%s2 + $0x160] sm:$0xff]
  %v620 = vld [vmem:[%s2 + $0x168] sm:$0xff]
  %v621 = vld [vmem:[%s2 + $0x170] sm:$0xff]
  %v622 = vld [vmem:[%s2 + $0x178] sm:$0xff]
  %v623 = vld [vmem:[%s4] sm:$0x7]
  %v625 = vlaneseq
  %v626 = vshrl.u32 %v625, 7
  %v627 = vsub.s32 0, %v626
  %v628 = vrot.slane %v623, %v627
  %v629 = vlaneseq
  %v630 = vshrl.u32 %v629, 7
  %v631 = vsub.s32 1, %v630
  %v632 = vrot.slane %v623, %v631
  %v633 = vlaneseq
  %v634 = vshrl.u32 %v633, 7
  %v635 = vsub.s32 2, %v634
  %v636 = vrot.slane %v623, %v635
  %640 = vmatprep.subr.mxu0 %v621
  %641 = vmatpush1.msra.mxu0 %v620
  %642 = vmatprep.subr.mxu0 %v618
  %643 = vmatpush1.msra.mxu0 %v617
  %644 = vmatprep.subr.mxu0 %v615
  %645 = vmatpush1.msra.mxu0 %v614
  %646 = vmatprep.subr.mxu0 %v612
  %647 = vmatpush1.msra.mxu0 %v611
  %648 = vmatprep.subr.mxu0 %v609
  %649 = vmatpush1.msra.mxu0 %v608
  %650 = vmatprep.subr.mxu0 %v606
  %651 = vmatpush1.msra.mxu0 %v605
  %652 = vmatprep.subr.mxu0 %v603
  %653 = vmatpush1.msra.mxu0 %v602
  %654 = vmatprep.subr.mxu0 %v600
  %655 = vmatpush1.msra.mxu0 %v599
  %656 = vmatprep.subr.mxu0 %v597
  %657 = vmatpush1.msra.mxu0 %v596
  %658 = vmatprep.subr.mxu0 %v594
  %659 = vmatpush1.msra.mxu0 %v593
  %660 = vmatprep.subr.mxu0 %v591
  %661 = vmatpush1.msra.mxu0 %v590
  %662 = vmatprep.subr.mxu0 %v588
  %663 = vmatpush1.msra.mxu0 %v587
  %664 = vmatprep.subr.mxu0 %v585
  %665 = vmatpush1.msra.mxu0 %v584
  %666 = vmatprep.subr.mxu0 %v582
  %667 = vmatpush1.msra.mxu0 %v581
  %668 = vmatprep.subr.mxu0 %v579
  %669 = vmatpush1.msra.mxu0 %v578
  %670 = vmatprep.subr.mxu0 %v576
  %671 = vmatpush1.msra.mxu0 %v575
  %672 = vmatprep.subr.mxu0 0.0
  %673 = vmatpush2.msra.mxu0 0.0
  %674 = vmatprep.subr.mxu0 0.0
  %675 = vmatpush2.msra.mxu0 0.0
  %676 = vmatprep.subr.mxu0 0.0
  %677 = vmatpush2.msra.mxu0 0.0
  %678 = vmatprep.subr.mxu0 0.0
  %679 = vmatpush2.msra.mxu0 0.0
  %680 = vmatprep.subr.mxu0 0.0
  %681 = vmatpush2.msra.mxu0 0.0
  %682 = vmatprep.subr.mxu0 0.0
  %683 = vmatpush2.msra.mxu0 0.0
  %684 = vmatprep.subr.mxu0 0.0
  %685 = vmatpush2.msra.mxu0 0.0
  %686 = vmatprep.subr.mxu0 0.0
  %687 = vmatpush2.msra.mxu0 0.0
  %688 = vmatprep.subr.mxu0 0.0
  %689 = vmatpush2.msra.mxu0 0.0
  %690 = vmatprep.subr.mxu0 0.0
  %691 = vmatpush2.msra.mxu0 0.0
  %692 = vmatprep.subr.mxu0 0.0
  %693 = vmatpush2.msra.mxu0 0.0
  %694 = vmatprep.subr.mxu0 0.0
  %695 = vmatpush2.msra.mxu0 0.0
  %696 = vmatprep.subr.mxu0 0.0
  %697 = vmatpush2.msra.mxu0 0.0
  %698 = vmatprep.subr.mxu0 0.0
  %699 = vmatpush2.msra.mxu0 0.0
  %700 = vmatprep.subr.mxu0 0.0
  %701 = vmatpush2.msra.mxu0 0.0
  %702 = vmatprep.subr.mxu0 0.0
  %703 = vmatpush2.msra.mxu0 0.0
  %704 = vmatprep.mubr.f32.mxu0 0.0
  %705 = vmatmul.mubr.f32.gmra.mxu0 %v573
  %v706 = vpop.f32.mrf.mxu0
  %v707 = vadd.f32 %v628, %v706
  %v708 = vpop.f32.mrf.mxu0
  %v709 = vadd.f32 %v632, %v708
  %710 = vdwg.mxu0
  %711 = vmatprep.subr.mxu0 0.0
  %712 = vmatpush1.msra.mxu0 %v622
  %713 = vmatprep.subr.mxu0 0.0
  %714 = vmatpush1.msra.mxu0 %v619
  %715 = vmatprep.subr.mxu0 0.0
  %716 = vmatpush1.msra.mxu0 %v616
  %717 = vmatprep.subr.mxu0 0.0
  %718 = vmatpush1.msra.mxu0 %v613
  %719 = vmatprep.subr.mxu0 0.0
  %720 = vmatpush1.msra.mxu0 %v610
  %721 = vmatprep.subr.mxu0 0.0
  %722 = vmatpush1.msra.mxu0 %v607
  %723 = vmatprep.subr.mxu0 0.0
  %724 = vmatpush1.msra.mxu0 %v604
  %725 = vmatprep.subr.mxu0 0.0
  %726 = vmatpush1.msra.mxu0 %v601
  %727 = vmatprep.subr.mxu0 0.0
  %728 = vmatpush1.msra.mxu0 %v598
  %729 = vmatprep.subr.mxu0 0.0
  %730 = vmatpush1.msra.mxu0 %v595
  %731 = vmatprep.subr.mxu0 0.0
  %732 = vmatpush1.msra.mxu0 %v592
  %733 = vmatprep.subr.mxu0 0.0
  %734 = vmatpush1.msra.mxu0 %v589
  %735 = vmatprep.subr.mxu0 0.0
  %736 = vmatpush1.msra.mxu0 %v586
  %737 = vmatprep.subr.mxu0 0.0
  %738 = vmatpush1.msra.mxu0 %v583
  %739 = vmatprep.subr.mxu0 0.0
  %740 = vmatpush1.msra.mxu0 %v580
  %741 = vmatprep.subr.mxu0 0.0
  %742 = vmatpush1.msra.mxu0 %v577
  %743 = vmatprep.subr.mxu0 0.0
  %744 = vmatpush2.msra.mxu0 0.0
  %745 = vmatprep.subr.mxu0 0.0
  %746 = vmatpush2.msra.mxu0 0.0
  %747 = vmatprep.subr.mxu0 0.0
  %748 = vmatpush2.msra.mxu0 0.0
  %749 = vmatprep.subr.mxu0 0.0
  %750 = vmatpush2.msra.mxu0 0.0
  %751 = vmatprep.subr.mxu0 0.0
  %752 = vmatpush2.msra.mxu0 0.0
  %753 = vmatprep.subr.mxu0 0.0
  %754 = vmatpush2.msra.mxu0 0.0
  %755 = vmatprep.subr.mxu0 0.0
  %756 = vmatpush2.msra.mxu0 0.0
  %757 = vmatprep.subr.mxu0 0.0
  %758 = vmatpush2.msra.mxu0 0.0
  %759 = vmatprep.subr.mxu0 0.0
  %760 = vmatpush2.msra.mxu0 0.0
  %761 = vmatprep.subr.mxu0 0.0
  %762 = vmatpush2.msra.mxu0 0.0
  %763 = vmatprep.subr.mxu0 0.0
  %764 = vmatpush2.msra.mxu0 0.0
  %765 = vmatprep.subr.mxu0 0.0
  %766 = vmatpush2.msra.mxu0 0.0
  %767 = vmatprep.subr.mxu0 0.0
  %768 = vmatpush2.msra.mxu0 0.0
  %769 = vmatprep.subr.mxu0 0.0
  %770 = vmatpush2.msra.mxu0 0.0
  %771 = vmatprep.subr.mxu0 0.0
  %772 = vmatpush2.msra.mxu0 0.0
  %773 = vmatprep.subr.mxu0 0.0
  %774 = vmatpush2.msra.mxu0 0.0
  %775 = vmatprep.mubr.f32.mxu0 0.0
  %776 = vmatmul.mubr.f32.gmra.mxu0 %v573
  %v777 = vpop.f32.mrf.mxu0
  %v778 = vadd.f32 %v636, %v777
  %v779 = vpop.f32.mrf.mxu0
  %780 = vdwg.mxu0
  %s781 = smul.u32 1, 3
  %s782 = smul.addr %s781, 8
  %s783 = scalar_lea.vmem [#allocation3], %s782
  %v784 = vld [vmem:[%s783] sm:$0xff]
  %v785 = vld [vmem:[%s783 + $0x8] sm:$0xff]
  %v786 = vld [vmem:[%s783 + $0x10] sm:$0xff]
  %v787 = vadd.f32 %v784, %v707
  %v788 = vxor.u32 %v787, 2147483648
  %v789 = vmul.f32 %v788, 1.442695
  %v790 = vpow.pop %v789
  %v791 = vadd.f32 %v790, 1.0
  %v792 = vrcp.pop %v791
  %v793 = vmul.f32 1.0, %v792
  %v794 = vadd.f32 %v785, %v709
  %v795 = vxor.u32 %v794, 2147483648
  %v796 = vmul.f32 %v795, 1.442695
  %v797 = vpow.pop %v796
  %v798 = vadd.f32 %v797, 1.0
  %v799 = vrcp.pop %v798
  %v800 = vmul.f32 1.0, %v799
  %v801 = vmul.f32 %v793, %v778
  %v802 = vadd.f32 %v786, %v801
  %v803 = vtanh.pop %v802
  %v804 = vsub.f32 1.0, %v800
  %v805 = vmul.f32 %v804, %v803
  %v806 = vmul.f32 %v800, %v573
  %v807 = vadd.f32 %v805, %v806
  %s808 = scalar_lea.vmem [#allocation2], 8
  %809 = vst [vmem:[%s808] sm:$0xff] %v807
  %v810 = vld [vmem:[%s2] sm:$0xff]
  %v811 = vld [vmem:[%s2 + $0x8] sm:$0xff]
  %v812 = vld [vmem:[%s2 + $0x10] sm:$0xff]
  %v813 = vld [vmem:[%s2 + $0x18] sm:$0xff]
  %v814 = vld [vmem:[%s2 + $0x20] sm:$0xff]
  %v815 = vld [vmem:[%s2 + $0x28] sm:$0xff]
  %v816 = vld [vmem:[%s2 + $0x30] sm:$0xff]
  %v817 = vld [vmem:[%s2 + $0x38] sm:$0xff]
  %v818 = vld [vmem:[%s2 + $0x40] sm:$0xff]
  %v819 = vld [vmem:[%s2 + $0x48] sm:$0xff]
  %v820 = vld [vmem:[%s2 + $0x50] sm:$0xff]
  %v821 = vld [vmem:[%s2 + $0x58] sm:$0xff]
  %v822 = vld [vmem:[%s2 + $0x60] sm:$0xff]
  %v823 = vld [vmem:[%s2 + $0x68] sm:$0xff]
  %v824 = vld [vmem:[%s2 + $0x70] sm:$0xff]
  %v825 = vld [vmem:[%s2 + $0x78] sm:$0xff]
  %v826 = vld [vmem:[%s2 + $0x80] sm:$0xff]
  %v827 = vld [vmem:[%s2 + $0x88] sm:$0xff]
  %v828 = vld [vmem:[%s2 + $0x90] sm:$0xff]
  %v829 = vld [vmem:[%s2 + $0x98] sm:$0xff]
  %v830 = vld [vmem:[%s2 + $0xa0] sm:$0xff]
  %v831 = vld [vmem:[%s2 + $0xa8] sm:$0xff]
  %v832 = vld [vmem:[%s2 + $0xb0] sm:$0xff]
  %v833 = vld [vmem:[%s2 + $0xb8] sm:$0xff]
  %v834 = vld [vmem:[%s2 + $0xc0] sm:$0xff]
  %v835 = vld [vmem:[%s2 + $0xc8] sm:$0xff]
  %v836 = vld [vmem:[%s2 + $0xd0] sm:$0xff]
  %v837 = vld [vmem:[%s2 + $0xd8] sm:$0xff]
  %v838 = vld [vmem:[%s2 + $0xe0] sm:$0xff]
  %v839 = vld [vmem:[%s2 + $0xe8] sm:$0xff]
  %v840 = vld [vmem:[%s2 + $0xf0] sm:$0xff]
  %v841 = vld [vmem:[%s2 + $0xf8] sm:$0xff]
  %v842 = vld [vmem:[%s2 + $0x100] sm:$0xff]
  %v843 = vld [vmem:[%s2 + $0x108] sm:$0xff]
  %v844 = vld [vmem:[%s2 + $0x110] sm:$0xff]
  %v845 = vld [vmem:[%s2 + $0x118] sm:$0xff]
  %v846 = vld [vmem:[%s2 + $0x120] sm:$0xff]
  %v847 = vld [vmem:[%s2 + $0x128] sm:$0xff]
  %v848 = vld [vmem:[%s2 + $0x130] sm:$0xff]
  %v849 = vld [vmem:[%s2 + $0x138] sm:$0xff]
  %v850 = vld [vmem:[%s2 + $0x140] sm:$0xff]
  %v851 = vld [vmem:[%s2 + $0x148] sm:$0xff]
  %v852 = vld [vmem:[%s2 + $0x150] sm:$0xff]
  %v853 = vld [vmem:[%s2 + $0x158] sm:$0xff]
  %v854 = vld [vmem:[%s2 + $0x160] sm:$0xff]
  %v855 = vld [vmem:[%s2 + $0x168] sm:$0xff]
  %v856 = vld [vmem:[%s2 + $0x170] sm:$0xff]
  %v857 = vld [vmem:[%s2 + $0x178] sm:$0xff]
  %v858 = vld [vmem:[%s4] sm:$0x7]
  %v860 = vlaneseq
  %v861 = vshrl.u32 %v860, 7
  %v862 = vsub.s32 0, %v861
  %v863 = vrot.slane %v858, %v862
  %v864 = vlaneseq
  %v865 = vshrl.u32 %v864, 7
  %v866 = vsub.s32 1, %v865
  %v867 = vrot.slane %v858, %v866
  %v868 = vlaneseq
  %v869 = vshrl.u32 %v868, 7
  %v870 = vsub.s32 2, %v869
  %v871 = vrot.slane %v858, %v870
  %875 = vmatprep.subr.mxu0 %v856
  %876 = vmatpush1.msra.mxu0 %v855
  %877 = vmatprep.subr.mxu0 %v853
  %878 = vmatpush1.msra.mxu0 %v852
  %879 = vmatprep.subr.mxu0 %v850
  %880 = vmatpush1.msra.mxu0 %v849
  %881 = vmatprep.subr.mxu0 %v847
  %882 = vmatpush1.msra.mxu0 %v846
  %883 = vmatprep.subr.mxu0 %v844
  %884 = vmatpush1.msra.mxu0 %v843
  %885 = vmatprep.subr.mxu0 %v841
  %886 = vmatpush1.msra.mxu0 %v840
  %887 = vmatprep.subr.mxu0 %v838
  %888 = vmatpush1.msra.mxu0 %v837
  %889 = vmatprep.subr.mxu0 %v835
  %890 = vmatpush1.msra.mxu0 %v834
  %891 = vmatprep.subr.mxu0 %v832
  %892 = vmatpush1.msra.mxu0 %v831
  %893 = vmatprep.subr.mxu0 %v829
  %894 = vmatpush1.msra.mxu0 %v828
  %895 = vmatprep.subr.mxu0 %v826
  %896 = vmatpush1.msra.mxu0 %v825
  %897 = vmatprep.subr.mxu0 %v823
  %898 = vmatpush1.msra.mxu0 %v822
  %899 = vmatprep.subr.mxu0 %v820
  %900 = vmatpush1.msra.mxu0 %v819
  %901 = vmatprep.subr.mxu0 %v817
  %902 = vmatpush1.msra.mxu0 %v816
  %903 = vmatprep.subr.mxu0 %v814
  %904 = vmatpush1.msra.mxu0 %v813
  %905 = vmatprep.subr.mxu0 %v811
  %906 = vmatpush1.msra.mxu0 %v810
  %907 = vmatprep.subr.mxu0 0.0
  %908 = vmatpush2.msra.mxu0 0.0
  %909 = vmatprep.subr.mxu0 0.0
  %910 = vmatpush2.msra.mxu0 0.0
  %911 = vmatprep.subr.mxu0 0.0
  %912 = vmatpush2.msra.mxu0 0.0
  %913 = vmatprep.subr.mxu0 0.0
  %914 = vmatpush2.msra.mxu0 0.0
  %915 = vmatprep.subr.mxu0 0.0
  %916 = vmatpush2.msra.mxu0 0.0
  %917 = vmatprep.subr.mxu0 0.0
  %918 = vmatpush2.msra.mxu0 0.0
  %919 = vmatprep.subr.mxu0 0.0
  %920 = vmatpush2.msra.mxu0 0.0
  %921 = vmatprep.subr.mxu0 0.0
  %922 = vmatpush2.msra.mxu0 0.0
  %923 = vmatprep.subr.mxu0 0.0
  %924 = vmatpush2.msra.mxu0 0.0
  %925 = vmatprep.subr.mxu0 0.0
  %926 = vmatpush2.msra.mxu0 0.0
  %927 = vmatprep.subr.mxu0 0.0
  %928 = vmatpush2.msra.mxu0 0.0
  %929 = vmatprep.subr.mxu0 0.0
  %930 = vmatpush2.msra.mxu0 0.0
  %931 = vmatprep.subr.mxu0 0.0
  %932 = vmatpush2.msra.mxu0 0.0
  %933 = vmatprep.subr.mxu0 0.0
  %934 = vmatpush2.msra.mxu0 0.0
  %935 = vmatprep.subr.mxu0 0.0
  %936 = vmatpush2.msra.mxu0 0.0
  %937 = vmatprep.subr.mxu0 0.0
  %938 = vmatpush2.msra.mxu0 0.0
  %939 = vmatprep.mubr.f32.mxu0 0.0
  %940 = vmatmul.mubr.f32.gmra.mxu0 %v807
  %v941 = vpop.f32.mrf.mxu0
  %v942 = vadd.f32 %v863, %v941
  %v943 = vpop.f32.mrf.mxu0
  %v944 = vadd.f32 %v867, %v943
  %945 = vdwg.mxu0
  %946 = vmatprep.subr.mxu0 0.0
  %947 = vmatpush1.msra.mxu0 %v857
  %948 = vmatprep.subr.mxu0 0.0
  %949 = vmatpush1.msra.mxu0 %v854
  %950 = vmatprep.subr.mxu0 0.0
  %951 = vmatpush1.msra.mxu0 %v851
  %952 = vmatprep.subr.mxu0 0.0
  %953 = vmatpush1.msra.mxu0 %v848
  %954 = vmatprep.subr.mxu0 0.0
  %955 = vmatpush1.msra.mxu0 %v845
  %956 = vmatprep.subr.mxu0 0.0
  %957 = vmatpush1.msra.mxu0 %v842
  %958 = vmatprep.subr.mxu0 0.0
  %959 = vmatpush1.msra.mxu0 %v839
  %960 = vmatprep.subr.mxu0 0.0
  %961 = vmatpush1.msra.mxu0 %v836
  %962 = vmatprep.subr.mxu0 0.0
  %963 = vmatpush1.msra.mxu0 %v833
  %964 = vmatprep.subr.mxu0 0.0
  %965 = vmatpush1.msra.mxu0 %v830
  %966 = vmatprep.subr.mxu0 0.0
  %967 = vmatpush1.msra.mxu0 %v827
  %968 = vmatprep.subr.mxu0 0.0
  %969 = vmatpush1.msra.mxu0 %v824
  %970 = vmatprep.subr.mxu0 0.0
  %971 = vmatpush1.msra.mxu0 %v821
  %972 = vmatprep.subr.mxu0 0.0
  %973 = vmatpush1.msra.mxu0 %v818
  %974 = vmatprep.subr.mxu0 0.0
  %975 = vmatpush1.msra.mxu0 %v815
  %976 = vmatprep.subr.mxu0 0.0
  %977 = vmatpush1.msra.mxu0 %v812
  %978 = vmatprep.subr.mxu0 0.0
  %979 = vmatpush2.msra.mxu0 0.0
  %980 = vmatprep.subr.mxu0 0.0
  %981 = vmatpush2.msra.mxu0 0.0
  %982 = vmatprep.subr.mxu0 0.0
  %983 = vmatpush2.msra.mxu0 0.0
  %984 = vmatprep.subr.mxu0 0.0
  %985 = vmatpush2.msra.mxu0 0.0
  %986 = vmatprep.subr.mxu0 0.0
  %987 = vmatpush2.msra.mxu0 0.0
  %988 = vmatprep.subr.mxu0 0.0
  %989 = vmatpush2.msra.mxu0 0.0
  %990 = vmatprep.subr.mxu0 0.0
  %991 = vmatpush2.msra.mxu0 0.0
  %992 = vmatprep.subr.mxu0 0.0
  %993 = vmatpush2.msra.mxu0 0.0
  %994 = vmatprep.subr.mxu0 0.0
  %995 = vmatpush2.msra.mxu0 0.0
  %996 = vmatprep.subr.mxu0 0.0
  %997 = vmatpush2.msra.mxu0 0.0
  %998 = vmatprep.subr.mxu0 0.0
  %999 = vmatpush2.msra.mxu0 0.0
  %1000 = vmatprep.subr.mxu0 0.0
  %1001 = vmatpush2.msra.mxu0 0.0
  %1002 = vmatprep.subr.mxu0 0.0
  %1003 = vmatpush2.msra.mxu0 0.0
  %1004 = vmatprep.subr.mxu0 0.0
  %1005 = vmatpush2.msra.mxu0 0.0
  %1006 = vmatprep.subr.mxu0 0.0
  %1007 = vmatpush2.msra.mxu0 0.0
  %1008 = vmatprep.subr.mxu0 0.0
  %1009 = vmatpush2.msra.mxu0 0.0
  %1010 = vmatprep.mubr.f32.mxu0 0.0
  %1011 = vmatmul.mubr.f32.gmra.mxu0 %v807
  %v1012 = vpop.f32.mrf.mxu0
  %v1013 = vadd.f32 %v871, %v1012
  %v1014 = vpop.f32.mrf.mxu0
  %1015 = vdwg.mxu0
  %s1016 = smul.u32 2, 3
  %s1017 = smul.addr %s1016, 8
  %s1018 = scalar_lea.vmem [#allocation3], %s1017
  %v1019 = vld [vmem:[%s1018] sm:$0xff]
  %v1020 = vld [vmem:[%s1018 + $0x8] sm:$0xff]
  %v1021 = vld [vmem:[%s1018 + $0x10] sm:$0xff]
  %v1022 = vadd.f32 %v1019, %v942
  %v1023 = vxor.u32 %v1022, 2147483648
  %v1024 = vmul.f32 %v1023, 1.442695
  %v1025 = vpow.pop %v1024
  %v1026 = vadd.f32 %v1025, 1.0
  %v1027 = vrcp.pop %v1026
  %v1028 = vmul.f32 1.0, %v1027
  %v1029 = vadd.f32 %v1020, %v944
  %v1030 = vxor.u32 %v1029, 2147483648
  %v1031 = vmul.f32 %v1030, 1.442695
  %v1032 = vpow.pop %v1031
  %v1033 = vadd.f32 %v1032, 1.0
  %v1034 = vrcp.pop %v1033
  %v1035 = vmul.f32 1.0, %v1034
  %v1036 = vmul.f32 %v1028, %v1013
  %v1037 = vadd.f32 %v1021, %v1036
  %v1038 = vtanh.pop %v1037
  %v1039 = vsub.f32 1.0, %v1035
  %v1040 = vmul.f32 %v1039, %v1038
  %v1041 = vmul.f32 %v1035, %v807
  %v1042 = vadd.f32 %v1040, %v1041
  %s1043 = scalar_lea.vmem [#allocation2], 16
  %1044 = vst [vmem:[%s1043] sm:$0xff] %v1042
  %v1045 = vld [vmem:[%s2] sm:$0xff]
  %v1046 = vld [vmem:[%s2 + $0x8] sm:$0xff]
  %v1047 = vld [vmem:[%s2 + $0x10] sm:$0xff]
  %v1048 = vld [vmem:[%s2 + $0x18] sm:$0xff]
  %v1049 = vld [vmem:[%s2 + $0x20] sm:$0xff]
  %v1050 = vld [vmem:[%s2 + $0x28] sm:$0xff]
  %v1051 = vld [vmem:[%s2 + $0x30] sm:$0xff]
  %v1052 = vld [vmem:[%s2 + $0x38] sm:$0xff]
  %v1053 = vld [vmem:[%s2 + $0x40] sm:$0xff]
  %v1054 = vld [vmem:[%s2 + $0x48] sm:$0xff]
  %v1055 = vld [vmem:[%s2 + $0x50] sm:$0xff]
  %v1056 = vld [vmem:[%s2 + $0x58] sm:$0xff]
  %v1057 = vld [vmem:[%s2 + $0x60] sm:$0xff]
  %v1058 = vld [vmem:[%s2 + $0x68] sm:$0xff]
  %v1059 = vld [vmem:[%s2 + $0x70] sm:$0xff]
  %v1060 = vld [vmem:[%s2 + $0x78] sm:$0xff]
  %v1061 = vld [vmem:[%s2 + $0x80] sm:$0xff]
  %v1062 = vld [vmem:[%s2 + $0x88] sm:$0xff]
  %v1063 = vld [vmem:[%s2 + $0x90] sm:$0xff]
  %v1064 = vld [vmem:[%s2 + $0x98] sm:$0xff]
  %v1065 = vld [vmem:[%s2 + $0xa0] sm:$0xff]
  %v1066 = vld [vmem:[%s2 + $0xa8] sm:$0xff]
  %v1067 = vld [vmem:[%s2 + $0xb0] sm:$0xff]
  %v1068 = vld [vmem:[%s2 + $0xb8] sm:$0xff]
  %v1069 = vld [vmem:[%s2 + $0xc0] sm:$0xff]
  %v1070 = vld [vmem:[%s2 + $0xc8] sm:$0xff]
  %v1071 = vld [vmem:[%s2 + $0xd0] sm:$0xff]
  %v1072 = vld [vmem:[%s2 + $0xd8] sm:$0xff]
  %v1073 = vld [vmem:[%s2 + $0xe0] sm:$0xff]
  %v1074 = vld [vmem:[%s2 + $0xe8] sm:$0xff]
  %v1075 = vld [vmem:[%s2 + $0xf0] sm:$0xff]
  %v1076 = vld [vmem:[%s2 + $0xf8] sm:$0xff]
  %v1077 = vld [vmem:[%s2 + $0x100] sm:$0xff]
  %v1078 = vld [vmem:[%s2 + $0x108] sm:$0xff]
  %v1079 = vld [vmem:[%s2 + $0x110] sm:$0xff]
  %v1080 = vld [vmem:[%s2 + $0x118] sm:$0xff]
  %v1081 = vld [vmem:[%s2 + $0x120] sm:$0xff]
  %v1082 = vld [vmem:[%s2 + $0x128] sm:$0xff]
  %v1083 = vld [vmem:[%s2 + $0x130] sm:$0xff]
  %v1084 = vld [vmem:[%s2 + $0x138] sm:$0xff]
  %v1085 = vld [vmem:[%s2 + $0x140] sm:$0xff]
  %v1086 = vld [vmem:[%s2 + $0x148] sm:$0xff]
  %v1087 = vld [vmem:[%s2 + $0x150] sm:$0xff]
  %v1088 = vld [vmem:[%s2 + $0x158] sm:$0xff]
  %v1089 = vld [vmem:[%s2 + $0x160] sm:$0xff]
  %v1090 = vld [vmem:[%s2 + $0x168] sm:$0xff]
  %v1091 = vld [vmem:[%s2 + $0x170] sm:$0xff]
  %v1092 = vld [vmem:[%s2 + $0x178] sm:$0xff]
  %v1093 = vld [vmem:[%s4] sm:$0x7]
  %v1095 = vlaneseq
  %v1096 = vshrl.u32 %v1095, 7
  %v1097 = vsub.s32 0, %v1096
  %v1098 = vrot.slane %v1093, %v1097
  %v1099 = vlaneseq
  %v1100 = vshrl.u32 %v1099, 7
  %v1101 = vsub.s32 1, %v1100
  %v1102 = vrot.slane %v1093, %v1101
  %v1103 = vlaneseq
  %v1104 = vshrl.u32 %v1103, 7
  %v1105 = vsub.s32 2, %v1104
  %v1106 = vrot.slane %v1093, %v1105
  %1110 = vmatprep.subr.mxu0 %v1091
  %1111 = vmatpush1.msra.mxu0 %v1090
  %1112 = vmatprep.subr.mxu0 %v1088
  %1113 = vmatpush1.msra.mxu0 %v1087
  %1114 = vmatprep.subr.mxu0 %v1085
  %1115 = vmatpush1.msra.mxu0 %v1084
  %1116 = vmatprep.subr.mxu0 %v1082
  %1117 = vmatpush1.msra.mxu0 %v1081
  %1118 = vmatprep.subr.mxu0 %v1079
  %1119 = vmatpush1.msra.mxu0 %v1078
  %1120 = vmatprep.subr.mxu0 %v1076
  %1121 = vmatpush1.msra.mxu0 %v1075
  %1122 = vmatprep.subr.mxu0 %v1073
  %1123 = vmatpush1.msra.mxu0 %v1072
  %1124 = vmatprep.subr.mxu0 %v1070
  %1125 = vmatpush1.msra.mxu0 %v1069
  %1126 = vmatprep.subr.mxu0 %v1067
  %1127 = vmatpush1.msra.mxu0 %v1066
  %1128 = vmatprep.subr.mxu0 %v1064
  %1129 = vmatpush1.msra.mxu0 %v1063
  %1130 = vmatprep.subr.mxu0 %v1061
  %1131 = vmatpush1.msra.mxu0 %v1060
  %1132 = vmatprep.subr.mxu0 %v1058
  %1133 = vmatpush1.msra.mxu0 %v1057
  %1134 = vmatprep.subr.mxu0 %v1055
  %1135 = vmatpush1.msra.mxu0 %v1054
  %1136 = vmatprep.subr.mxu0 %v1052
  %1137 = vmatpush1.msra.mxu0 %v1051
  %1138 = vmatprep.subr.mxu0 %v1049
  %1139 = vmatpush1.msra.mxu0 %v1048
  %1140 = vmatprep.subr.mxu0 %v1046
  %1141 = vmatpush1.msra.mxu0 %v1045
  %1142 = vmatprep.subr.mxu0 0.0
  %1143 = vmatpush2.msra.mxu0 0.0
  %1144 = vmatprep.subr.mxu0 0.0
  %1145 = vmatpush2.msra.mxu0 0.0
  %1146 = vmatprep.subr.mxu0 0.0
  %1147 = vmatpush2.msra.mxu0 0.0
  %1148 = vmatprep.subr.mxu0 0.0
  %1149 = vmatpush2.msra.mxu0 0.0
  %1150 = vmatprep.subr.mxu0 0.0
  %1151 = vmatpush2.msra.mxu0 0.0
  %1152 = vmatprep.subr.mxu0 0.0
  %1153 = vmatpush2.msra.mxu0 0.0
  %1154 = vmatprep.subr.mxu0 0.0
  %1155 = vmatpush2.msra.mxu0 0.0
  %1156 = vmatprep.subr.mxu0 0.0
  %1157 = vmatpush2.msra.mxu0 0.0
  %1158 = vmatprep.subr.mxu0 0.0
  %1159 = vmatpush2.msra.mxu0 0.0
  %1160 = vmatprep.subr.mxu0 0.0
  %1161 = vmatpush2.msra.mxu0 0.0
  %1162 = vmatprep.subr.mxu0 0.0
  %1163 = vmatpush2.msra.mxu0 0.0
  %1164 = vmatprep.subr.mxu0 0.0
  %1165 = vmatpush2.msra.mxu0 0.0
  %1166 = vmatprep.subr.mxu0 0.0
  %1167 = vmatpush2.msra.mxu0 0.0
  %1168 = vmatprep.subr.mxu0 0.0
  %1169 = vmatpush2.msra.mxu0 0.0
  %1170 = vmatprep.subr.mxu0 0.0
  %1171 = vmatpush2.msra.mxu0 0.0
  %1172 = vmatprep.subr.mxu0 0.0
  %1173 = vmatpush2.msra.mxu0 0.0
  %1174 = vmatprep.mubr.f32.mxu0 0.0
  %1175 = vmatmul.mubr.f32.gmra.mxu0 %v1042
  %v1176 = vpop.f32.mrf.mxu0
  %v1177 = vadd.f32 %v1098, %v1176
  %v1178 = vpop.f32.mrf.mxu0
  %v1179 = vadd.f32 %v1102, %v1178
  %1180 = vdwg.mxu0
  %1181 = vmatprep.subr.mxu0 0.0
  %1182 = vmatpush1.msra.mxu0 %v1092
  %1183 = vmatprep.subr.mxu0 0.0
  %1184 = vmatpush1.msra.mxu0 %v1089
  %1185 = vmatprep.subr.mxu0 0.0
  %1186 = vmatpush1.msra.mxu0 %v1086
  %1187 = vmatprep.subr.mxu0 0.0
  %1188 = vmatpush1.msra.mxu0 %v1083
  %1189 = vmatprep.subr.mxu0 0.0
  %1190 = vmatpush1.msra.mxu0 %v1080
  %1191 = vmatprep.subr.mxu0 0.0
  %1192 = vmatpush1.msra.mxu0 %v1077
  %1193 = vmatprep.subr.mxu0 0.0
  %1194 = vmatpush1.msra.mxu0 %v1074
  %1195 = vmatprep.subr.mxu0 0.0
  %1196 = vmatpush1.msra.mxu0 %v1071
  %1197 = vmatprep.subr.mxu0 0.0
  %1198 = vmatpush1.msra.mxu0 %v1068
  %1199 = vmatprep.subr.mxu0 0.0
  %1200 = vmatpush1.msra.mxu0 %v1065
  %1201 = vmatprep.subr.mxu0 0.0
  %1202 = vmatpush1.msra.mxu0 %v1062
  %1203 = vmatprep.subr.mxu0 0.0
  %1204 = vmatpush1.msra.mxu0 %v1059
  %1205 = vmatprep.subr.mxu0 0.0
  %1206 = vmatpush1.msra.mxu0 %v1056
  %1207 = vmatprep.subr.mxu0 0.0
  %1208 = vmatpush1.msra.mxu0 %v1053
  %1209 = vmatprep.subr.mxu0 0.0
  %1210 = vmatpush1.msra.mxu0 %v1050
  %1211 = vmatprep.subr.mxu0 0.0
  %1212 = vmatpush1.msra.mxu0 %v1047
  %1213 = vmatprep.subr.mxu0 0.0
  %1214 = vmatpush2.msra.mxu0 0.0
  %1215 = vmatprep.subr.mxu0 0.0
  %1216 = vmatpush2.msra.mxu0 0.0
  %1217 = vmatprep.subr.mxu0 0.0
  %1218 = vmatpush2.msra.mxu0 0.0
  %1219 = vmatprep.subr.mxu0 0.0
  %1220 = vmatpush2.msra.mxu0 0.0
  %1221 = vmatprep.subr.mxu0 0.0
  %1222 = vmatpush2.msra.mxu0 0.0
  %1223 = vmatprep.subr.mxu0 0.0
  %1224 = vmatpush2.msra.mxu0 0.0
  %1225 = vmatprep.subr.mxu0 0.0
  %1226 = vmatpush2.msra.mxu0 0.0
  %1227 = vmatprep.subr.mxu0 0.0
  %1228 = vmatpush2.msra.mxu0 0.0
  %1229 = vmatprep.subr.mxu0 0.0
  %1230 = vmatpush2.msra.mxu0 0.0
  %1231 = vmatprep.subr.mxu0 0.0
  %1232 = vmatpush2.msra.mxu0 0.0
  %1233 = vmatprep.subr.mxu0 0.0
  %1234 = vmatpush2.msra.mxu0 0.0
  %1235 = vmatprep.subr.mxu0 0.0
  %1236 = vmatpush2.msra.mxu0 0.0
  %1237 = vmatprep.subr.mxu0 0.0
  %1238 = vmatpush2.msra.mxu0 0.0
  %1239 = vmatprep.subr.mxu0 0.0
  %1240 = vmatpush2.msra.mxu0 0.0
  %1241 = vmatprep.subr.mxu0 0.0
  %1242 = vmatpush2.msra.mxu0 0.0
  %1243 = vmatprep.subr.mxu0 0.0
  %1244 = vmatpush2.msra.mxu0 0.0
  %1245 = vmatprep.mubr.f32.mxu0 0.0
  %1246 = vmatmul.mubr.f32.gmra.mxu0 %v1042
  %v1247 = vpop.f32.mrf.mxu0
  %v1248 = vadd.f32 %v1106, %v1247
  %v1249 = vpop.f32.mrf.mxu0
  %1250 = vdwg.mxu0
  %s1251 = smul.u32 3, 3
  %s1252 = smul.addr %s1251, 8
  %s1253 = scalar_lea.vmem [#allocation3], %s1252
  %v1254 = vld [vmem:[%s1253] sm:$0xff]
  %v1255 = vld [vmem:[%s1253 + $0x8] sm:$0xff]
  %v1256 = vld [vmem:[%s1253 + $0x10] sm:$0xff]
  %v1257 = vadd.f32 %v1254, %v1177
  %v1258 = vxor.u32 %v1257, 2147483648
  %v1259 = vmul.f32 %v1258, 1.442695
  %v1260 = vpow.pop %v1259
  %v1261 = vadd.f32 %v1260, 1.0
  %v1262 = vrcp.pop %v1261
  %v1263 = vmul.f32 1.0, %v1262
  %v1264 = vadd.f32 %v1255, %v1179
  %v1265 = vxor.u32 %v1264, 2147483648
  %v1266 = vmul.f32 %v1265, 1.442695
  %v1267 = vpow.pop %v1266
  %v1268 = vadd.f32 %v1267, 1.0
  %v1269 = vrcp.pop %v1268
  %v1270 = vmul.f32 1.0, %v1269
  %v1271 = vmul.f32 %v1263, %v1248
  %v1272 = vadd.f32 %v1256, %v1271
  %v1273 = vtanh.pop %v1272
  %v1274 = vsub.f32 1.0, %v1270
  %v1275 = vmul.f32 %v1274, %v1273
  %v1276 = vmul.f32 %v1270, %v1042
  %v1277 = vadd.f32 %v1275, %v1276
  %s1278 = scalar_lea.vmem [#allocation2], 24
  %1279 = vst [vmem:[%s1278] sm:$0xff] %v1277
  %v1280 = vld [vmem:[%s2] sm:$0xff]
  %v1281 = vld [vmem:[%s2 + $0x8] sm:$0xff]
  %v1282 = vld [vmem:[%s2 + $0x10] sm:$0xff]
  %v1283 = vld [vmem:[%s2 + $0x18] sm:$0xff]
  %v1284 = vld [vmem:[%s2 + $0x20] sm:$0xff]
  %v1285 = vld [vmem:[%s2 + $0x28] sm:$0xff]
  %v1286 = vld [vmem:[%s2 + $0x30] sm:$0xff]
  %v1287 = vld [vmem:[%s2 + $0x38] sm:$0xff]
  %v1288 = vld [vmem:[%s2 + $0x40] sm:$0xff]
  %v1289 = vld [vmem:[%s2 + $0x48] sm:$0xff]
  %v1290 = vld [vmem:[%s2 + $0x50] sm:$0xff]
  %v1291 = vld [vmem:[%s2 + $0x58] sm:$0xff]
  %v1292 = vld [vmem:[%s2 + $0x60] sm:$0xff]
  %v1293 = vld [vmem:[%s2 + $0x68] sm:$0xff]
  %v1294 = vld [vmem:[%s2 + $0x70] sm:$0xff]
  %v1295 = vld [vmem:[%s2 + $0x78] sm:$0xff]
  %v1296 = vld [vmem:[%s2 + $0x80] sm:$0xff]
  %v1297 = vld [vmem:[%s2 + $0x88] sm:$0xff]
  %v1298 = vld [vmem:[%s2 + $0x90] sm:$0xff]
  %v1299 = vld [vmem:[%s2 + $0x98] sm:$0xff]
  %v1300 = vld [vmem:[%s2 + $0xa0] sm:$0xff]
  %v1301 = vld [vmem:[%s2 + $0xa8] sm:$0xff]
  %v1302 = vld [vmem:[%s2 + $0xb0] sm:$0xff]
  %v1303 = vld [vmem:[%s2 + $0xb8] sm:$0xff]
  %v1304 = vld [vmem:[%s2 + $0xc0] sm:$0xff]
  %v1305 = vld [vmem:[%s2 + $0xc8] sm:$0xff]
  %v1306 = vld [vmem:[%s2 + $0xd0] sm:$0xff]
  %v1307 = vld [vmem:[%s2 + $0xd8] sm:$0xff]
  %v1308 = vld [vmem:[%s2 + $0xe0] sm:$0xff]
  %v1309 = vld [vmem:[%s2 + $0xe8] sm:$0xff]
  %v1310 = vld [vmem:[%s2 + $0xf0] sm:$0xff]
  %v1311 = vld [vmem:[%s2 + $0xf8] sm:$0xff]
  %v1312 = vld [vmem:[%s2 + $0x100] sm:$0xff]
  %v1313 = vld [vmem:[%s2 + $0x108] sm:$0xff]
  %v1314 = vld [vmem:[%s2 + $0x110] sm:$0xff]
  %v1315 = vld [vmem:[%s2 + $0x118] sm:$0xff]
  %v1316 = vld [vmem:[%s2 + $0x120] sm:$0xff]
  %v1317 = vld [vmem:[%s2 + $0x128] sm:$0xff]
  %v1318 = vld [vmem:[%s2 + $0x130] sm:$0xff]
  %v1319 = vld [vmem:[%s2 + $0x138] sm:$0xff]
  %v1320 = vld [vmem:[%s2 + $0x140] sm:$0xff]
  %v1321 = vld [vmem:[%s2 + $0x148] sm:$0xff]
  %v1322 = vld [vmem:[%s2 + $0x150] sm:$0xff]
  %v1323 = vld [vmem:[%s2 + $0x158] sm:$0xff]
  %v1324 = vld [vmem:[%s2 + $0x160] sm:$0xff]
  %v1325 = vld [vmem:[%s2 + $0x168] sm:$0xff]
  %v1326 = vld [vmem:[%s2 + $0x170] sm:$0xff]
  %v1327 = vld [vmem:[%s2 + $0x178] sm:$0xff]
  %v1328 = vld [vmem:[%s4] sm:$0x7]
  %v1330 = vlaneseq
  %v1331 = vshrl.u32 %v1330, 7
  %v1332 = vsub.s32 0, %v1331
  %v1333 = vrot.slane %v1328, %v1332
  %v1334 = vlaneseq
  %v1335 = vshrl.u32 %v1334, 7
  %v1336 = vsub.s32 1, %v1335
  %v1337 = vrot.slane %v1328, %v1336
  %v1338 = vlaneseq
  %v1339 = vshrl.u32 %v1338, 7
  %v1340 = vsub.s32 2, %v1339
  %v1341 = vrot.slane %v1328, %v1340
  %1345 = vmatprep.subr.mxu0 %v1326
  %1346 = vmatpush1.msra.mxu0 %v1325
  %1347 = vmatprep.subr.mxu0 %v1323
  %1348 = vmatpush1.msra.mxu0 %v1322
  %1349 = vmatprep.subr.mxu0 %v1320
  %1350 = vmatpush1.msra.mxu0 %v1319
  %1351 = vmatprep.subr.mxu0 %v1317
  %1352 = vmatpush1.msra.mxu0 %v1316
  %1353 = vmatprep.subr.mxu0 %v1314
  %1354 = vmatpush1.msra.mxu0 %v1313
  %1355 = vmatprep.subr.mxu0 %v1311
  %1356 = vmatpush1.msra.mxu0 %v1310
  %1357 = vmatprep.subr.mxu0 %v1308
  %1358 = vmatpush1.msra.mxu0 %v1307
  %1359 = vmatprep.subr.mxu0 %v1305
  %1360 = vmatpush1.msra.mxu0 %v1304
  %1361 = vmatprep.subr.mxu0 %v1302
  %1362 = vmatpush1.msra.mxu0 %v1301
  %1363 = vmatprep.subr.mxu0 %v1299
  %1364 = vmatpush1.msra.mxu0 %v1298
  %1365 = vmatprep.subr.mxu0 %v1296
  %1366 = vmatpush1.msra.mxu0 %v1295
  %1367 = vmatprep.subr.mxu0 %v1293
  %1368 = vmatpush1.msra.mxu0 %v1292
  %1369 = vmatprep.subr.mxu0 %v1290
  %1370 = vmatpush1.msra.mxu0 %v1289
  %1371 = vmatprep.subr.mxu0 %v1287
  %1372 = vmatpush1.msra.mxu0 %v1286
  %1373 = vmatprep.subr.mxu0 %v1284
  %1374 = vmatpush1.msra.mxu0 %v1283
  %1375 = vmatprep.subr.mxu0 %v1281
  %1376 = vmatpush1.msra.mxu0 %v1280
  %1377 = vmatprep.subr.mxu0 0.0
  %1378 = vmatpush2.msra.mxu0 0.0
  %1379 = vmatprep.subr.mxu0 0.0
  %1380 = vmatpush2.msra.mxu0 0.0
  %1381 = vmatprep.subr.mxu0 0.0
  %1382 = vmatpush2.msra.mxu0 0.0
  %1383 = vmatprep.subr.mxu0 0.0
  %1384 = vmatpush2.msra.mxu0 0.0
  %1385 = vmatprep.subr.mxu0 0.0
  %1386 = vmatpush2.msra.mxu0 0.0
  %1387 = vmatprep.subr.mxu0 0.0
  %1388 = vmatpush2.msra.mxu0 0.0
  %1389 = vmatprep.subr.mxu0 0.0
  %1390 = vmatpush2.msra.mxu0 0.0
  %1391 = vmatprep.subr.mxu0 0.0
  %1392 = vmatpush2.msra.mxu0 0.0
  %1393 = vmatprep.subr.mxu0 0.0
  %1394 = vmatpush2.msra.mxu0 0.0
  %1395 = vmatprep.subr.mxu0 0.0
  %1396 = vmatpush2.msra.mxu0 0.0
  %1397 = vmatprep.subr.mxu0 0.0
  %1398 = vmatpush2.msra.mxu0 0.0
  %1399 = vmatprep.subr.mxu0 0.0
  %1400 = vmatpush2.msra.mxu0 0.0
  %1401 = vmatprep.subr.mxu0 0.0
  %1402 = vmatpush2.msra.mxu0 0.0
  %1403 = vmatprep.subr.mxu0 0.0
  %1404 = vmatpush2.msra.mxu0 0.0
  %1405 = vmatprep.subr.mxu0 0.0
  %1406 = vmatpush2.msra.mxu0 0.0
  %1407 = vmatprep.subr.mxu0 0.0
  %1408 = vmatpush2.msra.mxu0 0.0
  %1409 = vmatprep.mubr.f32.mxu0 0.0
  %1410 = vmatmul.mubr.f32.gmra.mxu0 %v1277
  %v1411 = vpop.f32.mrf.mxu0
  %v1412 = vadd.f32 %v1333, %v1411
  %v1413 = vpop.f32.mrf.mxu0
  %v1414 = vadd.f32 %v1337, %v1413
  %1415 = vdwg.mxu0
  %1416 = vmatprep.subr.mxu0 0.0
  %1417 = vmatpush1.msra.mxu0 %v1327
  %1418 = vmatprep.subr.mxu0 0.0
  %1419 = vmatpush1.msra.mxu0 %v1324
  %1420 = vmatprep.subr.mxu0 0.0
  %1421 = vmatpush1.msra.mxu0 %v1321
  %1422 = vmatprep.subr.mxu0 0.0
  %1423 = vmatpush1.msra.mxu0 %v1318
  %1424 = vmatprep.subr.mxu0 0.0
  %1425 = vmatpush1.msra.mxu0 %v1315
  %1426 = vmatprep.subr.mxu0 0.0
  %1427 = vmatpush1.msra.mxu0 %v1312
  %1428 = vmatprep.subr.mxu0 0.0
  %1429 = vmatpush1.msra.mxu0 %v1309
  %1430 = vmatprep.subr.mxu0 0.0
  %1431 = vmatpush1.msra.mxu0 %v1306
  %1432 = vmatprep.subr.mxu0 0.0
  %1433 = vmatpush1.msra.mxu0 %v1303
  %1434 = vmatprep.subr.mxu0 0.0
  %1435 = vmatpush1.msra.mxu0 %v1300
  %1436 = vmatprep.subr.mxu0 0.0
  %1437 = vmatpush1.msra.mxu0 %v1297
  %1438 = vmatprep.subr.mxu0 0.0
  %1439 = vmatpush1.msra.mxu0 %v1294
  %1440 = vmatprep.subr.mxu0 0.0
  %1441 = vmatpush1.msra.mxu0 %v1291
  %1442 = vmatprep.subr.mxu0 0.0
  %1443 = vmatpush1.msra.mxu0 %v1288
  %1444 = vmatprep.subr.mxu0 0.0
  %1445 = vmatpush1.msra.mxu0 %v1285
  %1446 = vmatprep.subr.mxu0 0.0
  %1447 = vmatpush1.msra.mxu0 %v1282
  %1448 = vmatprep.subr.mxu0 0.0
  %1449 = vmatpush2.msra.mxu0 0.0
  %1450 = vmatprep.subr.mxu0 0.0
  %1451 = vmatpush2.msra.mxu0 0.0
  %1452 = vmatprep.subr.mxu0 0.0
  %1453 = vmatpush2.msra.mxu0 0.0
  %1454 = vmatprep.subr.mxu0 0.0
  %1455 = vmatpush2.msra.mxu0 0.0
  %1456 = vmatprep.subr.mxu0 0.0
  %1457 = vmatpush2.msra.mxu0 0.0
  %1458 = vmatprep.subr.mxu0 0.0
  %1459 = vmatpush2.msra.mxu0 0.0
  %1460 = vmatprep.subr.mxu0 0.0
  %1461 = vmatpush2.msra.mxu0 0.0
  %1462 = vmatprep.subr.mxu0 0.0
  %1463 = vmatpush2.msra.mxu0 0.0
  %1464 = vmatprep.subr.mxu0 0.0
  %1465 = vmatpush2.msra.mxu0 0.0
  %1466 = vmatprep.subr.mxu0 0.0
  %1467 = vmatpush2.msra.mxu0 0.0
  %1468 = vmatprep.subr.mxu0 0.0
  %1469 = vmatpush2.msra.mxu0 0.0
  %1470 = vmatprep.subr.mxu0 0.0
  %1471 = vmatpush2.msra.mxu0 0.0
  %1472 = vmatprep.subr.mxu0 0.0
  %1473 = vmatpush2.msra.mxu0 0.0
  %1474 = vmatprep.subr.mxu0 0.0
  %1475 = vmatpush2.msra.mxu0 0.0
  %1476 = vmatprep.subr.mxu0 0.0
  %1477 = vmatpush2.msra.mxu0 0.0
  %1478 = vmatprep.subr.mxu0 0.0
  %1479 = vmatpush2.msra.mxu0 0.0
  %1480 = vmatprep.mubr.f32.mxu0 0.0
  %1481 = vmatmul.mubr.f32.gmra.mxu0 %v1277
  %v1482 = vpop.f32.mrf.mxu0
  %v1483 = vadd.f32 %v1341, %v1482
  %v1484 = vpop.f32.mrf.mxu0
  %1485 = vdwg.mxu0
  %s1486 = smul.u32 4, 3
  %s1487 = smul.addr %s1486, 8
  %s1488 = scalar_lea.vmem [#allocation3], %s1487
  %v1489 = vld [vmem:[%s1488] sm:$0xff]
  %v1490 = vld [vmem:[%s1488 + $0x8] sm:$0xff]
  %v1491 = vld [vmem:[%s1488 + $0x10] sm:$0xff]
  %v1492 = vadd.f32 %v1489, %v1412
  %v1493 = vxor.u32 %v1492, 2147483648
  %v1494 = vmul.f32 %v1493, 1.442695
  %v1495 = vpow.pop %v1494
  %v1496 = vadd.f32 %v1495, 1.0
  %v1497 = vrcp.pop %v1496
  %v1498 = vmul.f32 1.0, %v1497
  %v1499 = vadd.f32 %v1490, %v1414
  %v1500 = vxor.u32 %v1499, 2147483648
  %v1501 = vmul.f32 %v1500, 1.442695
  %v1502 = vpow.pop %v1501
  %v1503 = vadd.f32 %v1502, 1.0
  %v1504 = vrcp.pop %v1503
  %v1505 = vmul.f32 1.0, %v1504
  %v1506 = vmul.f32 %v1498, %v1483
  %v1507 = vadd.f32 %v1491, %v1506
  %v1508 = vtanh.pop %v1507
  %v1509 = vsub.f32 1.0, %v1505
  %v1510 = vmul.f32 %v1509, %v1508
  %v1511 = vmul.f32 %v1505, %v1277
  %v1512 = vadd.f32 %v1510, %v1511
  %s1513 = scalar_lea.vmem [#allocation2], 32
  %1514 = vst [vmem:[%s1513] sm:$0xff] %v1512
  %v1515 = vld [vmem:[%s2] sm:$0xff]
  %v1516 = vld [vmem:[%s2 + $0x8] sm:$0xff]
  %v1517 = vld [vmem:[%s2 + $0x10] sm:$0xff]
  %v1518 = vld [vmem:[%s2 + $0x18] sm:$0xff]
  %v1519 = vld [vmem:[%s2 + $0x20] sm:$0xff]
  %v1520 = vld [vmem:[%s2 + $0x28] sm:$0xff]
  %v1521 = vld [vmem:[%s2 + $0x30] sm:$0xff]
  %v1522 = vld [vmem:[%s2 + $0x38] sm:$0xff]
  %v1523 = vld [vmem:[%s2 + $0x40] sm:$0xff]
  %v1524 = vld [vmem:[%s2 + $0x48] sm:$0xff]
  %v1525 = vld [vmem:[%s2 + $0x50] sm:$0xff]
  %v1526 = vld [vmem:[%s2 + $0x58] sm:$0xff]
  %v1527 = vld [vmem:[%s2 + $0x60] sm:$0xff]
  %v1528 = vld [vmem:[%s2 + $0x68] sm:$0xff]
  %v1529 = vld [vmem:[%s2 + $0x70] sm:$0xff]
  %v1530 = vld [vmem:[%s2 + $0x78] sm:$0xff]
  %v1531 = vld [vmem:[%s2 + $0x80] sm:$0xff]
  %v1532 = vld [vmem:[%s2 + $0x88] sm:$0xff]
  %v1533 = vld [vmem:[%s2 + $0x90] sm:$0xff]
  %v1534 = vld [vmem:[%s2 + $0x98] sm:$0xff]
  %v1535 = vld [vmem:[%s2 + $0xa0] sm:$0xff]
  %v1536 = vld [vmem:[%s2 + $0xa8] sm:$0xff]
  %v1537 = vld [vmem:[%s2 + $0xb0] sm:$0xff]
  %v1538 = vld [vmem:[%s2 + $0xb8] sm:$0xff]
  %v1539 = vld [vmem:[%s2 + $0xc0] sm:$0xff]
  %v1540 = vld [vmem:[%s2 + $0xc8] sm:$0xff]
  %v1541 = vld [vmem:[%s2 + $0xd0] sm:$0xff]
  %v1542 = vld [vmem:[%s2 + $0xd8] sm:$0xff]
  %v1543 = vld [vmem:[%s2 + $0xe0] sm:$0xff]
  %v1544 = vld [vmem:[%s2 + $0xe8] sm:$0xff]
  %v1545 = vld [vmem:[%s2 + $0xf0] sm:$0xff]
  %v1546 = vld [vmem:[%s2 + $0xf8] sm:$0xff]
  %v1547 = vld [vmem:[%s2 + $0x100] sm:$0xff]
  %v1548 = vld [vmem:[%s2 + $0x108] sm:$0xff]
  %v1549 = vld [vmem:[%s2 + $0x110] sm:$0xff]
  %v1550 = vld [vmem:[%s2 + $0x118] sm:$0xff]
  %v1551 = vld [vmem:[%s2 + $0x120] sm:$0xff]
  %v1552 = vld [vmem:[%s2 + $0x128] sm:$0xff]
  %v1553 = vld [vmem:[%s2 + $0x130] sm:$0xff]
  %v1554 = vld [vmem:[%s2 + $0x138] sm:$0xff]
  %v1555 = vld [vmem:[%s2 + $0x140] sm:$0xff]
  %v1556 = vld [vmem:[%s2 + $0x148] sm:$0xff]
  %v1557 = vld [vmem:[%s2 + $0x150] sm:$0xff]
  %v1558 = vld [vmem:[%s2 + $0x158] sm:$0xff]
  %v1559 = vld [vmem:[%s2 + $0x160] sm:$0xff]
  %v1560 = vld [vmem:[%s2 + $0x168] sm:$0xff]
  %v1561 = vld [vmem:[%s2 + $0x170] sm:$0xff]
  %v1562 = vld [vmem:[%s2 + $0x178] sm:$0xff]
  %v1563 = vld [vmem:[%s4] sm:$0x7]
  %v1565 = vlaneseq
  %v1566 = vshrl.u32 %v1565, 7
  %v1567 = vsub.s32 0, %v1566
  %v1568 = vrot.slane %v1563, %v1567
  %v1569 = vlaneseq
  %v1570 = vshrl.u32 %v1569, 7
  %v1571 = vsub.s32 1, %v1570
  %v1572 = vrot.slane %v1563, %v1571
  %v1573 = vlaneseq
  %v1574 = vshrl.u32 %v1573, 7
  %v1575 = vsub.s32 2, %v1574
  %v1576 = vrot.slane %v1563, %v1575
  %1580 = vmatprep.subr.mxu0 %v1561
  %1581 = vmatpush1.msra.mxu0 %v1560
  %1582 = vmatprep.subr.mxu0 %v1558
  %1583 = vmatpush1.msra.mxu0 %v1557
  %1584 = vmatprep.subr.mxu0 %v1555
  %1585 = vmatpush1.msra.mxu0 %v1554
  %1586 = vmatprep.subr.mxu0 %v1552
  %1587 = vmatpush1.msra.mxu0 %v1551
  %1588 = vmatprep.subr.mxu0 %v1549
  %1589 = vmatpush1.msra.mxu0 %v1548
  %1590 = vmatprep.subr.mxu0 %v1546
  %1591 = vmatpush1.msra.mxu0 %v1545
  %1592 = vmatprep.subr.mxu0 %v1543
  %1593 = vmatpush1.msra.mxu0 %v1542
  %1594 = vmatprep.subr.mxu0 %v1540
  %1595 = vmatpush1.msra.mxu0 %v1539
  %1596 = vmatprep.subr.mxu0 %v1537
  %1597 = vmatpush1.msra.mxu0 %v1536
  %1598 = vmatprep.subr.mxu0 %v1534
  %1599 = vmatpush1.msra.mxu0 %v1533
  %1600 = vmatprep.subr.mxu0 %v1531
  %1601 = vmatpush1.msra.mxu0 %v1530
  %1602 = vmatprep.subr.mxu0 %v1528
  %1603 = vmatpush1.msra.mxu0 %v1527
  %1604 = vmatprep.subr.mxu0 %v1525
  %1605 = vmatpush1.msra.mxu0 %v1524
  %1606 = vmatprep.subr.mxu0 %v1522
  %1607 = vmatpush1.msra.mxu0 %v1521
  %1608 = vmatprep.subr.mxu0 %v1519
  %1609 = vmatpush1.msra.mxu0 %v1518
  %1610 = vmatprep.subr.mxu0 %v1516
  %1611 = vmatpush1.msra.mxu0 %v1515
  %1612 = vmatprep.subr.mxu0 0.0
  %1613 = vmatpush2.msra.mxu0 0.0
  %1614 = vmatprep.subr.mxu0 0.0
  %1615 = vmatpush2.msra.mxu0 0.0
  %1616 = vmatprep.subr.mxu0 0.0
  %1617 = vmatpush2.msra.mxu0 0.0
  %1618 = vmatprep.subr.mxu0 0.0
  %1619 = vmatpush2.msra.mxu0 0.0
  %1620 = vmatprep.subr.mxu0 0.0
  %1621 = vmatpush2.msra.mxu0 0.0
  %1622 = vmatprep.subr.mxu0 0.0
  %1623 = vmatpush2.msra.mxu0 0.0
  %1624 = vmatprep.subr.mxu0 0.0
  %1625 = vmatpush2.msra.mxu0 0.0
  %1626 = vmatprep.subr.mxu0 0.0
  %1627 = vmatpush2.msra.mxu0 0.0
  %1628 = vmatprep.subr.mxu0 0.0
  %1629 = vmatpush2.msra.mxu0 0.0
  %1630 = vmatprep.subr.mxu0 0.0
  %1631 = vmatpush2.msra.mxu0 0.0
  %1632 = vmatprep.subr.mxu0 0.0
  %1633 = vmatpush2.msra.mxu0 0.0
  %1634 = vmatprep.subr.mxu0 0.0
  %1635 = vmatpush2.msra.mxu0 0.0
  %1636 = vmatprep.subr.mxu0 0.0
  %1637 = vmatpush2.msra.mxu0 0.0
  %1638 = vmatprep.subr.mxu0 0.0
  %1639 = vmatpush2.msra.mxu0 0.0
  %1640 = vmatprep.subr.mxu0 0.0
  %1641 = vmatpush2.msra.mxu0 0.0
  %1642 = vmatprep.subr.mxu0 0.0
  %1643 = vmatpush2.msra.mxu0 0.0
  %1644 = vmatprep.mubr.f32.mxu0 0.0
  %1645 = vmatmul.mubr.f32.gmra.mxu0 %v1512
  %v1646 = vpop.f32.mrf.mxu0
  %v1647 = vadd.f32 %v1568, %v1646
  %v1648 = vpop.f32.mrf.mxu0
  %v1649 = vadd.f32 %v1572, %v1648
  %1650 = vdwg.mxu0
  %1651 = vmatprep.subr.mxu0 0.0
  %1652 = vmatpush1.msra.mxu0 %v1562
  %1653 = vmatprep.subr.mxu0 0.0
  %1654 = vmatpush1.msra.mxu0 %v1559
  %1655 = vmatprep.subr.mxu0 0.0
  %1656 = vmatpush1.msra.mxu0 %v1556
  %1657 = vmatprep.subr.mxu0 0.0
  %1658 = vmatpush1.msra.mxu0 %v1553
  %1659 = vmatprep.subr.mxu0 0.0
  %1660 = vmatpush1.msra.mxu0 %v1550
  %1661 = vmatprep.subr.mxu0 0.0
  %1662 = vmatpush1.msra.mxu0 %v1547
  %1663 = vmatprep.subr.mxu0 0.0
  %1664 = vmatpush1.msra.mxu0 %v1544
  %1665 = vmatprep.subr.mxu0 0.0
  %1666 = vmatpush1.msra.mxu0 %v1541
  %1667 = vmatprep.subr.mxu0 0.0
  %1668 = vmatpush1.msra.mxu0 %v1538
  %1669 = vmatprep.subr.mxu0 0.0
  %1670 = vmatpush1.msra.mxu0 %v1535
  %1671 = vmatprep.subr.mxu0 0.0
  %1672 = vmatpush1.msra.mxu0 %v1532
  %1673 = vmatprep.subr.mxu0 0.0
  %1674 = vmatpush1.msra.mxu0 %v1529
  %1675 = vmatprep.subr.mxu0 0.0
  %1676 = vmatpush1.msra.mxu0 %v1526
  %1677 = vmatprep.subr.mxu0 0.0
  %1678 = vmatpush1.msra.mxu0 %v1523
  %1679 = vmatprep.subr.mxu0 0.0
  %1680 = vmatpush1.msra.mxu0 %v1520
  %1681 = vmatprep.subr.mxu0 0.0
  %1682 = vmatpush1.msra.mxu0 %v1517
  %1683 = vmatprep.subr.mxu0 0.0
  %1684 = vmatpush2.msra.mxu0 0.0
  %1685 = vmatprep.subr.mxu0 0.0
  %1686 = vmatpush2.msra.mxu0 0.0
  %1687 = vmatprep.subr.mxu0 0.0
  %1688 = vmatpush2.msra.mxu0 0.0
  %1689 = vmatprep.subr.mxu0 0.0
  %1690 = vmatpush2.msra.mxu0 0.0
  %1691 = vmatprep.subr.mxu0 0.0
  %1692 = vmatpush2.msra.mxu0 0.0
  %1693 = vmatprep.subr.mxu0 0.0
  %1694 = vmatpush2.msra.mxu0 0.0
  %1695 = vmatprep.subr.mxu0 0.0
  %1696 = vmatpush2.msra.mxu0 0.0
  %1697 = vmatprep.subr.mxu0 0.0
  %1698 = vmatpush2.msra.mxu0 0.0
  %1699 = vmatprep.subr.mxu0 0.0
  %1700 = vmatpush2.msra.mxu0 0.0
  %1701 = vmatprep.subr.mxu0 0.0
  %1702 = vmatpush2.msra.mxu0 0.0
  %1703 = vmatprep.subr.mxu0 0.0
  %1704 = vmatpush2.msra.mxu0 0.0
  %1705 = vmatprep.subr.mxu0 0.0
  %1706 = vmatpush2.msra.mxu0 0.0
  %1707 = vmatprep.subr.mxu0 0.0
  %1708 = vmatpush2.msra.mxu0 0.0
  %1709 = vmatprep.subr.mxu0 0.0
  %1710 = vmatpush2.msra.mxu0 0.0
  %1711 = vmatprep.subr.mxu0 0.0
  %1712 = vmatpush2.msra.mxu0 0.0
  %1713 = vmatprep.subr.mxu0 0.0
  %1714 = vmatpush2.msra.mxu0 0.0
  %1715 = vmatprep.mubr.f32.mxu0 0.0
  %1716 = vmatmul.mubr.f32.gmra.mxu0 %v1512
  %v1717 = vpop.f32.mrf.mxu0
  %v1718 = vadd.f32 %v1576, %v1717
  %v1719 = vpop.f32.mrf.mxu0
  %1720 = vdwg.mxu0
  %s1721 = smul.u32 5, 3
  %s1722 = smul.addr %s1721, 8
  %s1723 = scalar_lea.vmem [#allocation3], %s1722
  %v1724 = vld [vmem:[%s1723] sm:$0xff]
  %v1725 = vld [vmem:[%s1723 + $0x8] sm:$0xff]
  %v1726 = vld [vmem:[%s1723 + $0x10] sm:$0xff]
  %v1727 = vadd.f32 %v1724, %v1647
  %v1728 = vxor.u32 %v1727, 2147483648
  %v1729 = vmul.f32 %v1728, 1.442695
  %v1730 = vpow.pop %v1729
  %v1731 = vadd.f32 %v1730, 1.0
  %v1732 = vrcp.pop %v1731
  %v1733 = vmul.f32 1.0, %v1732
  %v1734 = vadd.f32 %v1725, %v1649
  %v1735 = vxor.u32 %v1734, 2147483648
  %v1736 = vmul.f32 %v1735, 1.442695
  %v1737 = vpow.pop %v1736
  %v1738 = vadd.f32 %v1737, 1.0
  %v1739 = vrcp.pop %v1738
  %v1740 = vmul.f32 1.0, %v1739
  %v1741 = vmul.f32 %v1733, %v1718
  %v1742 = vadd.f32 %v1726, %v1741
  %v1743 = vtanh.pop %v1742
  %v1744 = vsub.f32 1.0, %v1740
  %v1745 = vmul.f32 %v1744, %v1743
  %v1746 = vmul.f32 %v1740, %v1512
  %v1747 = vadd.f32 %v1745, %v1746
  %s1748 = scalar_lea.vmem [#allocation2], 40
  %1749 = vst [vmem:[%s1748] sm:$0xff] %v1747
  %v1750 = vld [vmem:[%s2] sm:$0xff]
  %v1751 = vld [vmem:[%s2 + $0x8] sm:$0xff]
  %v1752 = vld [vmem:[%s2 + $0x10] sm:$0xff]
  %v1753 = vld [vmem:[%s2 + $0x18] sm:$0xff]
  %v1754 = vld [vmem:[%s2 + $0x20] sm:$0xff]
  %v1755 = vld [vmem:[%s2 + $0x28] sm:$0xff]
  %v1756 = vld [vmem:[%s2 + $0x30] sm:$0xff]
  %v1757 = vld [vmem:[%s2 + $0x38] sm:$0xff]
  %v1758 = vld [vmem:[%s2 + $0x40] sm:$0xff]
  %v1759 = vld [vmem:[%s2 + $0x48] sm:$0xff]
  %v1760 = vld [vmem:[%s2 + $0x50] sm:$0xff]
  %v1761 = vld [vmem:[%s2 + $0x58] sm:$0xff]
  %v1762 = vld [vmem:[%s2 + $0x60] sm:$0xff]
  %v1763 = vld [vmem:[%s2 + $0x68] sm:$0xff]
  %v1764 = vld [vmem:[%s2 + $0x70] sm:$0xff]
  %v1765 = vld [vmem:[%s2 + $0x78] sm:$0xff]
  %v1766 = vld [vmem:[%s2 + $0x80] sm:$0xff]
  %v1767 = vld [vmem:[%s2 + $0x88] sm:$0xff]
  %v1768 = vld [vmem:[%s2 + $0x90] sm:$0xff]
  %v1769 = vld [vmem:[%s2 + $0x98] sm:$0xff]
  %v1770 = vld [vmem:[%s2 + $0xa0] sm:$0xff]
  %v1771 = vld [vmem:[%s2 + $0xa8] sm:$0xff]
  %v1772 = vld [vmem:[%s2 + $0xb0] sm:$0xff]
  %v1773 = vld [vmem:[%s2 + $0xb8] sm:$0xff]
  %v1774 = vld [vmem:[%s2 + $0xc0] sm:$0xff]
  %v1775 = vld [vmem:[%s2 + $0xc8] sm:$0xff]
  %v1776 = vld [vmem:[%s2 + $0xd0] sm:$0xff]
  %v1777 = vld [vmem:[%s2 + $0xd8] sm:$0xff]
  %v1778 = vld [vmem:[%s2 + $0xe0] sm:$0xff]
  %v1779 = vld [vmem:[%s2 + $0xe8] sm:$0xff]
  %v1780 = vld [vmem:[%s2 + $0xf0] sm:$0xff]
  %v1781 = vld [vmem:[%s2 + $0xf8] sm:$0xff]
  %v1782 = vld [vmem:[%s2 + $0x100] sm:$0xff]
  %v1783 = vld [vmem:[%s2 + $0x108] sm:$0xff]
  %v1784 = vld [vmem:[%s2 + $0x110] sm:$0xff]
  %v1785 = vld [vmem:[%s2 + $0x118] sm:$0xff]
  %v1786 = vld [vmem:[%s2 + $0x120] sm:$0xff]
  %v1787 = vld [vmem:[%s2 + $0x128] sm:$0xff]
  %v1788 = vld [vmem:[%s2 + $0x130] sm:$0xff]
  %v1789 = vld [vmem:[%s2 + $0x138] sm:$0xff]
  %v1790 = vld [vmem:[%s2 + $0x140] sm:$0xff]
  %v1791 = vld [vmem:[%s2 + $0x148] sm:$0xff]
  %v1792 = vld [vmem:[%s2 + $0x150] sm:$0xff]
  %v1793 = vld [vmem:[%s2 + $0x158] sm:$0xff]
  %v1794 = vld [vmem:[%s2 + $0x160] sm:$0xff]
  %v1795 = vld [vmem:[%s2 + $0x168] sm:$0xff]
  %v1796 = vld [vmem:[%s2 + $0x170] sm:$0xff]
  %v1797 = vld [vmem:[%s2 + $0x178] sm:$0xff]
  %v1798 = vld [vmem:[%s4] sm:$0x7]
  %v1800 = vlaneseq
  %v1801 = vshrl.u32 %v1800, 7
  %v1802 = vsub.s32 0, %v1801
  %v1803 = vrot.slane %v1798, %v1802
  %v1804 = vlaneseq
  %v1805 = vshrl.u32 %v1804, 7
  %v1806 = vsub.s32 1, %v1805
  %v1807 = vrot.slane %v1798, %v1806
  %v1808 = vlaneseq
  %v1809 = vshrl.u32 %v1808, 7
  %v1810 = vsub.s32 2, %v1809
  %v1811 = vrot.slane %v1798, %v1810
  %1815 = vmatprep.subr.mxu0 %v1796
  %1816 = vmatpush1.msra.mxu0 %v1795
  %1817 = vmatprep.subr.mxu0 %v1793
  %1818 = vmatpush1.msra.mxu0 %v1792
  %1819 = vmatprep.subr.mxu0 %v1790
  %1820 = vmatpush1.msra.mxu0 %v1789
  %1821 = vmatprep.subr.mxu0 %v1787
  %1822 = vmatpush1.msra.mxu0 %v1786
  %1823 = vmatprep.subr.mxu0 %v1784
  %1824 = vmatpush1.msra.mxu0 %v1783
  %1825 = vmatprep.subr.mxu0 %v1781
  %1826 = vmatpush1.msra.mxu0 %v1780
  %1827 = vmatprep.subr.mxu0 %v1778
  %1828 = vmatpush1.msra.mxu0 %v1777
  %1829 = vmatprep.subr.mxu0 %v1775
  %1830 = vmatpush1.msra.mxu0 %v1774
  %1831 = vmatprep.subr.mxu0 %v1772
  %1832 = vmatpush1.msra.mxu0 %v1771
  %1833 = vmatprep.subr.mxu0 %v1769
  %1834 = vmatpush1.msra.mxu0 %v1768
  %1835 = vmatprep.subr.mxu0 %v1766
  %1836 = vmatpush1.msra.mxu0 %v1765
  %1837 = vmatprep.subr.mxu0 %v1763
  %1838 = vmatpush1.msra.mxu0 %v1762
  %1839 = vmatprep.subr.mxu0 %v1760
  %1840 = vmatpush1.msra.mxu0 %v1759
  %1841 = vmatprep.subr.mxu0 %v1757
  %1842 = vmatpush1.msra.mxu0 %v1756
  %1843 = vmatprep.subr.mxu0 %v1754
  %1844 = vmatpush1.msra.mxu0 %v1753
  %1845 = vmatprep.subr.mxu0 %v1751
  %1846 = vmatpush1.msra.mxu0 %v1750
  %1847 = vmatprep.subr.mxu0 0.0
  %1848 = vmatpush2.msra.mxu0 0.0
  %1849 = vmatprep.subr.mxu0 0.0
  %1850 = vmatpush2.msra.mxu0 0.0
  %1851 = vmatprep.subr.mxu0 0.0
  %1852 = vmatpush2.msra.mxu0 0.0
  %1853 = vmatprep.subr.mxu0 0.0
  %1854 = vmatpush2.msra.mxu0 0.0
  %1855 = vmatprep.subr.mxu0 0.0
  %1856 = vmatpush2.msra.mxu0 0.0
  %1857 = vmatprep.subr.mxu0 0.0
  %1858 = vmatpush2.msra.mxu0 0.0
  %1859 = vmatprep.subr.mxu0 0.0
  %1860 = vmatpush2.msra.mxu0 0.0
  %1861 = vmatprep.subr.mxu0 0.0
  %1862 = vmatpush2.msra.mxu0 0.0
  %1863 = vmatprep.subr.mxu0 0.0
  %1864 = vmatpush2.msra.mxu0 0.0
  %1865 = vmatprep.subr.mxu0 0.0
  %1866 = vmatpush2.msra.mxu0 0.0
  %1867 = vmatprep.subr.mxu0 0.0
  %1868 = vmatpush2.msra.mxu0 0.0
  %1869 = vmatprep.subr.mxu0 0.0
  %1870 = vmatpush2.msra.mxu0 0.0
  %1871 = vmatprep.subr.mxu0 0.0
  %1872 = vmatpush2.msra.mxu0 0.0
  %1873 = vmatprep.subr.mxu0 0.0
  %1874 = vmatpush2.msra.mxu0 0.0
  %1875 = vmatprep.subr.mxu0 0.0
  %1876 = vmatpush2.msra.mxu0 0.0
  %1877 = vmatprep.subr.mxu0 0.0
  %1878 = vmatpush2.msra.mxu0 0.0
  %1879 = vmatprep.mubr.f32.mxu0 0.0
  %1880 = vmatmul.mubr.f32.gmra.mxu0 %v1747
  %v1881 = vpop.f32.mrf.mxu0
  %v1882 = vadd.f32 %v1803, %v1881
  %v1883 = vpop.f32.mrf.mxu0
  %v1884 = vadd.f32 %v1807, %v1883
  %1885 = vdwg.mxu0
  %1886 = vmatprep.subr.mxu0 0.0
  %1887 = vmatpush1.msra.mxu0 %v1797
  %1888 = vmatprep.subr.mxu0 0.0
  %1889 = vmatpush1.msra.mxu0 %v1794
  %1890 = vmatprep.subr.mxu0 0.0
  %1891 = vmatpush1.msra.mxu0 %v1791
  %1892 = vmatprep.subr.mxu0 0.0
  %1893 = vmatpush1.msra.mxu0 %v1788
  %1894 = vmatprep.subr.mxu0 0.0
  %1895 = vmatpush1.msra.mxu0 %v1785
  %1896 = vmatprep.subr.mxu0 0.0
  %1897 = vmatpush1.msra.mxu0 %v1782
  %1898 = vmatprep.subr.mxu0 0.0
  %1899 = vmatpush1.msra.mxu0 %v1779
  %1900 = vmatprep.subr.mxu0 0.0
  %1901 = vmatpush1.msra.mxu0 %v1776
  %1902 = vmatprep.subr.mxu0 0.0
  %1903 = vmatpush1.msra.mxu0 %v1773
  %1904 = vmatprep.subr.mxu0 0.0
  %1905 = vmatpush1.msra.mxu0 %v1770
  %1906 = vmatprep.subr.mxu0 0.0
  %1907 = vmatpush1.msra.mxu0 %v1767
  %1908 = vmatprep.subr.mxu0 0.0
  %1909 = vmatpush1.msra.mxu0 %v1764
  %1910 = vmatprep.subr.mxu0 0.0
  %1911 = vmatpush1.msra.mxu0 %v1761
  %1912 = vmatprep.subr.mxu0 0.0
  %1913 = vmatpush1.msra.mxu0 %v1758
  %1914 = vmatprep.subr.mxu0 0.0
  %1915 = vmatpush1.msra.mxu0 %v1755
  %1916 = vmatprep.subr.mxu0 0.0
  %1917 = vmatpush1.msra.mxu0 %v1752
  %1918 = vmatprep.subr.mxu0 0.0
  %1919 = vmatpush2.msra.mxu0 0.0
  %1920 = vmatprep.subr.mxu0 0.0
  %1921 = vmatpush2.msra.mxu0 0.0
  %1922 = vmatprep.subr.mxu0 0.0
  %1923 = vmatpush2.msra.mxu0 0.0
  %1924 = vmatprep.subr.mxu0 0.0
  %1925 = vmatpush2.msra.mxu0 0.0
  %1926 = vmatprep.subr.mxu0 0.0
  %1927 = vmatpush2.msra.mxu0 0.0
  %1928 = vmatprep.subr.mxu0 0.0
  %1929 = vmatpush2.msra.mxu0 0.0
  %1930 = vmatprep.subr.mxu0 0.0
  %1931 = vmatpush2.msra.mxu0 0.0
  %1932 = vmatprep.subr.mxu0 0.0
  %1933 = vmatpush2.msra.mxu0 0.0
  %1934 = vmatprep.subr.mxu0 0.0
  %1935 = vmatpush2.msra.mxu0 0.0
  %1936 = vmatprep.subr.mxu0 0.0
  %1937 = vmatpush2.msra.mxu0 0.0
  %1938 = vmatprep.subr.mxu0 0.0
  %1939 = vmatpush2.msra.mxu0 0.0
  %1940 = vmatprep.subr.mxu0 0.0
  %1941 = vmatpush2.msra.mxu0 0.0
  %1942 = vmatprep.subr.mxu0 0.0
  %1943 = vmatpush2.msra.mxu0 0.0
  %1944 = vmatprep.subr.mxu0 0.0
  %1945 = vmatpush2.msra.mxu0 0.0
  %1946 = vmatprep.subr.mxu0 0.0
  %1947 = vmatpush2.msra.mxu0 0.0
  %1948 = vmatprep.subr.mxu0 0.0
  %1949 = vmatpush2.msra.mxu0 0.0
  %1950 = vmatprep.mubr.f32.mxu0 0.0
  %1951 = vmatmul.mubr.f32.gmra.mxu0 %v1747
  %v1952 = vpop.f32.mrf.mxu0
  %v1953 = vadd.f32 %v1811, %v1952
  %v1954 = vpop.f32.mrf.mxu0
  %1955 = vdwg.mxu0
  %s1956 = smul.u32 6, 3
  %s1957 = smul.addr %s1956, 8
  %s1958 = scalar_lea.vmem [#allocation3], %s1957
  %v1959 = vld [vmem:[%s1958] sm:$0xff]
  %v1960 = vld [vmem:[%s1958 + $0x8] sm:$0xff]
  %v1961 = vld [vmem:[%s1958 + $0x10] sm:$0xff]
  %v1962 = vadd.f32 %v1959, %v1882
  %v1963 = vxor.u32 %v1962, 2147483648
  %v1964 = vmul.f32 %v1963, 1.442695
  %v1965 = vpow.pop %v1964
  %v1966 = vadd.f32 %v1965, 1.0
  %v1967 = vrcp.pop %v1966
  %v1968 = vmul.f32 1.0, %v1967
  %v1969 = vadd.f32 %v1960, %v1884
  %v1970 = vxor.u32 %v1969, 2147483648
  %v1971 = vmul.f32 %v1970, 1.442695
  %v1972 = vpow.pop %v1971
  %v1973 = vadd.f32 %v1972, 1.0
  %v1974 = vrcp.pop %v1973
  %v1975 = vmul.f32 1.0, %v1974
  %v1976 = vmul.f32 %v1968, %v1953
  %v1977 = vadd.f32 %v1961, %v1976
  %v1978 = vtanh.pop %v1977
  %v1979 = vsub.f32 1.0, %v1975
  %v1980 = vmul.f32 %v1979, %v1978
  %v1981 = vmul.f32 %v1975, %v1747
  %v1982 = vadd.f32 %v1980, %v1981
  %s1983 = scalar_lea.vmem [#allocation2], 48
  %1984 = vst [vmem:[%s1983] sm:$0xff] %v1982
  %v1985 = vld [vmem:[%s2] sm:$0xff]
  %v1986 = vld [vmem:[%s2 + $0x8] sm:$0xff]
  %v1987 = vld [vmem:[%s2 + $0x10] sm:$0xff]
  %v1988 = vld [vmem:[%s2 + $0x18] sm:$0xff]
  %v1989 = vld [vmem:[%s2 + $0x20] sm:$0xff]
  %v1990 = vld [vmem:[%s2 + $0x28] sm:$0xff]
  %v1991 = vld [vmem:[%s2 + $0x30] sm:$0xff]
  %v1992 = vld [vmem:[%s2 + $0x38] sm:$0xff]
  %v1993 = vld [vmem:[%s2 + $0x40] sm:$0xff]
  %v1994 = vld [vmem:[%s2 + $0x48] sm:$0xff]
  %v1995 = vld [vmem:[%s2 + $0x50] sm:$0xff]
  %v1996 = vld [vmem:[%s2 + $0x58] sm:$0xff]
  %v1997 = vld [vmem:[%s2 + $0x60] sm:$0xff]
  %v1998 = vld [vmem:[%s2 + $0x68] sm:$0xff]
  %v1999 = vld [vmem:[%s2 + $0x70] sm:$0xff]
  %v2000 = vld [vmem:[%s2 + $0x78] sm:$0xff]
  %v2001 = vld [vmem:[%s2 + $0x80] sm:$0xff]
  %v2002 = vld [vmem:[%s2 + $0x88] sm:$0xff]
  %v2003 = vld [vmem:[%s2 + $0x90] sm:$0xff]
  %v2004 = vld [vmem:[%s2 + $0x98] sm:$0xff]
  %v2005 = vld [vmem:[%s2 + $0xa0] sm:$0xff]
  %v2006 = vld [vmem:[%s2 + $0xa8] sm:$0xff]
  %v2007 = vld [vmem:[%s2 + $0xb0] sm:$0xff]
  %v2008 = vld [vmem:[%s2 + $0xb8] sm:$0xff]
  %v2009 = vld [vmem:[%s2 + $0xc0] sm:$0xff]
  %v2010 = vld [vmem:[%s2 + $0xc8] sm:$0xff]
  %v2011 = vld [vmem:[%s2 + $0xd0] sm:$0xff]
  %v2012 = vld [vmem:[%s2 + $0xd8] sm:$0xff]
  %v2013 = vld [vmem:[%s2 + $0xe0] sm:$0xff]
  %v2014 = vld [vmem:[%s2 + $0xe8] sm:$0xff]
  %v2015 = vld [vmem:[%s2 + $0xf0] sm:$0xff]
  %v2016 = vld [vmem:[%s2 + $0xf8] sm:$0xff]
  %v2017 = vld [vmem:[%s2 + $0x100] sm:$0xff]
  %v2018 = vld [vmem:[%s2 + $0x108] sm:$0xff]
  %v2019 = vld [vmem:[%s2 + $0x110] sm:$0xff]
  %v2020 = vld [vmem:[%s2 + $0x118] sm:$0xff]
  %v2021 = vld [vmem:[%s2 + $0x120] sm:$0xff]
  %v2022 = vld [vmem:[%s2 + $0x128] sm:$0xff]
  %v2023 = vld [vmem:[%s2 + $0x130] sm:$0xff]
  %v2024 = vld [vmem:[%s2 + $0x138] sm:$0xff]
  %v2025 = vld [vmem:[%s2 + $0x140] sm:$0xff]
  %v2026 = vld [vmem:[%s2 + $0x148] sm:$0xff]
  %v2027 = vld [vmem:[%s2 + $0x150] sm:$0xff]
  %v2028 = vld [vmem:[%s2 + $0x158] sm:$0xff]
  %v2029 = vld [vmem:[%s2 + $0x160] sm:$0xff]
  %v2030 = vld [vmem:[%s2 + $0x168] sm:$0xff]
  %v2031 = vld [vmem:[%s2 + $0x170] sm:$0xff]
  %v2032 = vld [vmem:[%s2 + $0x178] sm:$0xff]
  %v2033 = vld [vmem:[%s4] sm:$0x7]
  %v2035 = vlaneseq
  %v2036 = vshrl.u32 %v2035, 7
  %v2037 = vsub.s32 0, %v2036
  %v2038 = vrot.slane %v2033, %v2037
  %v2039 = vlaneseq
  %v2040 = vshrl.u32 %v2039, 7
  %v2041 = vsub.s32 1, %v2040
  %v2042 = vrot.slane %v2033, %v2041
  %v2043 = vlaneseq
  %v2044 = vshrl.u32 %v2043, 7
  %v2045 = vsub.s32 2, %v2044
  %v2046 = vrot.slane %v2033, %v2045
  %2050 = vmatprep.subr.mxu0 %v2031
  %2051 = vmatpush1.msra.mxu0 %v2030
  %2052 = vmatprep.subr.mxu0 %v2028
  %2053 = vmatpush1.msra.mxu0 %v2027
  %2054 = vmatprep.subr.mxu0 %v2025
  %2055 = vmatpush1.msra.mxu0 %v2024
  %2056 = vmatprep.subr.mxu0 %v2022
  %2057 = vmatpush1.msra.mxu0 %v2021
  %2058 = vmatprep.subr.mxu0 %v2019
  %2059 = vmatpush1.msra.mxu0 %v2018
  %2060 = vmatprep.subr.mxu0 %v2016
  %2061 = vmatpush1.msra.mxu0 %v2015
  %2062 = vmatprep.subr.mxu0 %v2013
  %2063 = vmatpush1.msra.mxu0 %v2012
  %2064 = vmatprep.subr.mxu0 %v2010
  %2065 = vmatpush1.msra.mxu0 %v2009
  %2066 = vmatprep.subr.mxu0 %v2007
  %2067 = vmatpush1.msra.mxu0 %v2006
  %2068 = vmatprep.subr.mxu0 %v2004
  %2069 = vmatpush1.msra.mxu0 %v2003
  %2070 = vmatprep.subr.mxu0 %v2001
  %2071 = vmatpush1.msra.mxu0 %v2000
  %2072 = vmatprep.subr.mxu0 %v1998
  %2073 = vmatpush1.msra.mxu0 %v1997
  %2074 = vmatprep.subr.mxu0 %v1995
  %2075 = vmatpush1.msra.mxu0 %v1994
  %2076 = vmatprep.subr.mxu0 %v1992
  %2077 = vmatpush1.msra.mxu0 %v1991
  %2078 = vmatprep.subr.mxu0 %v1989
  %2079 = vmatpush1.msra.mxu0 %v1988
  %2080 = vmatprep.subr.mxu0 %v1986
  %2081 = vmatpush1.msra.mxu0 %v1985
  %2082 = vmatprep.subr.mxu0 0.0
  %2083 = vmatpush2.msra.mxu0 0.0
  %2084 = vmatprep.subr.mxu0 0.0
  %2085 = vmatpush2.msra.mxu0 0.0
  %2086 = vmatprep.subr.mxu0 0.0
  %2087 = vmatpush2.msra.mxu0 0.0
  %2088 = vmatprep.subr.mxu0 0.0
  %2089 = vmatpush2.msra.mxu0 0.0
  %2090 = vmatprep.subr.mxu0 0.0
  %2091 = vmatpush2.msra.mxu0 0.0
  %2092 = vmatprep.subr.mxu0 0.0
  %2093 = vmatpush2.msra.mxu0 0.0
  %2094 = vmatprep.subr.mxu0 0.0
  %2095 = vmatpush2.msra.mxu0 0.0
  %2096 = vmatprep.subr.mxu0 0.0
  %2097 = vmatpush2.msra.mxu0 0.0
  %2098 = vmatprep.subr.mxu0 0.0
  %2099 = vmatpush2.msra.mxu0 0.0
  %2100 = vmatprep.subr.mxu0 0.0
  %2101 = vmatpush2.msra.mxu0 0.0
  %2102 = vmatprep.subr.mxu0 0.0
  %2103 = vmatpush2.msra.mxu0 0.0
  %2104 = vmatprep.subr.mxu0 0.0
  %2105 = vmatpush2.msra.mxu0 0.0
  %2106 = vmatprep.subr.mxu0 0.0
  %2107 = vmatpush2.msra.mxu0 0.0
  %2108 = vmatprep.subr.mxu0 0.0
  %2109 = vmatpush2.msra.mxu0 0.0
  %2110 = vmatprep.subr.mxu0 0.0
  %2111 = vmatpush2.msra.mxu0 0.0
  %2112 = vmatprep.subr.mxu0 0.0
  %2113 = vmatpush2.msra.mxu0 0.0
  %2114 = vmatprep.mubr.f32.mxu0 0.0
  %2115 = vmatmul.mubr.f32.gmra.mxu0 %v1982
  %v2116 = vpop.f32.mrf.mxu0
  %v2117 = vadd.f32 %v2038, %v2116
  %v2118 = vpop.f32.mrf.mxu0
  %v2119 = vadd.f32 %v2042, %v2118
  %2120 = vdwg.mxu0
  %2121 = vmatprep.subr.mxu0 0.0
  %2122 = vmatpush1.msra.mxu0 %v2032
  %2123 = vmatprep.subr.mxu0 0.0
  %2124 = vmatpush1.msra.mxu0 %v2029
  %2125 = vmatprep.subr.mxu0 0.0
  %2126 = vmatpush1.msra.mxu0 %v2026
  %2127 = vmatprep.subr.mxu0 0.0
  %2128 = vmatpush1.msra.mxu0 %v2023
  %2129 = vmatprep.subr.mxu0 0.0
  %2130 = vmatpush1.msra.mxu0 %v2020
  %2131 = vmatprep.subr.mxu0 0.0
  %2132 = vmatpush1.msra.mxu0 %v2017
  %2133 = vmatprep.subr.mxu0 0.0
  %2134 = vmatpush1.msra.mxu0 %v2014
  %2135 = vmatprep.subr.mxu0 0.0
  %2136 = vmatpush1.msra.mxu0 %v2011
  %2137 = vmatprep.subr.mxu0 0.0
  %2138 = vmatpush1.msra.mxu0 %v2008
  %2139 = vmatprep.subr.mxu0 0.0
  %2140 = vmatpush1.msra.mxu0 %v2005
  %2141 = vmatprep.subr.mxu0 0.0
  %2142 = vmatpush1.msra.mxu0 %v2002
  %2143 = vmatprep.subr.mxu0 0.0
  %2144 = vmatpush1.msra.mxu0 %v1999
  %2145 = vmatprep.subr.mxu0 0.0
  %2146 = vmatpush1.msra.mxu0 %v1996
  %2147 = vmatprep.subr.mxu0 0.0
  %2148 = vmatpush1.msra.mxu0 %v1993
  %2149 = vmatprep.subr.mxu0 0.0
  %2150 = vmatpush1.msra.mxu0 %v1990
  %2151 = vmatprep.subr.mxu0 0.0
  %2152 = vmatpush1.msra.mxu0 %v1987
  %2153 = vmatprep.subr.mxu0 0.0
  %2154 = vmatpush2.msra.mxu0 0.0
  %2155 = vmatprep.subr.mxu0 0.0
  %2156 = vmatpush2.msra.mxu0 0.0
  %2157 = vmatprep.subr.mxu0 0.0
  %2158 = vmatpush2.msra.mxu0 0.0
  %2159 = vmatprep.subr.mxu0 0.0
  %2160 = vmatpush2.msra.mxu0 0.0
  %2161 = vmatprep.subr.mxu0 0.0
  %2162 = vmatpush2.msra.mxu0 0.0
  %2163 = vmatprep.subr.mxu0 0.0
  %2164 = vmatpush2.msra.mxu0 0.0
  %2165 = vmatprep.subr.mxu0 0.0
  %2166 = vmatpush2.msra.mxu0 0.0
  %2167 = vmatprep.subr.mxu0 0.0
  %2168 = vmatpush2.msra.mxu0 0.0
  %2169 = vmatprep.subr.mxu0 0.0
  %2170 = vmatpush2.msra.mxu0 0.0
  %2171 = vmatprep.subr.mxu0 0.0
  %2172 = vmatpush2.msra.mxu0 0.0
  %2173 = vmatprep.subr.mxu0 0.0
  %2174 = vmatpush2.msra.mxu0 0.0
  %2175 = vmatprep.subr.mxu0 0.0
  %2176 = vmatpush2.msra.mxu0 0.0
  %2177 = vmatprep.subr.mxu0 0.0
  %2178 = vmatpush2.msra.mxu0 0.0
  %2179 = vmatprep.subr.mxu0 0.0
  %2180 = vmatpush2.msra.mxu0 0.0
  %2181 = vmatprep.subr.mxu0 0.0
  %2182 = vmatpush2.msra.mxu0 0.0
  %2183 = vmatprep.subr.mxu0 0.0
  %2184 = vmatpush2.msra.mxu0 0.0
  %2185 = vmatprep.mubr.f32.mxu0 0.0
  %2186 = vmatmul.mubr.f32.gmra.mxu0 %v1982
  %v2187 = vpop.f32.mrf.mxu0
  %v2188 = vadd.f32 %v2046, %v2187
  %v2189 = vpop.f32.mrf.mxu0
  %2190 = vdwg.mxu0
  %s2191 = smul.u32 7, 3
  %s2192 = smul.addr %s2191, 8
  %s2193 = scalar_lea.vmem [#allocation3], %s2192
  %v2194 = vld [vmem:[%s2193] sm:$0xff]
  %v2195 = vld [vmem:[%s2193 + $0x8] sm:$0xff]
  %v2196 = vld [vmem:[%s2193 + $0x10] sm:$0xff]
  %v2197 = vadd.f32 %v2194, %v2117
  %v2198 = vxor.u32 %v2197, 2147483648
  %v2199 = vmul.f32 %v2198, 1.442695
  %v2200 = vpow.pop %v2199
  %v2201 = vadd.f32 %v2200, 1.0
  %v2202 = vrcp.pop %v2201
  %v2203 = vmul.f32 1.0, %v2202
  %v2204 = vadd.f32 %v2195, %v2119
  %v2205 = vxor.u32 %v2204, 2147483648
  %v2206 = vmul.f32 %v2205, 1.442695
  %v2207 = vpow.pop %v2206
  %v2208 = vadd.f32 %v2207, 1.0
  %v2209 = vrcp.pop %v2208
  %v2210 = vmul.f32 1.0, %v2209
  %v2211 = vmul.f32 %v2203, %v2188
  %v2212 = vadd.f32 %v2196, %v2211
  %v2213 = vtanh.pop %v2212
  %v2214 = vsub.f32 1.0, %v2210
  %v2215 = vmul.f32 %v2214, %v2213
  %v2216 = vmul.f32 %v2210, %v1982
  %v2217 = vadd.f32 %v2215, %v2216
  %s2218 = scalar_lea.vmem [#allocation2], 56
  %2219 = vst [vmem:[%s2218] sm:$0xff] %v2217
  %v2220 = vld [vmem:[#allocation2] sm:$0xff]
  %v2221 = vld [vmem:[#allocation2 + $0x8] sm:$0xff]
  %v2222 = vld [vmem:[#allocation2 + $0x10] sm:$0xff]
  %v2223 = vld [vmem:[#allocation2 + $0x18] sm:$0xff]
  %v2224 = vld [vmem:[#allocation2 + $0x20] sm:$0xff]
  %v2225 = vld [vmem:[#allocation2 + $0x28] sm:$0xff]
  %v2226 = vld [vmem:[#allocation2 + $0x30] sm:$0xff]
  %v2227 = vld [vmem:[#allocation2 + $0x38] sm:$0xff]
  %s2228 = scalar_lea.vmem %s1, 384
  %v2229 = vld [vmem:[%s2228] sm:$0xff]
  %v2230 = vld [vmem:[%s2228 + $0x8] sm:$0xff]
  %v2231 = vld [vmem:[%s2228 + $0x10] sm:$0xff]
  %v2232 = vld [vmem:[%s2228 + $0x18] sm:$0xff]
  %v2233 = vld [vmem:[%s2228 + $0x20] sm:$0xff]
  %v2234 = vld [vmem:[%s2228 + $0x28] sm:$0xff]
  %v2235 = vld [vmem:[%s2228 + $0x30] sm:$0xff]
  %v2236 = vld [vmem:[%s2228 + $0x38] sm:$0xff]
  %v2237 = vld [vmem:[%s2228 + $0x40] sm:$0xff]
  %v2238 = vld [vmem:[%s2228 + $0x48] sm:$0xff]
  %v2239 = vld [vmem:[%s2228 + $0x50] sm:$0xff]
  %v2240 = vld [vmem:[%s2228 + $0x58] sm:$0xff]
  %v2241 = vld [vmem:[%s2228 + $0x60] sm:$0xff]
  %v2242 = vld [vmem:[%s2228 + $0x68] sm:$0xff]
  %v2243 = vld [vmem:[%s2228 + $0x70] sm:$0xff]
  %v2244 = vld [vmem:[%s2228 + $0x78] sm:$0xff]
  %v2245 = vld [vmem:[%s2228 + $0x80] sm:$0xff]
  %v2246 = vld [vmem:[%s2228 + $0x88] sm:$0xff]
  %v2247 = vld [vmem:[%s2228 + $0x90] sm:$0xff]
  %v2248 = vld [vmem:[%s2228 + $0x98] sm:$0xff]
  %v2249 = vld [vmem:[%s2228 + $0xa0] sm:$0xff]
  %v2250 = vld [vmem:[%s2228 + $0xa8] sm:$0xff]
  %v2251 = vld [vmem:[%s2228 + $0xb0] sm:$0xff]
  %v2252 = vld [vmem:[%s2228 + $0xb8] sm:$0xff]
  %v2253 = vld [vmem:[%s2228 + $0xc0] sm:$0xff]
  %v2254 = vld [vmem:[%s2228 + $0xc8] sm:$0xff]
  %v2255 = vld [vmem:[%s2228 + $0xd0] sm:$0xff]
  %v2256 = vld [vmem:[%s2228 + $0xd8] sm:$0xff]
  %v2257 = vld [vmem:[%s2228 + $0xe0] sm:$0xff]
  %v2258 = vld [vmem:[%s2228 + $0xe8] sm:$0xff]
  %v2259 = vld [vmem:[%s2228 + $0xf0] sm:$0xff]
  %v2260 = vld [vmem:[%s2228 + $0xf8] sm:$0xff]
  %v2261 = vld [vmem:[%s2228 + $0x100] sm:$0xff]
  %v2262 = vld [vmem:[%s2228 + $0x108] sm:$0xff]
  %v2263 = vld [vmem:[%s2228 + $0x110] sm:$0xff]
  %v2264 = vld [vmem:[%s2228 + $0x118] sm:$0xff]
  %v2265 = vld [vmem:[%s2228 + $0x120] sm:$0xff]
  %v2266 = vld [vmem:[%s2228 + $0x128] sm:$0xff]
  %v2267 = vld [vmem:[%s2228 + $0x130] sm:$0xff]
  %v2268 = vld [vmem:[%s2228 + $0x138] sm:$0xff]
  %v2269 = vld [vmem:[%s2228 + $0x140] sm:$0xff]
  %v2270 = vld [vmem:[%s2228 + $0x148] sm:$0xff]
  %v2271 = vld [vmem:[%s2228 + $0x150] sm:$0xff]
  %v2272 = vld [vmem:[%s2228 + $0x158] sm:$0xff]
  %v2273 = vld [vmem:[%s2228 + $0x160] sm:$0xff]
  %v2274 = vld [vmem:[%s2228 + $0x168] sm:$0xff]
  %v2275 = vld [vmem:[%s2228 + $0x170] sm:$0xff]
  %v2276 = vld [vmem:[%s2228 + $0x178] sm:$0xff]
  %s2277 = scalar_lea.vmem %s3, 3
  %v2278 = vld [vmem:[%s2277] sm:$0x7]
  %v2280 = vlaneseq
  %v2281 = vshrl.u32 %v2280, 7
  %v2282 = vsub.s32 0, %v2281
  %v2283 = vrot.slane %v2278, %v2282
  %v2284 = vlaneseq
  %v2285 = vshrl.u32 %v2284, 7
  %v2286 = vsub.s32 1, %v2285
  %v2287 = vrot.slane %v2278, %v2286
  %v2288 = vlaneseq
  %v2289 = vshrl.u32 %v2288, 7
  %v2290 = vsub.s32 2, %v2289
  %v2291 = vrot.slane %v2278, %v2290
  %2295 = vmatprep.subr.mxu0 %v2275
  %2296 = vmatpush1.msra.mxu0 %v2274
  %2297 = vmatprep.subr.mxu0 %v2272
  %2298 = vmatpush1.msra.mxu0 %v2271
  %2299 = vmatprep.subr.mxu0 %v2269
  %2300 = vmatpush1.msra.mxu0 %v2268
  %2301 = vmatprep.subr.mxu0 %v2266
  %2302 = vmatpush1.msra.mxu0 %v2265
  %2303 = vmatprep.subr.mxu0 %v2263
  %2304 = vmatpush1.msra.mxu0 %v2262
  %2305 = vmatprep.subr.mxu0 %v2260
  %2306 = vmatpush1.msra.mxu0 %v2259
  %2307 = vmatprep.subr.mxu0 %v2257
  %2308 = vmatpush1.msra.mxu0 %v2256
  %2309 = vmatprep.subr.mxu0 %v2254
  %2310 = vmatpush1.msra.mxu0 %v2253
  %2311 = vmatprep.subr.mxu0 %v2251
  %2312 = vmatpush1.msra.mxu0 %v2250
  %2313 = vmatprep.subr.mxu0 %v2248
  %2314 = vmatpush1.msra.mxu0 %v2247
  %2315 = vmatprep.subr.mxu0 %v2245
  %2316 = vmatpush1.msra.mxu0 %v2244
  %2317 = vmatprep.subr.mxu0 %v2242
  %2318 = vmatpush1.msra.mxu0 %v2241
  %2319 = vmatprep.subr.mxu0 %v2239
  %2320 = vmatpush1.msra.mxu0 %v2238
  %2321 = vmatprep.subr.mxu0 %v2236
  %2322 = vmatpush1.msra.mxu0 %v2235
  %2323 = vmatprep.subr.mxu0 %v2233
  %2324 = vmatpush1.msra.mxu0 %v2232
  %2325 = vmatprep.subr.mxu0 %v2230
  %2326 = vmatpush1.msra.mxu0 %v2229
  %2327 = vmatprep.subr.mxu0 0.0
  %2328 = vmatpush2.msra.mxu0 0.0
  %2329 = vmatprep.subr.mxu0 0.0
  %2330 = vmatpush2.msra.mxu0 0.0
  %2331 = vmatprep.subr.mxu0 0.0
  %2332 = vmatpush2.msra.mxu0 0.0
  %2333 = vmatprep.subr.mxu0 0.0
  %2334 = vmatpush2.msra.mxu0 0.0
  %2335 = vmatprep.subr.mxu0 0.0
  %2336 = vmatpush2.msra.mxu0 0.0
  %2337 = vmatprep.subr.mxu0 0.0
  %2338 = vmatpush2.msra.mxu0 0.0
  %2339 = vmatprep.subr.mxu0 0.0
  %2340 = vmatpush2.msra.mxu0 0.0
  %2341 = vmatprep.subr.mxu0 0.0
  %2342 = vmatpush2.msra.mxu0 0.0
  %2343 = vmatprep.subr.mxu0 0.0
  %2344 = vmatpush2.msra.mxu0 0.0
  %2345 = vmatprep.subr.mxu0 0.0
  %2346 = vmatpush2.msra.mxu0 0.0
  %2347 = vmatprep.subr.mxu0 0.0
  %2348 = vmatpush2.msra.mxu0 0.0
  %2349 = vmatprep.subr.mxu0 0.0
  %2350 = vmatpush2.msra.mxu0 0.0
  %2351 = vmatprep.subr.mxu0 0.0
  %2352 = vmatpush2.msra.mxu0 0.0
  %2353 = vmatprep.subr.mxu0 0.0
  %2354 = vmatpush2.msra.mxu0 0.0
  %2355 = vmatprep.subr.mxu0 0.0
  %2356 = vmatpush2.msra.mxu0 0.0
  %2357 = vmatprep.subr.mxu0 0.0
  %2358 = vmatpush2.msra.mxu0 0.0
  %2359 = vmatprep.mubr.f32.mxu0 0.0
  %2360 = vmatmul.mubr.f32.gmra.mxu0 %v2220
  %v2361 = vpop.f32.mrf.mxu0
  %v2362 = vadd.f32 %v2283, %v2361
  %v2363 = vpop.f32.mrf.mxu0
  %v2364 = vadd.f32 %v2287, %v2363
  %2365 = vmatprep.mubr.f32.mxu0 0.0
  %2366 = vmatmul.mubr.f32.gmra.mxu0 %v2221
  %v2367 = vpop.f32.mrf.mxu0
  %v2368 = vadd.f32 %v2283, %v2367
  %v2369 = vpop.f32.mrf.mxu0
  %v2370 = vadd.f32 %v2287, %v2369
  %2371 = vmatprep.mubr.f32.mxu0 0.0
  %2372 = vmatmul.mubr.f32.gmra.mxu0 %v2222
  %v2373 = vpop.f32.mrf.mxu0
  %v2374 = vadd.f32 %v2283, %v2373
  %v2375 = vpop.f32.mrf.mxu0
  %v2376 = vadd.f32 %v2287, %v2375
  %2377 = vmatprep.mubr.f32.mxu0 0.0
  %2378 = vmatmul.mubr.f32.gmra.mxu0 %v2223
  %v2379 = vpop.f32.mrf.mxu0
  %v2380 = vadd.f32 %v2283, %v2379
  %v2381 = vpop.f32.mrf.mxu0
  %v2382 = vadd.f32 %v2287, %v2381
  %2383 = vmatprep.mubr.f32.mxu0 0.0
  %2384 = vmatmul.mubr.f32.gmra.mxu0 %v2224
  %v2385 = vpop.f32.mrf.mxu0
  %v2386 = vadd.f32 %v2283, %v2385
  %v2387 = vpop.f32.mrf.mxu0
  %v2388 = vadd.f32 %v2287, %v2387
  %2389 = vmatprep.mubr.f32.mxu0 0.0
  %2390 = vmatmul.mubr.f32.gmra.mxu0 %v2225
  %v2391 = vpop.f32.mrf.mxu0
  %v2392 = vadd.f32 %v2283, %v2391
  %v2393 = vpop.f32.mrf.mxu0
  %v2394 = vadd.f32 %v2287, %v2393
  %2395 = vmatprep.mubr.f32.mxu0 0.0
  %2396 = vmatmul.mubr.f32.gmra.mxu0 %v2226
  %v2397 = vpop.f32.mrf.mxu0
  %v2398 = vadd.f32 %v2283, %v2397
  %v2399 = vpop.f32.mrf.mxu0
  %v2400 = vadd.f32 %v2287, %v2399
  %2401 = vmatprep.mubr.f32.mxu0 0.0
  %2402 = vmatmul.mubr.f32.gmra.mxu0 %v2227
  %v2403 = vpop.f32.mrf.mxu0
  %v2404 = vadd.f32 %v2283, %v2403
  %v2405 = vpop.f32.mrf.mxu0
  %v2406 = vadd.f32 %v2287, %v2405
  %2407 = vdwg.mxu0
  %2408 = vmatprep.subr.mxu0 0.0
  %2409 = vmatpush1.msra.mxu0 %v2276
  %2410 = vmatprep.subr.mxu0 0.0
  %2411 = vmatpush1.msra.mxu0 %v2273
  %2412 = vmatprep.subr.mxu0 0.0
  %2413 = vmatpush1.msra.mxu0 %v2270
  %2414 = vmatprep.subr.mxu0 0.0
  %2415 = vmatpush1.msra.mxu0 %v2267
  %2416 = vmatprep.subr.mxu0 0.0
  %2417 = vmatpush1.msra.mxu0 %v2264
  %2418 = vmatprep.subr.mxu0 0.0
  %2419 = vmatpush1.msra.mxu0 %v2261
  %2420 = vmatprep.subr.mxu0 0.0
  %2421 = vmatpush1.msra.mxu0 %v2258
  %2422 = vmatprep.subr.mxu0 0.0
  %2423 = vmatpush1.msra.mxu0 %v2255
  %2424 = vmatprep.subr.mxu0 0.0
  %2425 = vmatpush1.msra.mxu0 %v2252
  %2426 = vmatprep.subr.mxu0 0.0
  %2427 = vmatpush1.msra.mxu0 %v2249
  %2428 = vmatprep.subr.mxu0 0.0
  %2429 = vmatpush1.msra.mxu0 %v2246
  %2430 = vmatprep.subr.mxu0 0.0
  %2431 = vmatpush1.msra.mxu0 %v2243
  %2432 = vmatprep.subr.mxu0 0.0
  %2433 = vmatpush1.msra.mxu0 %v2240
  %2434 = vmatprep.subr.mxu0 0.0
  %2435 = vmatpush1.msra.mxu0 %v2237
  %2436 = vmatprep.subr.mxu0 0.0
  %2437 = vmatpush1.msra.mxu0 %v2234
  %2438 = vmatprep.subr.mxu0 0.0
  %2439 = vmatpush1.msra.mxu0 %v2231
  %2440 = vmatprep.subr.mxu0 0.0
  %2441 = vmatpush2.msra.mxu0 0.0
  %2442 = vmatprep.subr.mxu0 0.0
  %2443 = vmatpush2.msra.mxu0 0.0
  %2444 = vmatprep.subr.mxu0 0.0
  %2445 = vmatpush2.msra.mxu0 0.0
  %2446 = vmatprep.subr.mxu0 0.0
  %2447 = vmatpush2.msra.mxu0 0.0
  %2448 = vmatprep.subr.mxu0 0.0
  %2449 = vmatpush2.msra.mxu0 0.0
  %2450 = vmatprep.subr.mxu0 0.0
  %2451 = vmatpush2.msra.mxu0 0.0
  %2452 = vmatprep.subr.mxu0 0.0
  %2453 = vmatpush2.msra.mxu0 0.0
  %2454 = vmatprep.subr.mxu0 0.0
  %2455 = vmatpush2.msra.mxu0 0.0
  %2456 = vmatprep.subr.mxu0 0.0
  %2457 = vmatpush2.msra.mxu0 0.0
  %2458 = vmatprep.subr.mxu0 0.0
  %2459 = vmatpush2.msra.mxu0 0.0
  %2460 = vmatprep.subr.mxu0 0.0
  %2461 = vmatpush2.msra.mxu0 0.0
  %2462 = vmatprep.subr.mxu0 0.0
  %2463 = vmatpush2.msra.mxu0 0.0
  %2464 = vmatprep.subr.mxu0 0.0
  %2465 = vmatpush2.msra.mxu0 0.0
  %2466 = vmatprep.subr.mxu0 0.0
  %2467 = vmatpush2.msra.mxu0 0.0
  %2468 = vmatprep.subr.mxu0 0.0
  %2469 = vmatpush2.msra.mxu0 0.0
  %2470 = vmatprep.subr.mxu0 0.0
  %2471 = vmatpush2.msra.mxu0 0.0
  %2472 = vmatprep.mubr.f32.mxu0 0.0
  %2473 = vmatmul.mubr.f32.gmra.mxu0 %v2220
  %v2474 = vpop.f32.mrf.mxu0
  %v2475 = vadd.f32 %v2291, %v2474
  %v2476 = vpop.f32.mrf.mxu0
  %2477 = vmatprep.mubr.f32.mxu0 0.0
  %2478 = vmatmul.mubr.f32.gmra.mxu0 %v2221
  %v2479 = vpop.f32.mrf.mxu0
  %v2480 = vadd.f32 %v2291, %v2479
  %v2481 = vpop.f32.mrf.mxu0
  %2482 = vmatprep.mubr.f32.mxu0 0.0
  %2483 = vmatmul.mubr.f32.gmra.mxu0 %v2222
  %v2484 = vpop.f32.mrf.mxu0
  %v2485 = vadd.f32 %v2291, %v2484
  %v2486 = vpop.f32.mrf.mxu0
  %2487 = vmatprep.mubr.f32.mxu0 0.0
  %2488 = vmatmul.mubr.f32.gmra.mxu0 %v2223
  %v2489 = vpop.f32.mrf.mxu0
  %v2490 = vadd.f32 %v2291, %v2489
  %v2491 = vpop.f32.mrf.mxu0
  %2492 = vmatprep.mubr.f32.mxu0 0.0
  %2493 = vmatmul.mubr.f32.gmra.mxu0 %v2224
  %v2494 = vpop.f32.mrf.mxu0
  %v2495 = vadd.f32 %v2291, %v2494
  %v2496 = vpop.f32.mrf.mxu0
  %2497 = vmatprep.mubr.f32.mxu0 0.0
  %2498 = vmatmul.mubr.f32.gmra.mxu0 %v2225
  %v2499 = vpop.f32.mrf.mxu0
  %v2500 = vadd.f32 %v2291, %v2499
  %v2501 = vpop.f32.mrf.mxu0
  %2502 = vmatprep.mubr.f32.mxu0 0.0
  %2503 = vmatmul.mubr.f32.gmra.mxu0 %v2226
  %v2504 = vpop.f32.mrf.mxu0
  %v2505 = vadd.f32 %v2291, %v2504
  %v2506 = vpop.f32.mrf.mxu0
  %2507 = vmatprep.mubr.f32.mxu0 0.0
  %2508 = vmatmul.mubr.f32.gmra.mxu0 %v2227
  %v2509 = vpop.f32.mrf.mxu0
  %v2510 = vadd.f32 %v2291, %v2509
  %v2511 = vpop.f32.mrf.mxu0
  %2512 = vdwg.mxu0
  %2513 = vst [vmem:[#allocation3] sm:$0xff] %v2362
  %2514 = vst [vmem:[#allocation3 + $0x8] sm:$0xff] %v2364
  %2515 = vst [vmem:[#allocation3 + $0x10] sm:$0xff] %v2475
  %2516 = vst [vmem:[#allocation3 + $0x18] sm:$0xff] %v2368
  %2517 = vst [vmem:[#allocation3 + $0x20] sm:$0xff] %v2370
  %2518 = vst [vmem:[#allocation3 + $0x28] sm:$0xff] %v2480
  %2519 = vst [vmem:[#allocation3 + $0x30] sm:$0xff] %v2374
  %2520 = vst [vmem:[#allocation3 + $0x38] sm:$0xff] %v2376
  %2521 = vst [vmem:[#allocation3 + $0x40] sm:$0xff] %v2485
  %2522 = vst [vmem:[#allocation3 + $0x48] sm:$0xff] %v2380
  %2523 = vst [vmem:[#allocation3 + $0x50] sm:$0xff] %v2382
  %2524 = vst [vmem:[#allocation3 + $0x58] sm:$0xff] %v2490
  %2525 = vst [vmem:[#allocation3 + $0x60] sm:$0xff] %v2386
  %2526 = vst [vmem:[#allocation3 + $0x68] sm:$0xff] %v2388
  %2527 = vst [vmem:[#allocation3 + $0x70] sm:$0xff] %v2495
  %2528 = vst [vmem:[#allocation3 + $0x78] sm:$0xff] %v2392
  %2529 = vst [vmem:[#allocation3 + $0x80] sm:$0xff] %v2394
  %2530 = vst [vmem:[#allocation3 + $0x88] sm:$0xff] %v2500
  %2531 = vst [vmem:[#allocation3 + $0x90] sm:$0xff] %v2398
  %2532 = vst [vmem:[#allocation3 + $0x98] sm:$0xff] %v2400
  %2533 = vst [vmem:[#allocation3 + $0xa0] sm:$0xff] %v2505
  %2534 = vst [vmem:[#allocation3 + $0xa8] sm:$0xff] %v2404
  %2535 = vst [vmem:[#allocation3 + $0xb0] sm:$0xff] %v2406
  %2536 = vst [vmem:[#allocation3 + $0xb8] sm:$0xff] %v2510
  %s2537 = scalar_lea.vmem %s2, 384
  %v2538 = vld [vmem:[%s2537] sm:$0xff]
  %v2539 = vld [vmem:[%s2537 + $0x8] sm:$0xff]
  %v2540 = vld [vmem:[%s2537 + $0x10] sm:$0xff]
  %v2541 = vld [vmem:[%s2537 + $0x18] sm:$0xff]
  %v2542 = vld [vmem:[%s2537 + $0x20] sm:$0xff]
  %v2543 = vld [vmem:[%s2537 + $0x28] sm:$0xff]
  %v2544 = vld [vmem:[%s2537 + $0x30] sm:$0xff]
  %v2545 = vld [vmem:[%s2537 + $0x38] sm:$0xff]
  %v2546 = vld [vmem:[%s2537 + $0x40] sm:$0xff]
  %v2547 = vld [vmem:[%s2537 + $0x48] sm:$0xff]
  %v2548 = vld [vmem:[%s2537 + $0x50] sm:$0xff]
  %v2549 = vld [vmem:[%s2537 + $0x58] sm:$0xff]
  %v2550 = vld [vmem:[%s2537 + $0x60] sm:$0xff]
  %v2551 = vld [vmem:[%s2537 + $0x68] sm:$0xff]
  %v2552 = vld [vmem:[%s2537 + $0x70] sm:$0xff]
  %v2553 = vld [vmem:[%s2537 + $0x78] sm:$0xff]
  %v2554 = vld [vmem:[%s2537 + $0x80] sm:$0xff]
  %v2555 = vld [vmem:[%s2537 + $0x88] sm:$0xff]
  %v2556 = vld [vmem:[%s2537 + $0x90] sm:$0xff]
  %v2557 = vld [vmem:[%s2537 + $0x98] sm:$0xff]
  %v2558 = vld [vmem:[%s2537 + $0xa0] sm:$0xff]
  %v2559 = vld [vmem:[%s2537 + $0xa8] sm:$0xff]
  %v2560 = vld [vmem:[%s2537 + $0xb0] sm:$0xff]
  %v2561 = vld [vmem:[%s2537 + $0xb8] sm:$0xff]
  %v2562 = vld [vmem:[%s2537 + $0xc0] sm:$0xff]
  %v2563 = vld [vmem:[%s2537 + $0xc8] sm:$0xff]
  %v2564 = vld [vmem:[%s2537 + $0xd0] sm:$0xff]
  %v2565 = vld [vmem:[%s2537 + $0xd8] sm:$0xff]
  %v2566 = vld [vmem:[%s2537 + $0xe0] sm:$0xff]
  %v2567 = vld [vmem:[%s2537 + $0xe8] sm:$0xff]
  %v2568 = vld [vmem:[%s2537 + $0xf0] sm:$0xff]
  %v2569 = vld [vmem:[%s2537 + $0xf8] sm:$0xff]
  %v2570 = vld [vmem:[%s2537 + $0x100] sm:$0xff]
  %v2571 = vld [vmem:[%s2537 + $0x108] sm:$0xff]
  %v2572 = vld [vmem:[%s2537 + $0x110] sm:$0xff]
  %v2573 = vld [vmem:[%s2537 + $0x118] sm:$0xff]
  %v2574 = vld [vmem:[%s2537 + $0x120] sm:$0xff]
  %v2575 = vld [vmem:[%s2537 + $0x128] sm:$0xff]
  %v2576 = vld [vmem:[%s2537 + $0x130] sm:$0xff]
  %v2577 = vld [vmem:[%s2537 + $0x138] sm:$0xff]
  %v2578 = vld [vmem:[%s2537 + $0x140] sm:$0xff]
  %v2579 = vld [vmem:[%s2537 + $0x148] sm:$0xff]
  %v2580 = vld [vmem:[%s2537 + $0x150] sm:$0xff]
  %v2581 = vld [vmem:[%s2537 + $0x158] sm:$0xff]
  %v2582 = vld [vmem:[%s2537 + $0x160] sm:$0xff]
  %v2583 = vld [vmem:[%s2537 + $0x168] sm:$0xff]
  %v2584 = vld [vmem:[%s2537 + $0x170] sm:$0xff]
  %v2585 = vld [vmem:[%s2537 + $0x178] sm:$0xff]
  %s2586 = scalar_lea.vmem %s4, 3
  %v2587 = vld [vmem:[%s2586] sm:$0x7]
  %v2589 = vlaneseq
  %v2590 = vshrl.u32 %v2589, 7
  %v2591 = vsub.s32 0, %v2590
  %v2592 = vrot.slane %v2587, %v2591
  %v2593 = vlaneseq
  %v2594 = vshrl.u32 %v2593, 7
  %v2595 = vsub.s32 1, %v2594
  %v2596 = vrot.slane %v2587, %v2595
  %v2597 = vlaneseq
  %v2598 = vshrl.u32 %v2597, 7
  %v2599 = vsub.s32 2, %v2598
  %v2600 = vrot.slane %v2587, %v2599
  %2604 = vmatprep.subr.mxu0 %v2584
  %2605 = vmatpush1.msra.mxu0 %v2583
  %2606 = vmatprep.subr.mxu0 %v2581
  %2607 = vmatpush1.msra.mxu0 %v2580
  %2608 = vmatprep.subr.mxu0 %v2578
  %2609 = vmatpush1.msra.mxu0 %v2577
  %2610 = vmatprep.subr.mxu0 %v2575
  %2611 = vmatpush1.msra.mxu0 %v2574
  %2612 = vmatprep.subr.mxu0 %v2572
  %2613 = vmatpush1.msra.mxu0 %v2571
  %2614 = vmatprep.subr.mxu0 %v2569
  %2615 = vmatpush1.msra.mxu0 %v2568
  %2616 = vmatprep.subr.mxu0 %v2566
  %2617 = vmatpush1.msra.mxu0 %v2565
  %2618 = vmatprep.subr.mxu0 %v2563
  %2619 = vmatpush1.msra.mxu0 %v2562
  %2620 = vmatprep.subr.mxu0 %v2560
  %2621 = vmatpush1.msra.mxu0 %v2559
  %2622 = vmatprep.subr.mxu0 %v2557
  %2623 = vmatpush1.msra.mxu0 %v2556
  %2624 = vmatprep.subr.mxu0 %v2554
  %2625 = vmatpush1.msra.mxu0 %v2553
  %2626 = vmatprep.subr.mxu0 %v2551
  %2627 = vmatpush1.msra.mxu0 %v2550
  %2628 = vmatprep.subr.mxu0 %v2548
  %2629 = vmatpush1.msra.mxu0 %v2547
  %2630 = vmatprep.subr.mxu0 %v2545
  %2631 = vmatpush1.msra.mxu0 %v2544
  %2632 = vmatprep.subr.mxu0 %v2542
  %2633 = vmatpush1.msra.mxu0 %v2541
  %2634 = vmatprep.subr.mxu0 %v2539
  %2635 = vmatpush1.msra.mxu0 %v2538
  %2636 = vmatprep.subr.mxu0 0.0
  %2637 = vmatpush2.msra.mxu0 0.0
  %2638 = vmatprep.subr.mxu0 0.0
  %2639 = vmatpush2.msra.mxu0 0.0
  %2640 = vmatprep.subr.mxu0 0.0
  %2641 = vmatpush2.msra.mxu0 0.0
  %2642 = vmatprep.subr.mxu0 0.0
  %2643 = vmatpush2.msra.mxu0 0.0
  %2644 = vmatprep.subr.mxu0 0.0
  %2645 = vmatpush2.msra.mxu0 0.0
  %2646 = vmatprep.subr.mxu0 0.0
  %2647 = vmatpush2.msra.mxu0 0.0
  %2648 = vmatprep.subr.mxu0 0.0
  %2649 = vmatpush2.msra.mxu0 0.0
  %2650 = vmatprep.subr.mxu0 0.0
  %2651 = vmatpush2.msra.mxu0 0.0
  %2652 = vmatprep.subr.mxu0 0.0
  %2653 = vmatpush2.msra.mxu0 0.0
  %2654 = vmatprep.subr.mxu0 0.0
  %2655 = vmatpush2.msra.mxu0 0.0
  %2656 = vmatprep.subr.mxu0 0.0
  %2657 = vmatpush2.msra.mxu0 0.0
  %2658 = vmatprep.subr.mxu0 0.0
  %2659 = vmatpush2.msra.mxu0 0.0
  %2660 = vmatprep.subr.mxu0 0.0
  %2661 = vmatpush2.msra.mxu0 0.0
  %2662 = vmatprep.subr.mxu0 0.0
  %2663 = vmatpush2.msra.mxu0 0.0
  %2664 = vmatprep.subr.mxu0 0.0
  %2665 = vmatpush2.msra.mxu0 0.0
  %2666 = vmatprep.subr.mxu0 0.0
  %2667 = vmatpush2.msra.mxu0 0.0
  %2668 = vmatprep.mubr.f32.mxu0 0.0
  %2669 = vmatmul.mubr.f32.gmra.mxu0 0.0
  %v2670 = vpop.f32.mrf.mxu0
  %v2671 = vadd.f32 %v2592, %v2670
  %v2672 = vpop.f32.mrf.mxu0
  %v2673 = vadd.f32 %v2596, %v2672
  %2674 = vdwg.mxu0
  %2675 = vmatprep.subr.mxu0 0.0
  %2676 = vmatpush1.msra.mxu0 %v2585
  %2677 = vmatprep.subr.mxu0 0.0
  %2678 = vmatpush1.msra.mxu0 %v2582
  %2679 = vmatprep.subr.mxu0 0.0
  %2680 = vmatpush1.msra.mxu0 %v2579
  %2681 = vmatprep.subr.mxu0 0.0
  %2682 = vmatpush1.msra.mxu0 %v2576
  %2683 = vmatprep.subr.mxu0 0.0
  %2684 = vmatpush1.msra.mxu0 %v2573
  %2685 = vmatprep.subr.mxu0 0.0
  %2686 = vmatpush1.msra.mxu0 %v2570
  %2687 = vmatprep.subr.mxu0 0.0
  %2688 = vmatpush1.msra.mxu0 %v2567
  %2689 = vmatprep.subr.mxu0 0.0
  %2690 = vmatpush1.msra.mxu0 %v2564
  %2691 = vmatprep.subr.mxu0 0.0
  %2692 = vmatpush1.msra.mxu0 %v2561
  %2693 = vmatprep.subr.mxu0 0.0
  %2694 = vmatpush1.msra.mxu0 %v2558
  %2695 = vmatprep.subr.mxu0 0.0
  %2696 = vmatpush1.msra.mxu0 %v2555
  %2697 = vmatprep.subr.mxu0 0.0
  %2698 = vmatpush1.msra.mxu0 %v2552
  %2699 = vmatprep.subr.mxu0 0.0
  %2700 = vmatpush1.msra.mxu0 %v2549
  %2701 = vmatprep.subr.mxu0 0.0
  %2702 = vmatpush1.msra.mxu0 %v2546
  %2703 = vmatprep.subr.mxu0 0.0
  %2704 = vmatpush1.msra.mxu0 %v2543
  %2705 = vmatprep.subr.mxu0 0.0
  %2706 = vmatpush1.msra.mxu0 %v2540
  %2707 = vmatprep.subr.mxu0 0.0
  %2708 = vmatpush2.msra.mxu0 0.0
  %2709 = vmatprep.subr.mxu0 0.0
  %2710 = vmatpush2.msra.mxu0 0.0
  %2711 = vmatprep.subr.mxu0 0.0
  %2712 = vmatpush2.msra.mxu0 0.0
  %2713 = vmatprep.subr.mxu0 0.0
  %2714 = vmatpush2.msra.mxu0 0.0
  %2715 = vmatprep.subr.mxu0 0.0
  %2716 = vmatpush2.msra.mxu0 0.0
  %2717 = vmatprep.subr.mxu0 0.0
  %2718 = vmatpush2.msra.mxu0 0.0
  %2719 = vmatprep.subr.mxu0 0.0
  %2720 = vmatpush2.msra.mxu0 0.0
  %2721 = vmatprep.subr.mxu0 0.0
  %2722 = vmatpush2.msra.mxu0 0.0
  %2723 = vmatprep.subr.mxu0 0.0
  %2724 = vmatpush2.msra.mxu0 0.0
  %2725 = vmatprep.subr.mxu0 0.0
  %2726 = vmatpush2.msra.mxu0 0.0
  %2727 = vmatprep.subr.mxu0 0.0
  %2728 = vmatpush2.msra.mxu0 0.0
  %2729 = vmatprep.subr.mxu0 0.0
  %2730 = vmatpush2.msra.mxu0 0.0
  %2731 = vmatprep.subr.mxu0 0.0
  %2732 = vmatpush2.msra.mxu0 0.0
  %2733 = vmatprep.subr.mxu0 0.0
  %2734 = vmatpush2.msra.mxu0 0.0
  %2735 = vmatprep.subr.mxu0 0.0
  %2736 = vmatpush2.msra.mxu0 0.0
  %2737 = vmatprep.subr.mxu0 0.0
  %2738 = vmatpush2.msra.mxu0 0.0
  %2739 = vmatprep.mubr.f32.mxu0 0.0
  %2740 = vmatmul.mubr.f32.gmra.mxu0 0.0
  %v2741 = vpop.f32.mrf.mxu0
  %v2742 = vadd.f32 %v2600, %v2741
  %v2743 = vpop.f32.mrf.mxu0
  %2744 = vdwg.mxu0
  %v2745 = vld [vmem:[%s549] sm:$0xff]
  %v2746 = vld [vmem:[%s549 + $0x8] sm:$0xff]
  %v2747 = vld [vmem:[%s549 + $0x10] sm:$0xff]
  %v2748 = vadd.f32 %v2745, %v2671
  %v2749 = vxor.u32 %v2748, 2147483648
  %v2750 = vmul.f32 %v2749, 1.442695
  %v2751 = vpow.pop %v2750
  %v2752 = vadd.f32 %v2751, 1.0
  %v2753 = vrcp.pop %v2752
  %v2754 = vmul.f32 1.0, %v2753
  %v2755 = vadd.f32 %v2746, %v2673
  %v2756 = vxor.u32 %v2755, 2147483648
  %v2757 = vmul.f32 %v2756, 1.442695
  %v2758 = vpow.pop %v2757
  %v2759 = vadd.f32 %v2758, 1.0
  %v2760 = vrcp.pop %v2759
  %v2761 = vmul.f32 1.0, %v2760
  %v2762 = vmul.f32 %v2754, %v2742
  %v2763 = vadd.f32 %v2747, %v2762
  %v2764 = vtanh.pop %v2763
  %v2765 = vsub.f32 1.0, %v2761
  %v2766 = vmul.f32 %v2765, %v2764
  %v2767 = vmul.f32 %v2761, 0.0
  %v2768 = vadd.f32 %v2766, %v2767
  %2769 = vst [vmem:[#allocation2] sm:$0xff] %v2768
  %v2770 = vld [vmem:[%s2537] sm:$0xff]
  %v2771 = vld [vmem:[%s2537 + $0x8] sm:$0xff]
  %v2772 = vld [vmem:[%s2537 + $0x10] sm:$0xff]
  %v2773 = vld [vmem:[%s2537 + $0x18] sm:$0xff]
  %v2774 = vld [vmem:[%s2537 + $0x20] sm:$0xff]
  %v2775 = vld [vmem:[%s2537 + $0x28] sm:$0xff]
  %v2776 = vld [vmem:[%s2537 + $0x30] sm:$0xff]
  %v2777 = vld [vmem:[%s2537 + $0x38] sm:$0xff]
  %v2778 = vld [vmem:[%s2537 + $0x40] sm:$0xff]
  %v2779 = vld [vmem:[%s2537 + $0x48] sm:$0xff]
  %v2780 = vld [vmem:[%s2537 + $0x50] sm:$0xff]
  %v2781 = vld [vmem:[%s2537 + $0x58] sm:$0xff]
  %v2782 = vld [vmem:[%s2537 + $0x60] sm:$0xff]
  %v2783 = vld [vmem:[%s2537 + $0x68] sm:$0xff]
  %v2784 = vld [vmem:[%s2537 + $0x70] sm:$0xff]
  %v2785 = vld [vmem:[%s2537 + $0x78] sm:$0xff]
  %v2786 = vld [vmem:[%s2537 + $0x80] sm:$0xff]
  %v2787 = vld [vmem:[%s2537 + $0x88] sm:$0xff]
  %v2788 = vld [vmem:[%s2537 + $0x90] sm:$0xff]
  %v2789 = vld [vmem:[%s2537 + $0x98] sm:$0xff]
  %v2790 = vld [vmem:[%s2537 + $0xa0] sm:$0xff]
  %v2791 = vld [vmem:[%s2537 + $0xa8] sm:$0xff]
  %v2792 = vld [vmem:[%s2537 + $0xb0] sm:$0xff]
  %v2793 = vld [vmem:[%s2537 + $0xb8] sm:$0xff]
  %v2794 = vld [vmem:[%s2537 + $0xc0] sm:$0xff]
  %v2795 = vld [vmem:[%s2537 + $0xc8] sm:$0xff]
  %v2796 = vld [vmem:[%s2537 + $0xd0] sm:$0xff]
  %v2797 = vld [vmem:[%s2537 + $0xd8] sm:$0xff]
  %v2798 = vld [vmem:[%s2537 + $0xe0] sm:$0xff]
  %v2799 = vld [vmem:[%s2537 + $0xe8] sm:$0xff]
  %v2800 = vld [vmem:[%s2537 + $0xf0] sm:$0xff]
  %v2801 = vld [vmem:[%s2537 + $0xf8] sm:$0xff]
  %v2802 = vld [vmem:[%s2537 + $0x100] sm:$0xff]
  %v2803 = vld [vmem:[%s2537 + $0x108] sm:$0xff]
  %v2804 = vld [vmem:[%s2537 + $0x110] sm:$0xff]
  %v2805 = vld [vmem:[%s2537 + $0x118] sm:$0xff]
  %v2806 = vld [vmem:[%s2537 + $0x120] sm:$0xff]
  %v2807 = vld [vmem:[%s2537 + $0x128] sm:$0xff]
  %v2808 = vld [vmem:[%s2537 + $0x130] sm:$0xff]
  %v2809 = vld [vmem:[%s2537 + $0x138] sm:$0xff]
  %v2810 = vld [vmem:[%s2537 + $0x140] sm:$0xff]
  %v2811 = vld [vmem:[%s2537 + $0x148] sm:$0xff]
  %v2812 = vld [vmem:[%s2537 + $0x150] sm:$0xff]
  %v2813 = vld [vmem:[%s2537 + $0x158] sm:$0xff]
  %v2814 = vld [vmem:[%s2537 + $0x160] sm:$0xff]
  %v2815 = vld [vmem:[%s2537 + $0x168] sm:$0xff]
  %v2816 = vld [vmem:[%s2537 + $0x170] sm:$0xff]
  %v2817 = vld [vmem:[%s2537 + $0x178] sm:$0xff]
  %v2818 = vld [vmem:[%s2586] sm:$0x7]
  %v2820 = vlaneseq
  %v2821 = vshrl.u32 %v2820, 7
  %v2822 = vsub.s32 0, %v2821
  %v2823 = vrot.slane %v2818, %v2822
  %v2824 = vlaneseq
  %v2825 = vshrl.u32 %v2824, 7
  %v2826 = vsub.s32 1, %v2825
  %v2827 = vrot.slane %v2818, %v2826
  %v2828 = vlaneseq
  %v2829 = vshrl.u32 %v2828, 7
  %v2830 = vsub.s32 2, %v2829
  %v2831 = vrot.slane %v2818, %v2830
  %2835 = vmatprep.subr.mxu0 %v2816
  %2836 = vmatpush1.msra.mxu0 %v2815
  %2837 = vmatprep.subr.mxu0 %v2813
  %2838 = vmatpush1.msra.mxu0 %v2812
  %2839 = vmatprep.subr.mxu0 %v2810
  %2840 = vmatpush1.msra.mxu0 %v2809
  %2841 = vmatprep.subr.mxu0 %v2807
  %2842 = vmatpush1.msra.mxu0 %v2806
  %2843 = vmatprep.subr.mxu0 %v2804
  %2844 = vmatpush1.msra.mxu0 %v2803
  %2845 = vmatprep.subr.mxu0 %v2801
  %2846 = vmatpush1.msra.mxu0 %v2800
  %2847 = vmatprep.subr.mxu0 %v2798
  %2848 = vmatpush1.msra.mxu0 %v2797
  %2849 = vmatprep.subr.mxu0 %v2795
  %2850 = vmatpush1.msra.mxu0 %v2794
  %2851 = vmatprep.subr.mxu0 %v2792
  %2852 = vmatpush1.msra.mxu0 %v2791
  %2853 = vmatprep.subr.mxu0 %v2789
  %2854 = vmatpush1.msra.mxu0 %v2788
  %2855 = vmatprep.subr.mxu0 %v2786
  %2856 = vmatpush1.msra.mxu0 %v2785
  %2857 = vmatprep.subr.mxu0 %v2783
  %2858 = vmatpush1.msra.mxu0 %v2782
  %2859 = vmatprep.subr.mxu0 %v2780
  %2860 = vmatpush1.msra.mxu0 %v2779
  %2861 = vmatprep.subr.mxu0 %v2777
  %2862 = vmatpush1.msra.mxu0 %v2776
  %2863 = vmatprep.subr.mxu0 %v2774
  %2864 = vmatpush1.msra.mxu0 %v2773
  %2865 = vmatprep.subr.mxu0 %v2771
  %2866 = vmatpush1.msra.mxu0 %v2770
  %2867 = vmatprep.subr.mxu0 0.0
  %2868 = vmatpush2.msra.mxu0 0.0
  %2869 = vmatprep.subr.mxu0 0.0
  %2870 = vmatpush2.msra.mxu0 0.0
  %2871 = vmatprep.subr.mxu0 0.0
  %2872 = vmatpush2.msra.mxu0 0.0
  %2873 = vmatprep.subr.mxu0 0.0
  %2874 = vmatpush2.msra.mxu0 0.0
  %2875 = vmatprep.subr.mxu0 0.0
  %2876 = vmatpush2.msra.mxu0 0.0
  %2877 = vmatprep.subr.mxu0 0.0
  %2878 = vmatpush2.msra.mxu0 0.0
  %2879 = vmatprep.subr.mxu0 0.0
  %2880 = vmatpush2.msra.mxu0 0.0
  %2881 = vmatprep.subr.mxu0 0.0
  %2882 = vmatpush2.msra.mxu0 0.0
  %2883 = vmatprep.subr.mxu0 0.0
  %2884 = vmatpush2.msra.mxu0 0.0
  %2885 = vmatprep.subr.mxu0 0.0
  %2886 = vmatpush2.msra.mxu0 0.0
  %2887 = vmatprep.subr.mxu0 0.0
  %2888 = vmatpush2.msra.mxu0 0.0
  %2889 = vmatprep.subr.mxu0 0.0
  %2890 = vmatpush2.msra.mxu0 0.0
  %2891 = vmatprep.subr.mxu0 0.0
  %2892 = vmatpush2.msra.mxu0 0.0
  %2893 = vmatprep.subr.mxu0 0.0
  %2894 = vmatpush2.msra.mxu0 0.0
  %2895 = vmatprep.subr.mxu0 0.0
  %2896 = vmatpush2.msra.mxu0 0.0
  %2897 = vmatprep.subr.mxu0 0.0
  %2898 = vmatpush2.msra.mxu0 0.0
  %2899 = vmatprep.mubr.f32.mxu0 0.0
  %2900 = vmatmul.mubr.f32.gmra.mxu0 %v2768
  %v2901 = vpop.f32.mrf.mxu0
  %v2902 = vadd.f32 %v2823, %v2901
  %v2903 = vpop.f32.mrf.mxu0
  %v2904 = vadd.f32 %v2827, %v2903
  %2905 = vdwg.mxu0
  %2906 = vmatprep.subr.mxu0 0.0
  %2907 = vmatpush1.msra.mxu0 %v2817
  %2908 = vmatprep.subr.mxu0 0.0
  %2909 = vmatpush1.msra.mxu0 %v2814
  %2910 = vmatprep.subr.mxu0 0.0
  %2911 = vmatpush1.msra.mxu0 %v2811
  %2912 = vmatprep.subr.mxu0 0.0
  %2913 = vmatpush1.msra.mxu0 %v2808
  %2914 = vmatprep.subr.mxu0 0.0
  %2915 = vmatpush1.msra.mxu0 %v2805
  %2916 = vmatprep.subr.mxu0 0.0
  %2917 = vmatpush1.msra.mxu0 %v2802
  %2918 = vmatprep.subr.mxu0 0.0
  %2919 = vmatpush1.msra.mxu0 %v2799
  %2920 = vmatprep.subr.mxu0 0.0
  %2921 = vmatpush1.msra.mxu0 %v2796
  %2922 = vmatprep.subr.mxu0 0.0
  %2923 = vmatpush1.msra.mxu0 %v2793
  %2924 = vmatprep.subr.mxu0 0.0
  %2925 = vmatpush1.msra.mxu0 %v2790
  %2926 = vmatprep.subr.mxu0 0.0
  %2927 = vmatpush1.msra.mxu0 %v2787
  %2928 = vmatprep.subr.mxu0 0.0
  %2929 = vmatpush1.msra.mxu0 %v2784
  %2930 = vmatprep.subr.mxu0 0.0
  %2931 = vmatpush1.msra.mxu0 %v2781
  %2932 = vmatprep.subr.mxu0 0.0
  %2933 = vmatpush1.msra.mxu0 %v2778
  %2934 = vmatprep.subr.mxu0 0.0
  %2935 = vmatpush1.msra.mxu0 %v2775
  %2936 = vmatprep.subr.mxu0 0.0
  %2937 = vmatpush1.msra.mxu0 %v2772
  %2938 = vmatprep.subr.mxu0 0.0
  %2939 = vmatpush2.msra.mxu0 0.0
  %2940 = vmatprep.subr.mxu0 0.0
  %2941 = vmatpush2.msra.mxu0 0.0
  %2942 = vmatprep.subr.mxu0 0.0
  %2943 = vmatpush2.msra.mxu0 0.0
  %2944 = vmatprep.subr.mxu0 0.0
  %2945 = vmatpush2.msra.mxu0 0.0
  %2946 = vmatprep.subr.mxu0 0.0
  %2947 = vmatpush2.msra.mxu0 0.0
  %2948 = vmatprep.subr.mxu0 0.0
  %2949 = vmatpush2.msra.mxu0 0.0
  %2950 = vmatprep.subr.mxu0 0.0
  %2951 = vmatpush2.msra.mxu0 0.0
  %2952 = vmatprep.subr.mxu0 0.0
  %2953 = vmatpush2.msra.mxu0 0.0
  %2954 = vmatprep.subr.mxu0 0.0
  %2955 = vmatpush2.msra.mxu0 0.0
  %2956 = vmatprep.subr.mxu0 0.0
  %2957 = vmatpush2.msra.mxu0 0.0
  %2958 = vmatprep.subr.mxu0 0.0
  %2959 = vmatpush2.msra.mxu0 0.0
  %2960 = vmatprep.subr.mxu0 0.0
  %2961 = vmatpush2.msra.mxu0 0.0
  %2962 = vmatprep.subr.mxu0 0.0
  %2963 = vmatpush2.msra.mxu0 0.0
  %2964 = vmatprep.subr.mxu0 0.0
  %2965 = vmatpush2.msra.mxu0 0.0
  %2966 = vmatprep.subr.mxu0 0.0
  %2967 = vmatpush2.msra.mxu0 0.0
  %2968 = vmatprep.subr.mxu0 0.0
  %2969 = vmatpush2.msra.mxu0 0.0
  %2970 = vmatprep.mubr.f32.mxu0 0.0
  %2971 = vmatmul.mubr.f32.gmra.mxu0 %v2768
  %v2972 = vpop.f32.mrf.mxu0
  %v2973 = vadd.f32 %v2831, %v2972
  %v2974 = vpop.f32.mrf.mxu0
  %2975 = vdwg.mxu0
  %v2976 = vld [vmem:[%s783] sm:$0xff]
  %v2977 = vld [vmem:[%s783 + $0x8] sm:$0xff]
  %v2978 = vld [vmem:[%s783 + $0x10] sm:$0xff]
  %v2979 = vadd.f32 %v2976, %v2902
  %v2980 = vxor.u32 %v2979, 2147483648
  %v2981 = vmul.f32 %v2980, 1.442695
  %v2982 = vpow.pop %v2981
  %v2983 = vadd.f32 %v2982, 1.0
  %v2984 = vrcp.pop %v2983
  %v2985 = vmul.f32 1.0, %v2984
  %v2986 = vadd.f32 %v2977, %v2904
  %v2987 = vxor.u32 %v2986, 2147483648
  %v2988 = vmul.f32 %v2987, 1.442695
  %v2989 = vpow.pop %v2988
  %v2990 = vadd.f32 %v2989, 1.0
  %v2991 = vrcp.pop %v2990
  %v2992 = vmul.f32 1.0, %v2991
  %v2993 = vmul.f32 %v2985, %v2973
  %v2994 = vadd.f32 %v2978, %v2993
  %v2995 = vtanh.pop %v2994
  %v2996 = vsub.f32 1.0, %v2992
  %v2997 = vmul.f32 %v2996, %v2995
  %v2998 = vmul.f32 %v2992, %v2768
  %v2999 = vadd.f32 %v2997, %v2998
  %3000 = vst [vmem:[%s808] sm:$0xff] %v2999
  %v3001 = vld [vmem:[%s2537] sm:$0xff]
  %v3002 = vld [vmem:[%s2537 + $0x8] sm:$0xff]
  %v3003 = vld [vmem:[%s2537 + $0x10] sm:$0xff]
  %v3004 = vld [vmem:[%s2537 + $0x18] sm:$0xff]
  %v3005 = vld [vmem:[%s2537 + $0x20] sm:$0xff]
  %v3006 = vld [vmem:[%s2537 + $0x28] sm:$0xff]
  %v3007 = vld [vmem:[%s2537 + $0x30] sm:$0xff]
  %v3008 = vld [vmem:[%s2537 + $0x38] sm:$0xff]
  %v3009 = vld [vmem:[%s2537 + $0x40] sm:$0xff]
  %v3010 = vld [vmem:[%s2537 + $0x48] sm:$0xff]
  %v3011 = vld [vmem:[%s2537 + $0x50] sm:$0xff]
  %v3012 = vld [vmem:[%s2537 + $0x58] sm:$0xff]
  %v3013 = vld [vmem:[%s2537 + $0x60] sm:$0xff]
  %v3014 = vld [vmem:[%s2537 + $0x68] sm:$0xff]
  %v3015 = vld [vmem:[%s2537 + $0x70] sm:$0xff]
  %v3016 = vld [vmem:[%s2537 + $0x78] sm:$0xff]
  %v3017 = vld [vmem:[%s2537 + $0x80] sm:$0xff]
  %v3018 = vld [vmem:[%s2537 + $0x88] sm:$0xff]
  %v3019 = vld [vmem:[%s2537 + $0x90] sm:$0xff]
  %v3020 = vld [vmem:[%s2537 + $0x98] sm:$0xff]
  %v3021 = vld [vmem:[%s2537 + $0xa0] sm:$0xff]
  %v3022 = vld [vmem:[%s2537 + $0xa8] sm:$0xff]
  %v3023 = vld [vmem:[%s2537 + $0xb0] sm:$0xff]
  %v3024 = vld [vmem:[%s2537 + $0xb8] sm:$0xff]
  %v3025 = vld [vmem:[%s2537 + $0xc0] sm:$0xff]
  %v3026 = vld [vmem:[%s2537 + $0xc8] sm:$0xff]
  %v3027 = vld [vmem:[%s2537 + $0xd0] sm:$0xff]
  %v3028 = vld [vmem:[%s2537 + $0xd8] sm:$0xff]
  %v3029 = vld [vmem:[%s2537 + $0xe0] sm:$0xff]
  %v3030 = vld [vmem:[%s2537 + $0xe8] sm:$0xff]
  %v3031 = vld [vmem:[%s2537 + $0xf0] sm:$0xff]
  %v3032 = vld [vmem:[%s2537 + $0xf8] sm:$0xff]
  %v3033 = vld [vmem:[%s2537 + $0x100] sm:$0xff]
  %v3034 = vld [vmem:[%s2537 + $0x108] sm:$0xff]
  %v3035 = vld [vmem:[%s2537 + $0x110] sm:$0xff]
  %v3036 = vld [vmem:[%s2537 + $0x118] sm:$0xff]
  %v3037 = vld [vmem:[%s2537 + $0x120] sm:$0xff]
  %v3038 = vld [vmem:[%s2537 + $0x128] sm:$0xff]
  %v3039 = vld [vmem:[%s2537 + $0x130] sm:$0xff]
  %v3040 = vld [vmem:[%s2537 + $0x138] sm:$0xff]
  %v3041 = vld [vmem:[%s2537 + $0x140] sm:$0xff]
  %v3042 = vld [vmem:[%s2537 + $0x148] sm:$0xff]
  %v3043 = vld [vmem:[%s2537 + $0x150] sm:$0xff]
  %v3044 = vld [vmem:[%s2537 + $0x158] sm:$0xff]
  %v3045 = vld [vmem:[%s2537 + $0x160] sm:$0xff]
  %v3046 = vld [vmem:[%s2537 + $0x168] sm:$0xff]
  %v3047 = vld [vmem:[%s2537 + $0x170] sm:$0xff]
  %v3048 = vld [vmem:[%s2537 + $0x178] sm:$0xff]
  %v3049 = vld [vmem:[%s2586] sm:$0x7]
  %v3051 = vlaneseq
  %v3052 = vshrl.u32 %v3051, 7
  %v3053 = vsub.s32 0, %v3052
  %v3054 = vrot.slane %v3049, %v3053
  %v3055 = vlaneseq
  %v3056 = vshrl.u32 %v3055, 7
  %v3057 = vsub.s32 1, %v3056
  %v3058 = vrot.slane %v3049, %v3057
  %v3059 = vlaneseq
  %v3060 = vshrl.u32 %v3059, 7
  %v3061 = vsub.s32 2, %v3060
  %v3062 = vrot.slane %v3049, %v3061
  %3066 = vmatprep.subr.mxu0 %v3047
  %3067 = vmatpush1.msra.mxu0 %v3046
  %3068 = vmatprep.subr.mxu0 %v3044
  %3069 = vmatpush1.msra.mxu0 %v3043
  %3070 = vmatprep.subr.mxu0 %v3041
  %3071 = vmatpush1.msra.mxu0 %v3040
  %3072 = vmatprep.subr.mxu0 %v3038
  %3073 = vmatpush1.msra.mxu0 %v3037
  %3074 = vmatprep.subr.mxu0 %v3035
  %3075 = vmatpush1.msra.mxu0 %v3034
  %3076 = vmatprep.subr.mxu0 %v3032
  %3077 = vmatpush1.msra.mxu0 %v3031
  %3078 = vmatprep.subr.mxu0 %v3029
  %3079 = vmatpush1.msra.mxu0 %v3028
  %3080 = vmatprep.subr.mxu0 %v3026
  %3081 = vmatpush1.msra.mxu0 %v3025
  %3082 = vmatprep.subr.mxu0 %v3023
  %3083 = vmatpush1.msra.mxu0 %v3022
  %3084 = vmatprep.subr.mxu0 %v3020
  %3085 = vmatpush1.msra.mxu0 %v3019
  %3086 = vmatprep.subr.mxu0 %v3017
  %3087 = vmatpush1.msra.mxu0 %v3016
  %3088 = vmatprep.subr.mxu0 %v3014
  %3089 = vmatpush1.msra.mxu0 %v3013
  %3090 = vmatprep.subr.mxu0 %v3011
  %3091 = vmatpush1.msra.mxu0 %v3010
  %3092 = vmatprep.subr.mxu0 %v3008
  %3093 = vmatpush1.msra.mxu0 %v3007
  %3094 = vmatprep.subr.mxu0 %v3005
  %3095 = vmatpush1.msra.mxu0 %v3004
  %3096 = vmatprep.subr.mxu0 %v3002
  %3097 = vmatpush1.msra.mxu0 %v3001
  %3098 = vmatprep.subr.mxu0 0.0
  %3099 = vmatpush2.msra.mxu0 0.0
  %3100 = vmatprep.subr.mxu0 0.0
  %3101 = vmatpush2.msra.mxu0 0.0
  %3102 = vmatprep.subr.mxu0 0.0
  %3103 = vmatpush2.msra.mxu0 0.0
  %3104 = vmatprep.subr.mxu0 0.0
  %3105 = vmatpush2.msra.mxu0 0.0
  %3106 = vmatprep.subr.mxu0 0.0
  %3107 = vmatpush2.msra.mxu0 0.0
  %3108 = vmatprep.subr.mxu0 0.0
  %3109 = vmatpush2.msra.mxu0 0.0
  %3110 = vmatprep.subr.mxu0 0.0
  %3111 = vmatpush2.msra.mxu0 0.0
  %3112 = vmatprep.subr.mxu0 0.0
  %3113 = vmatpush2.msra.mxu0 0.0
  %3114 = vmatprep.subr.mxu0 0.0
  %3115 = vmatpush2.msra.mxu0 0.0
  %3116 = vmatprep.subr.mxu0 0.0
  %3117 = vmatpush2.msra.mxu0 0.0
  %3118 = vmatprep.subr.mxu0 0.0
  %3119 = vmatpush2.msra.mxu0 0.0
  %3120 = vmatprep.subr.mxu0 0.0
  %3121 = vmatpush2.msra.mxu0 0.0
  %3122 = vmatprep.subr.mxu0 0.0
  %3123 = vmatpush2.msra.mxu0 0.0
  %3124 = vmatprep.subr.mxu0 0.0
  %3125 = vmatpush2.msra.mxu0 0.0
  %3126 = vmatprep.subr.mxu0 0.0
  %3127 = vmatpush2.msra.mxu0 0.0
  %3128 = vmatprep.subr.mxu0 0.0
  %3129 = vmatpush2.msra.mxu0 0.0
  %3130 = vmatprep.mubr.f32.mxu0 0.0
  %3131 = vmatmul.mubr.f32.gmra.mxu0 %v2999
  %v3132 = vpop.f32.mrf.mxu0
  %v3133 = vadd.f32 %v3054, %v3132
  %v3134 = vpop.f32.mrf.mxu0
  %v3135 = vadd.f32 %v3058, %v3134
  %3136 = vdwg.mxu0
  %3137 = vmatprep.subr.mxu0 0.0
  %3138 = vmatpush1.msra.mxu0 %v3048
  %3139 = vmatprep.subr.mxu0 0.0
  %3140 = vmatpush1.msra.mxu0 %v3045
  %3141 = vmatprep.subr.mxu0 0.0
  %3142 = vmatpush1.msra.mxu0 %v3042
  %3143 = vmatprep.subr.mxu0 0.0
  %3144 = vmatpush1.msra.mxu0 %v3039
  %3145 = vmatprep.subr.mxu0 0.0
  %3146 = vmatpush1.msra.mxu0 %v3036
  %3147 = vmatprep.subr.mxu0 0.0
  %3148 = vmatpush1.msra.mxu0 %v3033
  %3149 = vmatprep.subr.mxu0 0.0
  %3150 = vmatpush1.msra.mxu0 %v3030
  %3151 = vmatprep.subr.mxu0 0.0
  %3152 = vmatpush1.msra.mxu0 %v3027
  %3153 = vmatprep.subr.mxu0 0.0
  %3154 = vmatpush1.msra.mxu0 %v3024
  %3155 = vmatprep.subr.mxu0 0.0
  %3156 = vmatpush1.msra.mxu0 %v3021
  %3157 = vmatprep.subr.mxu0 0.0
  %3158 = vmatpush1.msra.mxu0 %v3018
  %3159 = vmatprep.subr.mxu0 0.0
  %3160 = vmatpush1.msra.mxu0 %v3015
  %3161 = vmatprep.subr.mxu0 0.0
  %3162 = vmatpush1.msra.mxu0 %v3012
  %3163 = vmatprep.subr.mxu0 0.0
  %3164 = vmatpush1.msra.mxu0 %v3009
  %3165 = vmatprep.subr.mxu0 0.0
  %3166 = vmatpush1.msra.mxu0 %v3006
  %3167 = vmatprep.subr.mxu0 0.0
  %3168 = vmatpush1.msra.mxu0 %v3003
  %3169 = vmatprep.subr.mxu0 0.0
  %3170 = vmatpush2.msra.mxu0 0.0
  %3171 = vmatprep.subr.mxu0 0.0
  %3172 = vmatpush2.msra.mxu0 0.0
  %3173 = vmatprep.subr.mxu0 0.0
  %3174 = vmatpush2.msra.mxu0 0.0
  %3175 = vmatprep.subr.mxu0 0.0
  %3176 = vmatpush2.msra.mxu0 0.0
  %3177 = vmatprep.subr.mxu0 0.0
  %3178 = vmatpush2.msra.mxu0 0.0
  %3179 = vmatprep.subr.mxu0 0.0
  %3180 = vmatpush2.msra.mxu0 0.0
  %3181 = vmatprep.subr.mxu0 0.0
  %3182 = vmatpush2.msra.mxu0 0.0
  %3183 = vmatprep.subr.mxu0 0.0
  %3184 = vmatpush2.msra.mxu0 0.0
  %3185 = vmatprep.subr.mxu0 0.0
  %3186 = vmatpush2.msra.mxu0 0.0
  %3187 = vmatprep.subr.mxu0 0.0
  %3188 = vmatpush2.msra.mxu0 0.0
  %3189 = vmatprep.subr.mxu0 0.0
  %3190 = vmatpush2.msra.mxu0 0.0
  %3191 = vmatprep.subr.mxu0 0.0
  %3192 = vmatpush2.msra.mxu0 0.0
  %3193 = vmatprep.subr.mxu0 0.0
  %3194 = vmatpush2.msra.mxu0 0.0
  %3195 = vmatprep.subr.mxu0 0.0
  %3196 = vmatpush2.msra.mxu0 0.0
  %3197 = vmatprep.subr.mxu0 0.0
  %3198 = vmatpush2.msra.mxu0 0.0
  %3199 = vmatprep.subr.mxu0 0.0
  %3200 = vmatpush2.msra.mxu0 0.0
  %3201 = vmatprep.mubr.f32.mxu0 0.0
  %3202 = vmatmul.mubr.f32.gmra.mxu0 %v2999
  %v3203 = vpop.f32.mrf.mxu0
  %v3204 = vadd.f32 %v3062, %v3203
  %v3205 = vpop.f32.mrf.mxu0
  %3206 = vdwg.mxu0
  %v3207 = vld [vmem:[%s1018] sm:$0xff]
  %v3208 = vld [vmem:[%s1018 + $0x8] sm:$0xff]
  %v3209 = vld [vmem:[%s1018 + $0x10] sm:$0xff]
  %v3210 = vadd.f32 %v3207, %v3133
  %v3211 = vxor.u32 %v3210, 2147483648
  %v3212 = vmul.f32 %v3211, 1.442695
  %v3213 = vpow.pop %v3212
  %v3214 = vadd.f32 %v3213, 1.0
  %v3215 = vrcp.pop %v3214
  %v3216 = vmul.f32 1.0, %v3215
  %v3217 = vadd.f32 %v3208, %v3135
  %v3218 = vxor.u32 %v3217, 2147483648
  %v3219 = vmul.f32 %v3218, 1.442695
  %v3220 = vpow.pop %v3219
  %v3221 = vadd.f32 %v3220, 1.0
  %v3222 = vrcp.pop %v3221
  %v3223 = vmul.f32 1.0, %v3222
  %v3224 = vmul.f32 %v3216, %v3204
  %v3225 = vadd.f32 %v3209, %v3224
  %v3226 = vtanh.pop %v3225
  %v3227 = vsub.f32 1.0, %v3223
  %v3228 = vmul.f32 %v3227, %v3226
  %v3229 = vmul.f32 %v3223, %v2999
  %v3230 = vadd.f32 %v3228, %v3229
  %3231 = vst [vmem:[%s1043] sm:$0xff] %v3230
  %v3232 = vld [vmem:[%s2537] sm:$0xff]
  %v3233 = vld [vmem:[%s2537 + $0x8] sm:$0xff]
  %v3234 = vld [vmem:[%s2537 + $0x10] sm:$0xff]
  %v3235 = vld [vmem:[%s2537 + $0x18] sm:$0xff]
  %v3236 = vld [vmem:[%s2537 + $0x20] sm:$0xff]
  %v3237 = vld [vmem:[%s2537 + $0x28] sm:$0xff]
  %v3238 = vld [vmem:[%s2537 + $0x30] sm:$0xff]
  %v3239 = vld [vmem:[%s2537 + $0x38] sm:$0xff]
  %v3240 = vld [vmem:[%s2537 + $0x40] sm:$0xff]
  %v3241 = vld [vmem:[%s2537 + $0x48] sm:$0xff]
  %v3242 = vld [vmem:[%s2537 + $0x50] sm:$0xff]
  %v3243 = vld [vmem:[%s2537 + $0x58] sm:$0xff]
  %v3244 = vld [vmem:[%s2537 + $0x60] sm:$0xff]
  %v3245 = vld [vmem:[%s2537 + $0x68] sm:$0xff]
  %v3246 = vld [vmem:[%s2537 + $0x70] sm:$0xff]
  %v3247 = vld [vmem:[%s2537 + $0x78] sm:$0xff]
  %v3248 = vld [vmem:[%s2537 + $0x80] sm:$0xff]
  %v3249 = vld [vmem:[%s2537 + $0x88] sm:$0xff]
  %v3250 = vld [vmem:[%s2537 + $0x90] sm:$0xff]
  %v3251 = vld [vmem:[%s2537 + $0x98] sm:$0xff]
  %v3252 = vld [vmem:[%s2537 + $0xa0] sm:$0xff]
  %v3253 = vld [vmem:[%s2537 + $0xa8] sm:$0xff]
  %v3254 = vld [vmem:[%s2537 + $0xb0] sm:$0xff]
  %v3255 = vld [vmem:[%s2537 + $0xb8] sm:$0xff]
  %v3256 = vld [vmem:[%s2537 + $0xc0] sm:$0xff]
  %v3257 = vld [vmem:[%s2537 + $0xc8] sm:$0xff]
  %v3258 = vld [vmem:[%s2537 + $0xd0] sm:$0xff]
  %v3259 = vld [vmem:[%s2537 + $0xd8] sm:$0xff]
  %v3260 = vld [vmem:[%s2537 + $0xe0] sm:$0xff]
  %v3261 = vld [vmem:[%s2537 + $0xe8] sm:$0xff]
  %v3262 = vld [vmem:[%s2537 + $0xf0] sm:$0xff]
  %v3263 = vld [vmem:[%s2537 + $0xf8] sm:$0xff]
  %v3264 = vld [vmem:[%s2537 + $0x100] sm:$0xff]
  %v3265 = vld [vmem:[%s2537 + $0x108] sm:$0xff]
  %v3266 = vld [vmem:[%s2537 + $0x110] sm:$0xff]
  %v3267 = vld [vmem:[%s2537 + $0x118] sm:$0xff]
  %v3268 = vld [vmem:[%s2537 + $0x120] sm:$0xff]
  %v3269 = vld [vmem:[%s2537 + $0x128] sm:$0xff]
  %v3270 = vld [vmem:[%s2537 + $0x130] sm:$0xff]
  %v3271 = vld [vmem:[%s2537 + $0x138] sm:$0xff]
  %v3272 = vld [vmem:[%s2537 + $0x140] sm:$0xff]
  %v3273 = vld [vmem:[%s2537 + $0x148] sm:$0xff]
  %v3274 = vld [vmem:[%s2537 + $0x150] sm:$0xff]
  %v3275 = vld [vmem:[%s2537 + $0x158] sm:$0xff]
  %v3276 = vld [vmem:[%s2537 + $0x160] sm:$0xff]
  %v3277 = vld [vmem:[%s2537 + $0x168] sm:$0xff]
  %v3278 = vld [vmem:[%s2537 + $0x170] sm:$0xff]
  %v3279 = vld [vmem:[%s2537 + $0x178] sm:$0xff]
  %v3280 = vld [vmem:[%s2586] sm:$0x7]
  %v3282 = vlaneseq
  %v3283 = vshrl.u32 %v3282, 7
  %v3284 = vsub.s32 0, %v3283
  %v3285 = vrot.slane %v3280, %v3284
  %v3286 = vlaneseq
  %v3287 = vshrl.u32 %v3286, 7
  %v3288 = vsub.s32 1, %v3287
  %v3289 = vrot.slane %v3280, %v3288
  %v3290 = vlaneseq
  %v3291 = vshrl.u32 %v3290, 7
  %v3292 = vsub.s32 2, %v3291
  %v3293 = vrot.slane %v3280, %v3292
  %3297 = vmatprep.subr.mxu0 %v3278
  %3298 = vmatpush1.msra.mxu0 %v3277
  %3299 = vmatprep.subr.mxu0 %v3275
  %3300 = vmatpush1.msra.mxu0 %v3274
  %3301 = vmatprep.subr.mxu0 %v3272
  %3302 = vmatpush1.msra.mxu0 %v3271
  %3303 = vmatprep.subr.mxu0 %v3269
  %3304 = vmatpush1.msra.mxu0 %v3268
  %3305 = vmatprep.subr.mxu0 %v3266
  %3306 = vmatpush1.msra.mxu0 %v3265
  %3307 = vmatprep.subr.mxu0 %v3263
  %3308 = vmatpush1.msra.mxu0 %v3262
  %3309 = vmatprep.subr.mxu0 %v3260
  %3310 = vmatpush1.msra.mxu0 %v3259
  %3311 = vmatprep.subr.mxu0 %v3257
  %3312 = vmatpush1.msra.mxu0 %v3256
  %3313 = vmatprep.subr.mxu0 %v3254
  %3314 = vmatpush1.msra.mxu0 %v3253
  %3315 = vmatprep.subr.mxu0 %v3251
  %3316 = vmatpush1.msra.mxu0 %v3250
  %3317 = vmatprep.subr.mxu0 %v3248
  %3318 = vmatpush1.msra.mxu0 %v3247
  %3319 = vmatprep.subr.mxu0 %v3245
  %3320 = vmatpush1.msra.mxu0 %v3244
  %3321 = vmatprep.subr.mxu0 %v3242
  %3322 = vmatpush1.msra.mxu0 %v3241
  %3323 = vmatprep.subr.mxu0 %v3239
  %3324 = vmatpush1.msra.mxu0 %v3238
  %3325 = vmatprep.subr.mxu0 %v3236
  %3326 = vmatpush1.msra.mxu0 %v3235
  %3327 = vmatprep.subr.mxu0 %v3233
  %3328 = vmatpush1.msra.mxu0 %v3232
  %3329 = vmatprep.subr.mxu0 0.0
  %3330 = vmatpush2.msra.mxu0 0.0
  %3331 = vmatprep.subr.mxu0 0.0
  %3332 = vmatpush2.msra.mxu0 0.0
  %3333 = vmatprep.subr.mxu0 0.0
  %3334 = vmatpush2.msra.mxu0 0.0
  %3335 = vmatprep.subr.mxu0 0.0
  %3336 = vmatpush2.msra.mxu0 0.0
  %3337 = vmatprep.subr.mxu0 0.0
  %3338 = vmatpush2.msra.mxu0 0.0
  %3339 = vmatprep.subr.mxu0 0.0
  %3340 = vmatpush2.msra.mxu0 0.0
  %3341 = vmatprep.subr.mxu0 0.0
  %3342 = vmatpush2.msra.mxu0 0.0
  %3343 = vmatprep.subr.mxu0 0.0
  %3344 = vmatpush2.msra.mxu0 0.0
  %3345 = vmatprep.subr.mxu0 0.0
  %3346 = vmatpush2.msra.mxu0 0.0
  %3347 = vmatprep.subr.mxu0 0.0
  %3348 = vmatpush2.msra.mxu0 0.0
  %3349 = vmatprep.subr.mxu0 0.0
  %3350 = vmatpush2.msra.mxu0 0.0
  %3351 = vmatprep.subr.mxu0 0.0
  %3352 = vmatpush2.msra.mxu0 0.0
  %3353 = vmatprep.subr.mxu0 0.0
  %3354 = vmatpush2.msra.mxu0 0.0
  %3355 = vmatprep.subr.mxu0 0.0
  %3356 = vmatpush2.msra.mxu0 0.0
  %3357 = vmatprep.subr.mxu0 0.0
  %3358 = vmatpush2.msra.mxu0 0.0
  %3359 = vmatprep.subr.mxu0 0.0
  %3360 = vmatpush2.msra.mxu0 0.0
  %3361 = vmatprep.mubr.f32.mxu0 0.0
  %3362 = vmatmul.mubr.f32.gmra.mxu0 %v3230
  %v3363 = vpop.f32.mrf.mxu0
  %v3364 = vadd.f32 %v3285, %v3363
  %v3365 = vpop.f32.mrf.mxu0
  %v3366 = vadd.f32 %v3289, %v3365
  %3367 = vdwg.mxu0
  %3368 = vmatprep.subr.mxu0 0.0
  %3369 = vmatpush1.msra.mxu0 %v3279
  %3370 = vmatprep.subr.mxu0 0.0
  %3371 = vmatpush1.msra.mxu0 %v3276
  %3372 = vmatprep.subr.mxu0 0.0
  %3373 = vmatpush1.msra.mxu0 %v3273
  %3374 = vmatprep.subr.mxu0 0.0
  %3375 = vmatpush1.msra.mxu0 %v3270
  %3376 = vmatprep.subr.mxu0 0.0
  %3377 = vmatpush1.msra.mxu0 %v3267
  %3378 = vmatprep.subr.mxu0 0.0
  %3379 = vmatpush1.msra.mxu0 %v3264
  %3380 = vmatprep.subr.mxu0 0.0
  %3381 = vmatpush1.msra.mxu0 %v3261
  %3382 = vmatprep.subr.mxu0 0.0
  %3383 = vmatpush1.msra.mxu0 %v3258
  %3384 = vmatprep.subr.mxu0 0.0
  %3385 = vmatpush1.msra.mxu0 %v3255
  %3386 = vmatprep.subr.mxu0 0.0
  %3387 = vmatpush1.msra.mxu0 %v3252
  %3388 = vmatprep.subr.mxu0 0.0
  %3389 = vmatpush1.msra.mxu0 %v3249
  %3390 = vmatprep.subr.mxu0 0.0
  %3391 = vmatpush1.msra.mxu0 %v3246
  %3392 = vmatprep.subr.mxu0 0.0
  %3393 = vmatpush1.msra.mxu0 %v3243
  %3394 = vmatprep.subr.mxu0 0.0
  %3395 = vmatpush1.msra.mxu0 %v3240
  %3396 = vmatprep.subr.mxu0 0.0
  %3397 = vmatpush1.msra.mxu0 %v3237
  %3398 = vmatprep.subr.mxu0 0.0
  %3399 = vmatpush1.msra.mxu0 %v3234
  %3400 = vmatprep.subr.mxu0 0.0
  %3401 = vmatpush2.msra.mxu0 0.0
  %3402 = vmatprep.subr.mxu0 0.0
  %3403 = vmatpush2.msra.mxu0 0.0
  %3404 = vmatprep.subr.mxu0 0.0
  %3405 = vmatpush2.msra.mxu0 0.0
  %3406 = vmatprep.subr.mxu0 0.0
  %3407 = vmatpush2.msra.mxu0 0.0
  %3408 = vmatprep.subr.mxu0 0.0
  %3409 = vmatpush2.msra.mxu0 0.0
  %3410 = vmatprep.subr.mxu0 0.0
  %3411 = vmatpush2.msra.mxu0 0.0
  %3412 = vmatprep.subr.mxu0 0.0
  %3413 = vmatpush2.msra.mxu0 0.0
  %3414 = vmatprep.subr.mxu0 0.0
  %3415 = vmatpush2.msra.mxu0 0.0
  %3416 = vmatprep.subr.mxu0 0.0
  %3417 = vmatpush2.msra.mxu0 0.0
  %3418 = vmatprep.subr.mxu0 0.0
  %3419 = vmatpush2.msra.mxu0 0.0
  %3420 = vmatprep.subr.mxu0 0.0
  %3421 = vmatpush2.msra.mxu0 0.0
  %3422 = vmatprep.subr.mxu0 0.0
  %3423 = vmatpush2.msra.mxu0 0.0
  %3424 = vmatprep.subr.mxu0 0.0
  %3425 = vmatpush2.msra.mxu0 0.0
  %3426 = vmatprep.subr.mxu0 0.0
  %3427 = vmatpush2.msra.mxu0 0.0
  %3428 = vmatprep.subr.mxu0 0.0
  %3429 = vmatpush2.msra.mxu0 0.0
  %3430 = vmatprep.subr.mxu0 0.0
  %3431 = vmatpush2.msra.mxu0 0.0
  %3432 = vmatprep.mubr.f32.mxu0 0.0
  %3433 = vmatmul.mubr.f32.gmra.mxu0 %v3230
  %v3434 = vpop.f32.mrf.mxu0
  %v3435 = vadd.f32 %v3293, %v3434
  %v3436 = vpop.f32.mrf.mxu0
  %3437 = vdwg.mxu0
  %v3438 = vld [vmem:[%s1253] sm:$0xff]
  %v3439 = vld [vmem:[%s1253 + $0x8] sm:$0xff]
  %v3440 = vld [vmem:[%s1253 + $0x10] sm:$0xff]
  %v3441 = vadd.f32 %v3438, %v3364
  %v3442 = vxor.u32 %v3441, 2147483648
  %v3443 = vmul.f32 %v3442, 1.442695
  %v3444 = vpow.pop %v3443
  %v3445 = vadd.f32 %v3444, 1.0
  %v3446 = vrcp.pop %v3445
  %v3447 = vmul.f32 1.0, %v3446
  %v3448 = vadd.f32 %v3439, %v3366
  %v3449 = vxor.u32 %v3448, 2147483648
  %v3450 = vmul.f32 %v3449, 1.442695
  %v3451 = vpow.pop %v3450
  %v3452 = vadd.f32 %v3451, 1.0
  %v3453 = vrcp.pop %v3452
  %v3454 = vmul.f32 1.0, %v3453
  %v3455 = vmul.f32 %v3447, %v3435
  %v3456 = vadd.f32 %v3440, %v3455
  %v3457 = vtanh.pop %v3456
  %v3458 = vsub.f32 1.0, %v3454
  %v3459 = vmul.f32 %v3458, %v3457
  %v3460 = vmul.f32 %v3454, %v3230
  %v3461 = vadd.f32 %v3459, %v3460
  %3462 = vst [vmem:[%s1278] sm:$0xff] %v3461
  %v3463 = vld [vmem:[%s2537] sm:$0xff]
  %v3464 = vld [vmem:[%s2537 + $0x8] sm:$0xff]
  %v3465 = vld [vmem:[%s2537 + $0x10] sm:$0xff]
  %v3466 = vld [vmem:[%s2537 + $0x18] sm:$0xff]
  %v3467 = vld [vmem:[%s2537 + $0x20] sm:$0xff]
  %v3468 = vld [vmem:[%s2537 + $0x28] sm:$0xff]
  %v3469 = vld [vmem:[%s2537 + $0x30] sm:$0xff]
  %v3470 = vld [vmem:[%s2537 + $0x38] sm:$0xff]
  %v3471 = vld [vmem:[%s2537 + $0x40] sm:$0xff]
  %v3472 = vld [vmem:[%s2537 + $0x48] sm:$0xff]
  %v3473 = vld [vmem:[%s2537 + $0x50] sm:$0xff]
  %v3474 = vld [vmem:[%s2537 + $0x58] sm:$0xff]
  %v3475 = vld [vmem:[%s2537 + $0x60] sm:$0xff]
  %v3476 = vld [vmem:[%s2537 + $0x68] sm:$0xff]
  %v3477 = vld [vmem:[%s2537 + $0x70] sm:$0xff]
  %v3478 = vld [vmem:[%s2537 + $0x78] sm:$0xff]
  %v3479 = vld [vmem:[%s2537 + $0x80] sm:$0xff]
  %v3480 = vld [vmem:[%s2537 + $0x88] sm:$0xff]
  %v3481 = vld [vmem:[%s2537 + $0x90] sm:$0xff]
  %v3482 = vld [vmem:[%s2537 + $0x98] sm:$0xff]
  %v3483 = vld [vmem:[%s2537 + $0xa0] sm:$0xff]
  %v3484 = vld [vmem:[%s2537 + $0xa8] sm:$0xff]
  %v3485 = vld [vmem:[%s2537 + $0xb0] sm:$0xff]
  %v3486 = vld [vmem:[%s2537 + $0xb8] sm:$0xff]
  %v3487 = vld [vmem:[%s2537 + $0xc0] sm:$0xff]
  %v3488 = vld [vmem:[%s2537 + $0xc8] sm:$0xff]
  %v3489 = vld [vmem:[%s2537 + $0xd0] sm:$0xff]
  %v3490 = vld [vmem:[%s2537 + $0xd8] sm:$0xff]
  %v3491 = vld [vmem:[%s2537 + $0xe0] sm:$0xff]
  %v3492 = vld [vmem:[%s2537 + $0xe8] sm:$0xff]
  %v3493 = vld [vmem:[%s2537 + $0xf0] sm:$0xff]
  %v3494 = vld [vmem:[%s2537 + $0xf8] sm:$0xff]
  %v3495 = vld [vmem:[%s2537 + $0x100] sm:$0xff]
  %v3496 = vld [vmem:[%s2537 + $0x108] sm:$0xff]
  %v3497 = vld [vmem:[%s2537 + $0x110] sm:$0xff]
  %v3498 = vld [vmem:[%s2537 + $0x118] sm:$0xff]
  %v3499 = vld [vmem:[%s2537 + $0x120] sm:$0xff]
  %v3500 = vld [vmem:[%s2537 + $0x128] sm:$0xff]
  %v3501 = vld [vmem:[%s2537 + $0x130] sm:$0xff]
  %v3502 = vld [vmem:[%s2537 + $0x138] sm:$0xff]
  %v3503 = vld [vmem:[%s2537 + $0x140] sm:$0xff]
  %v3504 = vld [vmem:[%s2537 + $0x148] sm:$0xff]
  %v3505 = vld [vmem:[%s2537 + $0x150] sm:$0xff]
  %v3506 = vld [vmem:[%s2537 + $0x158] sm:$0xff]
  %v3507 = vld [vmem:[%s2537 + $0x160] sm:$0xff]
  %v3508 = vld [vmem:[%s2537 + $0x168] sm:$0xff]
  %v3509 = vld [vmem:[%s2537 + $0x170] sm:$0xff]
  %v3510 = vld [vmem:[%s2537 + $0x178] sm:$0xff]
  %v3511 = vld [vmem:[%s2586] sm:$0x7]
  %v3513 = vlaneseq
  %v3514 = vshrl.u32 %v3513, 7
  %v3515 = vsub.s32 0, %v3514
  %v3516 = vrot.slane %v3511, %v3515
  %v3517 = vlaneseq
  %v3518 = vshrl.u32 %v3517, 7
  %v3519 = vsub.s32 1, %v3518
  %v3520 = vrot.slane %v3511, %v3519
  %v3521 = vlaneseq
  %v3522 = vshrl.u32 %v3521, 7
  %v3523 = vsub.s32 2, %v3522
  %v3524 = vrot.slane %v3511, %v3523
  %3528 = vmatprep.subr.mxu0 %v3509
  %3529 = vmatpush1.msra.mxu0 %v3508
  %3530 = vmatprep.subr.mxu0 %v3506
  %3531 = vmatpush1.msra.mxu0 %v3505
  %3532 = vmatprep.subr.mxu0 %v3503
  %3533 = vmatpush1.msra.mxu0 %v3502
  %3534 = vmatprep.subr.mxu0 %v3500
  %3535 = vmatpush1.msra.mxu0 %v3499
  %3536 = vmatprep.subr.mxu0 %v3497
  %3537 = vmatpush1.msra.mxu0 %v3496
  %3538 = vmatprep.subr.mxu0 %v3494
  %3539 = vmatpush1.msra.mxu0 %v3493
  %3540 = vmatprep.subr.mxu0 %v3491
  %3541 = vmatpush1.msra.mxu0 %v3490
  %3542 = vmatprep.subr.mxu0 %v3488
  %3543 = vmatpush1.msra.mxu0 %v3487
  %3544 = vmatprep.subr.mxu0 %v3485
  %3545 = vmatpush1.msra.mxu0 %v3484
  %3546 = vmatprep.subr.mxu0 %v3482
  %3547 = vmatpush1.msra.mxu0 %v3481
  %3548 = vmatprep.subr.mxu0 %v3479
  %3549 = vmatpush1.msra.mxu0 %v3478
  %3550 = vmatprep.subr.mxu0 %v3476
  %3551 = vmatpush1.msra.mxu0 %v3475
  %3552 = vmatprep.subr.mxu0 %v3473
  %3553 = vmatpush1.msra.mxu0 %v3472
  %3554 = vmatprep.subr.mxu0 %v3470
  %3555 = vmatpush1.msra.mxu0 %v3469
  %3556 = vmatprep.subr.mxu0 %v3467
  %3557 = vmatpush1.msra.mxu0 %v3466
  %3558 = vmatprep.subr.mxu0 %v3464
  %3559 = vmatpush1.msra.mxu0 %v3463
  %3560 = vmatprep.subr.mxu0 0.0
  %3561 = vmatpush2.msra.mxu0 0.0
  %3562 = vmatprep.subr.mxu0 0.0
  %3563 = vmatpush2.msra.mxu0 0.0
  %3564 = vmatprep.subr.mxu0 0.0
  %3565 = vmatpush2.msra.mxu0 0.0
  %3566 = vmatprep.subr.mxu0 0.0
  %3567 = vmatpush2.msra.mxu0 0.0
  %3568 = vmatprep.subr.mxu0 0.0
  %3569 = vmatpush2.msra.mxu0 0.0
  %3570 = vmatprep.subr.mxu0 0.0
  %3571 = vmatpush2.msra.mxu0 0.0
  %3572 = vmatprep.subr.mxu0 0.0
  %3573 = vmatpush2.msra.mxu0 0.0
  %3574 = vmatprep.subr.mxu0 0.0
  %3575 = vmatpush2.msra.mxu0 0.0
  %3576 = vmatprep.subr.mxu0 0.0
  %3577 = vmatpush2.msra.mxu0 0.0
  %3578 = vmatprep.subr.mxu0 0.0
  %3579 = vmatpush2.msra.mxu0 0.0
  %3580 = vmatprep.subr.mxu0 0.0
  %3581 = vmatpush2.msra.mxu0 0.0
  %3582 = vmatprep.subr.mxu0 0.0
  %3583 = vmatpush2.msra.mxu0 0.0
  %3584 = vmatprep.subr.mxu0 0.0
  %3585 = vmatpush2.msra.mxu0 0.0
  %3586 = vmatprep.subr.mxu0 0.0
  %3587 = vmatpush2.msra.mxu0 0.0
  %3588 = vmatprep.subr.mxu0 0.0
  %3589 = vmatpush2.msra.mxu0 0.0
  %3590 = vmatprep.subr.mxu0 0.0
  %3591 = vmatpush2.msra.mxu0 0.0
  %3592 = vmatprep.mubr.f32.mxu0 0.0
  %3593 = vmatmul.mubr.f32.gmra.mxu0 %v3461
  %v3594 = vpop.f32.mrf.mxu0
  %v3595 = vadd.f32 %v3516, %v3594
  %v3596 = vpop.f32.mrf.mxu0
  %v3597 = vadd.f32 %v3520, %v3596
  %3598 = vdwg.mxu0
  %3599 = vmatprep.subr.mxu0 0.0
  %3600 = vmatpush1.msra.mxu0 %v3510
  %3601 = vmatprep.subr.mxu0 0.0
  %3602 = vmatpush1.msra.mxu0 %v3507
  %3603 = vmatprep.subr.mxu0 0.0
  %3604 = vmatpush1.msra.mxu0 %v3504
  %3605 = vmatprep.subr.mxu0 0.0
  %3606 = vmatpush1.msra.mxu0 %v3501
  %3607 = vmatprep.subr.mxu0 0.0
  %3608 = vmatpush1.msra.mxu0 %v3498
  %3609 = vmatprep.subr.mxu0 0.0
  %3610 = vmatpush1.msra.mxu0 %v3495
  %3611 = vmatprep.subr.mxu0 0.0
  %3612 = vmatpush1.msra.mxu0 %v3492
  %3613 = vmatprep.subr.mxu0 0.0
  %3614 = vmatpush1.msra.mxu0 %v3489
  %3615 = vmatprep.subr.mxu0 0.0
  %3616 = vmatpush1.msra.mxu0 %v3486
  %3617 = vmatprep.subr.mxu0 0.0
  %3618 = vmatpush1.msra.mxu0 %v3483
  %3619 = vmatprep.subr.mxu0 0.0
  %3620 = vmatpush1.msra.mxu0 %v3480
  %3621 = vmatprep.subr.mxu0 0.0
  %3622 = vmatpush1.msra.mxu0 %v3477
  %3623 = vmatprep.subr.mxu0 0.0
  %3624 = vmatpush1.msra.mxu0 %v3474
  %3625 = vmatprep.subr.mxu0 0.0
  %3626 = vmatpush1.msra.mxu0 %v3471
  %3627 = vmatprep.subr.mxu0 0.0
  %3628 = vmatpush1.msra.mxu0 %v3468
  %3629 = vmatprep.subr.mxu0 0.0
  %3630 = vmatpush1.msra.mxu0 %v3465
  %3631 = vmatprep.subr.mxu0 0.0
  %3632 = vmatpush2.msra.mxu0 0.0
  %3633 = vmatprep.subr.mxu0 0.0
  %3634 = vmatpush2.msra.mxu0 0.0
  %3635 = vmatprep.subr.mxu0 0.0
  %3636 = vmatpush2.msra.mxu0 0.0
  %3637 = vmatprep.subr.mxu0 0.0
  %3638 = vmatpush2.msra.mxu0 0.0
  %3639 = vmatprep.subr.mxu0 0.0
  %3640 = vmatpush2.msra.mxu0 0.0
  %3641 = vmatprep.subr.mxu0 0.0
  %3642 = vmatpush2.msra.mxu0 0.0
  %3643 = vmatprep.subr.mxu0 0.0
  %3644 = vmatpush2.msra.mxu0 0.0
  %3645 = vmatprep.subr.mxu0 0.0
  %3646 = vmatpush2.msra.mxu0 0.0
  %3647 = vmatprep.subr.mxu0 0.0
  %3648 = vmatpush2.msra.mxu0 0.0
  %3649 = vmatprep.subr.mxu0 0.0
  %3650 = vmatpush2.msra.mxu0 0.0
  %3651 = vmatprep.subr.mxu0 0.0
  %3652 = vmatpush2.msra.mxu0 0.0
  %3653 = vmatprep.subr.mxu0 0.0
  %3654 = vmatpush2.msra.mxu0 0.0
  %3655 = vmatprep.subr.mxu0 0.0
  %3656 = vmatpush2.msra.mxu0 0.0
  %3657 = vmatprep.subr.mxu0 0.0
  %3658 = vmatpush2.msra.mxu0 0.0
  %3659 = vmatprep.subr.mxu0 0.0
  %3660 = vmatpush2.msra.mxu0 0.0
  %3661 = vmatprep.subr.mxu0 0.0
  %3662 = vmatpush2.msra.mxu0 0.0
  %3663 = vmatprep.mubr.f32.mxu0 0.0
  %3664 = vmatmul.mubr.f32.gmra.mxu0 %v3461
  %v3665 = vpop.f32.mrf.mxu0
  %v3666 = vadd.f32 %v3524, %v3665
  %v3667 = vpop.f32.mrf.mxu0
  %3668 = vdwg.mxu0
  %v3669 = vld [vmem:[%s1488] sm:$0xff]
  %v3670 = vld [vmem:[%s1488 + $0x8] sm:$0xff]
  %v3671 = vld [vmem:[%s1488 + $0x10] sm:$0xff]
  %v3672 = vadd.f32 %v3669, %v3595
  %v3673 = vxor.u32 %v3672, 2147483648
  %v3674 = vmul.f32 %v3673, 1.442695
  %v3675 = vpow.pop %v3674
  %v3676 = vadd.f32 %v3675, 1.0
  %v3677 = vrcp.pop %v3676
  %v3678 = vmul.f32 1.0, %v3677
  %v3679 = vadd.f32 %v3670, %v3597
  %v3680 = vxor.u32 %v3679, 2147483648
  %v3681 = vmul.f32 %v3680, 1.442695
  %v3682 = vpow.pop %v3681
  %v3683 = vadd.f32 %v3682, 1.0
  %v3684 = vrcp.pop %v3683
  %v3685 = vmul.f32 1.0, %v3684
  %v3686 = vmul.f32 %v3678, %v3666
  %v3687 = vadd.f32 %v3671, %v3686
  %v3688 = vtanh.pop %v3687
  %v3689 = vsub.f32 1.0, %v3685
  %v3690 = vmul.f32 %v3689, %v3688
  %v3691 = vmul.f32 %v3685, %v3461
  %v3692 = vadd.f32 %v3690, %v3691
  %3693 = vst [vmem:[%s1513] sm:$0xff] %v3692
  %v3694 = vld [vmem:[%s2537] sm:$0xff]
  %v3695 = vld [vmem:[%s2537 + $0x8] sm:$0xff]
  %v3696 = vld [vmem:[%s2537 + $0x10] sm:$0xff]
  %v3697 = vld [vmem:[%s2537 + $0x18] sm:$0xff]
  %v3698 = vld [vmem:[%s2537 + $0x20] sm:$0xff]
  %v3699 = vld [vmem:[%s2537 + $0x28] sm:$0xff]
  %v3700 = vld [vmem:[%s2537 + $0x30] sm:$0xff]
  %v3701 = vld [vmem:[%s2537 + $0x38] sm:$0xff]
  %v3702 = vld [vmem:[%s2537 + $0x40] sm:$0xff]
  %v3703 = vld [vmem:[%s2537 + $0x48] sm:$0xff]
  %v3704 = vld [vmem:[%s2537 + $0x50] sm:$0xff]
  %v3705 = vld [vmem:[%s2537 + $0x58] sm:$0xff]
  %v3706 = vld [vmem:[%s2537 + $0x60] sm:$0xff]
  %v3707 = vld [vmem:[%s2537 + $0x68] sm:$0xff]
  %v3708 = vld [vmem:[%s2537 + $0x70] sm:$0xff]
  %v3709 = vld [vmem:[%s2537 + $0x78] sm:$0xff]
  %v3710 = vld [vmem:[%s2537 + $0x80] sm:$0xff]
  %v3711 = vld [vmem:[%s2537 + $0x88] sm:$0xff]
  %v3712 = vld [vmem:[%s2537 + $0x90] sm:$0xff]
  %v3713 = vld [vmem:[%s2537 + $0x98] sm:$0xff]
  %v3714 = vld [vmem:[%s2537 + $0xa0] sm:$0xff]
  %v3715 = vld [vmem:[%s2537 + $0xa8] sm:$0xff]
  %v3716 = vld [vmem:[%s2537 + $0xb0] sm:$0xff]
  %v3717 = vld [vmem:[%s2537 + $0xb8] sm:$0xff]
  %v3718 = vld [vmem:[%s2537 + $0xc0] sm:$0xff]
  %v3719 = vld [vmem:[%s2537 + $0xc8] sm:$0xff]
  %v3720 = vld [vmem:[%s2537 + $0xd0] sm:$0xff]
  %v3721 = vld [vmem:[%s2537 + $0xd8] sm:$0xff]
  %v3722 = vld [vmem:[%s2537 + $0xe0] sm:$0xff]
  %v3723 = vld [vmem:[%s2537 + $0xe8] sm:$0xff]
  %v3724 = vld [vmem:[%s2537 + $0xf0] sm:$0xff]
  %v3725 = vld [vmem:[%s2537 + $0xf8] sm:$0xff]
  %v3726 = vld [vmem:[%s2537 + $0x100] sm:$0xff]
  %v3727 = vld [vmem:[%s2537 + $0x108] sm:$0xff]
  %v3728 = vld [vmem:[%s2537 + $0x110] sm:$0xff]
  %v3729 = vld [vmem:[%s2537 + $0x118] sm:$0xff]
  %v3730 = vld [vmem:[%s2537 + $0x120] sm:$0xff]
  %v3731 = vld [vmem:[%s2537 + $0x128] sm:$0xff]
  %v3732 = vld [vmem:[%s2537 + $0x130] sm:$0xff]
  %v3733 = vld [vmem:[%s2537 + $0x138] sm:$0xff]
  %v3734 = vld [vmem:[%s2537 + $0x140] sm:$0xff]
  %v3735 = vld [vmem:[%s2537 + $0x148] sm:$0xff]
  %v3736 = vld [vmem:[%s2537 + $0x150] sm:$0xff]
  %v3737 = vld [vmem:[%s2537 + $0x158] sm:$0xff]
  %v3738 = vld [vmem:[%s2537 + $0x160] sm:$0xff]
  %v3739 = vld [vmem:[%s2537 + $0x168] sm:$0xff]
  %v3740 = vld [vmem:[%s2537 + $0x170] sm:$0xff]
  %v3741 = vld [vmem:[%s2537 + $0x178] sm:$0xff]
  %v3742 = vld [vmem:[%s2586] sm:$0x7]
  %v3744 = vlaneseq
  %v3745 = vshrl.u32 %v3744, 7
  %v3746 = vsub.s32 0, %v3745
  %v3747 = vrot.slane %v3742, %v3746
  %v3748 = vlaneseq
  %v3749 = vshrl.u32 %v3748, 7
  %v3750 = vsub.s32 1, %v3749
  %v3751 = vrot.slane %v3742, %v3750
  %v3752 = vlaneseq
  %v3753 = vshrl.u32 %v3752, 7
  %v3754 = vsub.s32 2, %v3753
  %v3755 = vrot.slane %v3742, %v3754
  %3759 = vmatprep.subr.mxu0 %v3740
  %3760 = vmatpush1.msra.mxu0 %v3739
  %3761 = vmatprep.subr.mxu0 %v3737
  %3762 = vmatpush1.msra.mxu0 %v3736
  %3763 = vmatprep.subr.mxu0 %v3734
  %3764 = vmatpush1.msra.mxu0 %v3733
  %3765 = vmatprep.subr.mxu0 %v3731
  %3766 = vmatpush1.msra.mxu0 %v3730
  %3767 = vmatprep.subr.mxu0 %v3728
  %3768 = vmatpush1.msra.mxu0 %v3727
  %3769 = vmatprep.subr.mxu0 %v3725
  %3770 = vmatpush1.msra.mxu0 %v3724
  %3771 = vmatprep.subr.mxu0 %v3722
  %3772 = vmatpush1.msra.mxu0 %v3721
  %3773 = vmatprep.subr.mxu0 %v3719
  %3774 = vmatpush1.msra.mxu0 %v3718
  %3775 = vmatprep.subr.mxu0 %v3716
  %3776 = vmatpush1.msra.mxu0 %v3715
  %3777 = vmatprep.subr.mxu0 %v3713
  %3778 = vmatpush1.msra.mxu0 %v3712
  %3779 = vmatprep.subr.mxu0 %v3710
  %3780 = vmatpush1.msra.mxu0 %v3709
  %3781 = vmatprep.subr.mxu0 %v3707
  %3782 = vmatpush1.msra.mxu0 %v3706
  %3783 = vmatprep.subr.mxu0 %v3704
  %3784 = vmatpush1.msra.mxu0 %v3703
  %3785 = vmatprep.subr.mxu0 %v3701
  %3786 = vmatpush1.msra.mxu0 %v3700
  %3787 = vmatprep.subr.mxu0 %v3698
  %3788 = vmatpush1.msra.mxu0 %v3697
  %3789 = vmatprep.subr.mxu0 %v3695
  %3790 = vmatpush1.msra.mxu0 %v3694
  %3791 = vmatprep.subr.mxu0 0.0
  %3792 = vmatpush2.msra.mxu0 0.0
  %3793 = vmatprep.subr.mxu0 0.0
  %3794 = vmatpush2.msra.mxu0 0.0
  %3795 = vmatprep.subr.mxu0 0.0
  %3796 = vmatpush2.msra.mxu0 0.0
  %3797 = vmatprep.subr.mxu0 0.0
  %3798 = vmatpush2.msra.mxu0 0.0
  %3799 = vmatprep.subr.mxu0 0.0
  %3800 = vmatpush2.msra.mxu0 0.0
  %3801 = vmatprep.subr.mxu0 0.0
  %3802 = vmatpush2.msra.mxu0 0.0
  %3803 = vmatprep.subr.mxu0 0.0
  %3804 = vmatpush2.msra.mxu0 0.0
  %3805 = vmatprep.subr.mxu0 0.0
  %3806 = vmatpush2.msra.mxu0 0.0
  %3807 = vmatprep.subr.mxu0 0.0
  %3808 = vmatpush2.msra.mxu0 0.0
  %3809 = vmatprep.subr.mxu0 0.0
  %3810 = vmatpush2.msra.mxu0 0.0
  %3811 = vmatprep.subr.mxu0 0.0
  %3812 = vmatpush2.msra.mxu0 0.0
  %3813 = vmatprep.subr.mxu0 0.0
  %3814 = vmatpush2.msra.mxu0 0.0
  %3815 = vmatprep.subr.mxu0 0.0
  %3816 = vmatpush2.msra.mxu0 0.0
  %3817 = vmatprep.subr.mxu0 0.0
  %3818 = vmatpush2.msra.mxu0 0.0
  %3819 = vmatprep.subr.mxu0 0.0
  %3820 = vmatpush2.msra.mxu0 0.0
  %3821 = vmatprep.subr.mxu0 0.0
  %3822 = vmatpush2.msra.mxu0 0.0
  %3823 = vmatprep.mubr.f32.mxu0 0.0
  %3824 = vmatmul.mubr.f32.gmra.mxu0 %v3692
  %v3825 = vpop.f32.mrf.mxu0
  %v3826 = vadd.f32 %v3747, %v3825
  %v3827 = vpop.f32.mrf.mxu0
  %v3828 = vadd.f32 %v3751, %v3827
  %3829 = vdwg.mxu0
  %3830 = vmatprep.subr.mxu0 0.0
  %3831 = vmatpush1.msra.mxu0 %v3741
  %3832 = vmatprep.subr.mxu0 0.0
  %3833 = vmatpush1.msra.mxu0 %v3738
  %3834 = vmatprep.subr.mxu0 0.0
  %3835 = vmatpush1.msra.mxu0 %v3735
  %3836 = vmatprep.subr.mxu0 0.0
  %3837 = vmatpush1.msra.mxu0 %v3732
  %3838 = vmatprep.subr.mxu0 0.0
  %3839 = vmatpush1.msra.mxu0 %v3729
  %3840 = vmatprep.subr.mxu0 0.0
  %3841 = vmatpush1.msra.mxu0 %v3726
  %3842 = vmatprep.subr.mxu0 0.0
  %3843 = vmatpush1.msra.mxu0 %v3723
  %3844 = vmatprep.subr.mxu0 0.0
  %3845 = vmatpush1.msra.mxu0 %v3720
  %3846 = vmatprep.subr.mxu0 0.0
  %3847 = vmatpush1.msra.mxu0 %v3717
  %3848 = vmatprep.subr.mxu0 0.0
  %3849 = vmatpush1.msra.mxu0 %v3714
  %3850 = vmatprep.subr.mxu0 0.0
  %3851 = vmatpush1.msra.mxu0 %v3711
  %3852 = vmatprep.subr.mxu0 0.0
  %3853 = vmatpush1.msra.mxu0 %v3708
  %3854 = vmatprep.subr.mxu0 0.0
  %3855 = vmatpush1.msra.mxu0 %v3705
  %3856 = vmatprep.subr.mxu0 0.0
  %3857 = vmatpush1.msra.mxu0 %v3702
  %3858 = vmatprep.subr.mxu0 0.0
  %3859 = vmatpush1.msra.mxu0 %v3699
  %3860 = vmatprep.subr.mxu0 0.0
  %3861 = vmatpush1.msra.mxu0 %v3696
  %3862 = vmatprep.subr.mxu0 0.0
  %3863 = vmatpush2.msra.mxu0 0.0
  %3864 = vmatprep.subr.mxu0 0.0
  %3865 = vmatpush2.msra.mxu0 0.0
  %3866 = vmatprep.subr.mxu0 0.0
  %3867 = vmatpush2.msra.mxu0 0.0
  %3868 = vmatprep.subr.mxu0 0.0
  %3869 = vmatpush2.msra.mxu0 0.0
  %3870 = vmatprep.subr.mxu0 0.0
  %3871 = vmatpush2.msra.mxu0 0.0
  %3872 = vmatprep.subr.mxu0 0.0
  %3873 = vmatpush2.msra.mxu0 0.0
  %3874 = vmatprep.subr.mxu0 0.0
  %3875 = vmatpush2.msra.mxu0 0.0
  %3876 = vmatprep.subr.mxu0 0.0
  %3877 = vmatpush2.msra.mxu0 0.0
  %3878 = vmatprep.subr.mxu0 0.0
  %3879 = vmatpush2.msra.mxu0 0.0
  %3880 = vmatprep.subr.mxu0 0.0
  %3881 = vmatpush2.msra.mxu0 0.0
  %3882 = vmatprep.subr.mxu0 0.0
  %3883 = vmatpush2.msra.mxu0 0.0
  %3884 = vmatprep.subr.mxu0 0.0
  %3885 = vmatpush2.msra.mxu0 0.0
  %3886 = vmatprep.subr.mxu0 0.0
  %3887 = vmatpush2.msra.mxu0 0.0
  %3888 = vmatprep.subr.mxu0 0.0
  %3889 = vmatpush2.msra.mxu0 0.0
  %3890 = vmatprep.subr.mxu0 0.0
  %3891 = vmatpush2.msra.mxu0 0.0
  %3892 = vmatprep.subr.mxu0 0.0
  %3893 = vmatpush2.msra.mxu0 0.0
  %3894 = vmatprep.mubr.f32.mxu0 0.0
  %3895 = vmatmul.mubr.f32.gmra.mxu0 %v3692
  %v3896 = vpop.f32.mrf.mxu0
  %v3897 = vadd.f32 %v3755, %v3896
  %v3898 = vpop.f32.mrf.mxu0
  %3899 = vdwg.mxu0
  %v3900 = vld [vmem:[%s1723] sm:$0xff]
  %v3901 = vld [vmem:[%s1723 + $0x8] sm:$0xff]
  %v3902 = vld [vmem:[%s1723 + $0x10] sm:$0xff]
  %v3903 = vadd.f32 %v3900, %v3826
  %v3904 = vxor.u32 %v3903, 2147483648
  %v3905 = vmul.f32 %v3904, 1.442695
  %v3906 = vpow.pop %v3905
  %v3907 = vadd.f32 %v3906, 1.0
  %v3908 = vrcp.pop %v3907
  %v3909 = vmul.f32 1.0, %v3908
  %v3910 = vadd.f32 %v3901, %v3828
  %v3911 = vxor.u32 %v3910, 2147483648
  %v3912 = vmul.f32 %v3911, 1.442695
  %v3913 = vpow.pop %v3912
  %v3914 = vadd.f32 %v3913, 1.0
  %v3915 = vrcp.pop %v3914
  %v3916 = vmul.f32 1.0, %v3915
  %v3917 = vmul.f32 %v3909, %v3897
  %v3918 = vadd.f32 %v3902, %v3917
  %v3919 = vtanh.pop %v3918
  %v3920 = vsub.f32 1.0, %v3916
  %v3921 = vmul.f32 %v3920, %v3919
  %v3922 = vmul.f32 %v3916, %v3692
  %v3923 = vadd.f32 %v3921, %v3922
  %3924 = vst [vmem:[%s1748] sm:$0xff] %v3923
  %v3925 = vld [vmem:[%s2537] sm:$0xff]
  %v3926 = vld [vmem:[%s2537 + $0x8] sm:$0xff]
  %v3927 = vld [vmem:[%s2537 + $0x10] sm:$0xff]
  %v3928 = vld [vmem:[%s2537 + $0x18] sm:$0xff]
  %v3929 = vld [vmem:[%s2537 + $0x20] sm:$0xff]
  %v3930 = vld [vmem:[%s2537 + $0x28] sm:$0xff]
  %v3931 = vld [vmem:[%s2537 + $0x30] sm:$0xff]
  %v3932 = vld [vmem:[%s2537 + $0x38] sm:$0xff]
  %v3933 = vld [vmem:[%s2537 + $0x40] sm:$0xff]
  %v3934 = vld [vmem:[%s2537 + $0x48] sm:$0xff]
  %v3935 = vld [vmem:[%s2537 + $0x50] sm:$0xff]
  %v3936 = vld [vmem:[%s2537 + $0x58] sm:$0xff]
  %v3937 = vld [vmem:[%s2537 + $0x60] sm:$0xff]
  %v3938 = vld [vmem:[%s2537 + $0x68] sm:$0xff]
  %v3939 = vld [vmem:[%s2537 + $0x70] sm:$0xff]
  %v3940 = vld [vmem:[%s2537 + $0x78] sm:$0xff]
  %v3941 = vld [vmem:[%s2537 + $0x80] sm:$0xff]
  %v3942 = vld [vmem:[%s2537 + $0x88] sm:$0xff]
  %v3943 = vld [vmem:[%s2537 + $0x90] sm:$0xff]
  %v3944 = vld [vmem:[%s2537 + $0x98] sm:$0xff]
  %v3945 = vld [vmem:[%s2537 + $0xa0] sm:$0xff]
  %v3946 = vld [vmem:[%s2537 + $0xa8] sm:$0xff]
  %v3947 = vld [vmem:[%s2537 + $0xb0] sm:$0xff]
  %v3948 = vld [vmem:[%s2537 + $0xb8] sm:$0xff]
  %v3949 = vld [vmem:[%s2537 + $0xc0] sm:$0xff]
  %v3950 = vld [vmem:[%s2537 + $0xc8] sm:$0xff]
  %v3951 = vld [vmem:[%s2537 + $0xd0] sm:$0xff]
  %v3952 = vld [vmem:[%s2537 + $0xd8] sm:$0xff]
  %v3953 = vld [vmem:[%s2537 + $0xe0] sm:$0xff]
  %v3954 = vld [vmem:[%s2537 + $0xe8] sm:$0xff]
  %v3955 = vld [vmem:[%s2537 + $0xf0] sm:$0xff]
  %v3956 = vld [vmem:[%s2537 + $0xf8] sm:$0xff]
  %v3957 = vld [vmem:[%s2537 + $0x100] sm:$0xff]
  %v3958 = vld [vmem:[%s2537 + $0x108] sm:$0xff]
  %v3959 = vld [vmem:[%s2537 + $0x110] sm:$0xff]
  %v3960 = vld [vmem:[%s2537 + $0x118] sm:$0xff]
  %v3961 = vld [vmem:[%s2537 + $0x120] sm:$0xff]
  %v3962 = vld [vmem:[%s2537 + $0x128] sm:$0xff]
  %v3963 = vld [vmem:[%s2537 + $0x130] sm:$0xff]
  %v3964 = vld [vmem:[%s2537 + $0x138] sm:$0xff]
  %v3965 = vld [vmem:[%s2537 + $0x140] sm:$0xff]
  %v3966 = vld [vmem:[%s2537 + $0x148] sm:$0xff]
  %v3967 = vld [vmem:[%s2537 + $0x150] sm:$0xff]
  %v3968 = vld [vmem:[%s2537 + $0x158] sm:$0xff]
  %v3969 = vld [vmem:[%s2537 + $0x160] sm:$0xff]
  %v3970 = vld [vmem:[%s2537 + $0x168] sm:$0xff]
  %v3971 = vld [vmem:[%s2537 + $0x170] sm:$0xff]
  %v3972 = vld [vmem:[%s2537 + $0x178] sm:$0xff]
  %v3973 = vld [vmem:[%s2586] sm:$0x7]
  %v3975 = vlaneseq
  %v3976 = vshrl.u32 %v3975, 7
  %v3977 = vsub.s32 0, %v3976
  %v3978 = vrot.slane %v3973, %v3977
  %v3979 = vlaneseq
  %v3980 = vshrl.u32 %v3979, 7
  %v3981 = vsub.s32 1, %v3980
  %v3982 = vrot.slane %v3973, %v3981
  %v3983 = vlaneseq
  %v3984 = vshrl.u32 %v3983, 7
  %v3985 = vsub.s32 2, %v3984
  %v3986 = vrot.slane %v3973, %v3985
  %3990 = vmatprep.subr.mxu0 %v3971
  %3991 = vmatpush1.msra.mxu0 %v3970
  %3992 = vmatprep.subr.mxu0 %v3968
  %3993 = vmatpush1.msra.mxu0 %v3967
  %3994 = vmatprep.subr.mxu0 %v3965
  %3995 = vmatpush1.msra.mxu0 %v3964
  %3996 = vmatprep.subr.mxu0 %v3962
  %3997 = vmatpush1.msra.mxu0 %v3961
  %3998 = vmatprep.subr.mxu0 %v3959
  %3999 = vmatpush1.msra.mxu0 %v3958
  %4000 = vmatprep.subr.mxu0 %v3956
  %4001 = vmatpush1.msra.mxu0 %v3955
  %4002 = vmatprep.subr.mxu0 %v3953
  %4003 = vmatpush1.msra.mxu0 %v3952
  %4004 = vmatprep.subr.mxu0 %v3950
  %4005 = vmatpush1.msra.mxu0 %v3949
  %4006 = vmatprep.subr.mxu0 %v3947
  %4007 = vmatpush1.msra.mxu0 %v3946
  %4008 = vmatprep.subr.mxu0 %v3944
  %4009 = vmatpush1.msra.mxu0 %v3943
  %4010 = vmatprep.subr.mxu0 %v3941
  %4011 = vmatpush1.msra.mxu0 %v3940
  %4012 = vmatprep.subr.mxu0 %v3938
  %4013 = vmatpush1.msra.mxu0 %v3937
  %4014 = vmatprep.subr.mxu0 %v3935
  %4015 = vmatpush1.msra.mxu0 %v3934
  %4016 = vmatprep.subr.mxu0 %v3932
  %4017 = vmatpush1.msra.mxu0 %v3931
  %4018 = vmatprep.subr.mxu0 %v3929
  %4019 = vmatpush1.msra.mxu0 %v3928
  %4020 = vmatprep.subr.mxu0 %v3926
  %4021 = vmatpush1.msra.mxu0 %v3925
  %4022 = vmatprep.subr.mxu0 0.0
  %4023 = vmatpush2.msra.mxu0 0.0
  %4024 = vmatprep.subr.mxu0 0.0
  %4025 = vmatpush2.msra.mxu0 0.0
  %4026 = vmatprep.subr.mxu0 0.0
  %4027 = vmatpush2.msra.mxu0 0.0
  %4028 = vmatprep.subr.mxu0 0.0
  %4029 = vmatpush2.msra.mxu0 0.0
  %4030 = vmatprep.subr.mxu0 0.0
  %4031 = vmatpush2.msra.mxu0 0.0
  %4032 = vmatprep.subr.mxu0 0.0
  %4033 = vmatpush2.msra.mxu0 0.0
  %4034 = vmatprep.subr.mxu0 0.0
  %4035 = vmatpush2.msra.mxu0 0.0
  %4036 = vmatprep.subr.mxu0 0.0
  %4037 = vmatpush2.msra.mxu0 0.0
  %4038 = vmatprep.subr.mxu0 0.0
  %4039 = vmatpush2.msra.mxu0 0.0
  %4040 = vmatprep.subr.mxu0 0.0
  %4041 = vmatpush2.msra.mxu0 0.0
  %4042 = vmatprep.subr.mxu0 0.0
  %4043 = vmatpush2.msra.mxu0 0.0
  %4044 = vmatprep.subr.mxu0 0.0
  %4045 = vmatpush2.msra.mxu0 0.0
  %4046 = vmatprep.subr.mxu0 0.0
  %4047 = vmatpush2.msra.mxu0 0.0
  %4048 = vmatprep.subr.mxu0 0.0
  %4049 = vmatpush2.msra.mxu0 0.0
  %4050 = vmatprep.subr.mxu0 0.0
  %4051 = vmatpush2.msra.mxu0 0.0
  %4052 = vmatprep.subr.mxu0 0.0
  %4053 = vmatpush2.msra.mxu0 0.0
  %4054 = vmatprep.mubr.f32.mxu0 0.0
  %4055 = vmatmul.mubr.f32.gmra.mxu0 %v3923
  %v4056 = vpop.f32.mrf.mxu0
  %v4057 = vadd.f32 %v3978, %v4056
  %v4058 = vpop.f32.mrf.mxu0
  %v4059 = vadd.f32 %v3982, %v4058
  %4060 = vdwg.mxu0
  %4061 = vmatprep.subr.mxu0 0.0
  %4062 = vmatpush1.msra.mxu0 %v3972
  %4063 = vmatprep.subr.mxu0 0.0
  %4064 = vmatpush1.msra.mxu0 %v3969
  %4065 = vmatprep.subr.mxu0 0.0
  %4066 = vmatpush1.msra.mxu0 %v3966
  %4067 = vmatprep.subr.mxu0 0.0
  %4068 = vmatpush1.msra.mxu0 %v3963
  %4069 = vmatprep.subr.mxu0 0.0
  %4070 = vmatpush1.msra.mxu0 %v3960
  %4071 = vmatprep.subr.mxu0 0.0
  %4072 = vmatpush1.msra.mxu0 %v3957
  %4073 = vmatprep.subr.mxu0 0.0
  %4074 = vmatpush1.msra.mxu0 %v3954
  %4075 = vmatprep.subr.mxu0 0.0
  %4076 = vmatpush1.msra.mxu0 %v3951
  %4077 = vmatprep.subr.mxu0 0.0
  %4078 = vmatpush1.msra.mxu0 %v3948
  %4079 = vmatprep.subr.mxu0 0.0
  %4080 = vmatpush1.msra.mxu0 %v3945
  %4081 = vmatprep.subr.mxu0 0.0
  %4082 = vmatpush1.msra.mxu0 %v3942
  %4083 = vmatprep.subr.mxu0 0.0
  %4084 = vmatpush1.msra.mxu0 %v3939
  %4085 = vmatprep.subr.mxu0 0.0
  %4086 = vmatpush1.msra.mxu0 %v3936
  %4087 = vmatprep.subr.mxu0 0.0
  %4088 = vmatpush1.msra.mxu0 %v3933
  %4089 = vmatprep.subr.mxu0 0.0
  %4090 = vmatpush1.msra.mxu0 %v3930
  %4091 = vmatprep.subr.mxu0 0.0
  %4092 = vmatpush1.msra.mxu0 %v3927
  %4093 = vmatprep.subr.mxu0 0.0
  %4094 = vmatpush2.msra.mxu0 0.0
  %4095 = vmatprep.subr.mxu0 0.0
  %4096 = vmatpush2.msra.mxu0 0.0
  %4097 = vmatprep.subr.mxu0 0.0
  %4098 = vmatpush2.msra.mxu0 0.0
  %4099 = vmatprep.subr.mxu0 0.0
  %4100 = vmatpush2.msra.mxu0 0.0
  %4101 = vmatprep.subr.mxu0 0.0
  %4102 = vmatpush2.msra.mxu0 0.0
  %4103 = vmatprep.subr.mxu0 0.0
  %4104 = vmatpush2.msra.mxu0 0.0
  %4105 = vmatprep.subr.mxu0 0.0
  %4106 = vmatpush2.msra.mxu0 0.0
  %4107 = vmatprep.subr.mxu0 0.0
  %4108 = vmatpush2.msra.mxu0 0.0
  %4109 = vmatprep.subr.mxu0 0.0
  %4110 = vmatpush2.msra.mxu0 0.0
  %4111 = vmatprep.subr.mxu0 0.0
  %4112 = vmatpush2.msra.mxu0 0.0
  %4113 = vmatprep.subr.mxu0 0.0
  %4114 = vmatpush2.msra.mxu0 0.0
  %4115 = vmatprep.subr.mxu0 0.0
  %4116 = vmatpush2.msra.mxu0 0.0
  %4117 = vmatprep.subr.mxu0 0.0
  %4118 = vmatpush2.msra.mxu0 0.0
  %4119 = vmatprep.subr.mxu0 0.0
  %4120 = vmatpush2.msra.mxu0 0.0
  %4121 = vmatprep.subr.mxu0 0.0
  %4122 = vmatpush2.msra.mxu0 0.0
  %4123 = vmatprep.subr.mxu0 0.0
  %4124 = vmatpush2.msra.mxu0 0.0
  %4125 = vmatprep.mubr.f32.mxu0 0.0
  %4126 = vmatmul.mubr.f32.gmra.mxu0 %v3923
  %v4127 = vpop.f32.mrf.mxu0
  %v4128 = vadd.f32 %v3986, %v4127
  %v4129 = vpop.f32.mrf.mxu0
  %4130 = vdwg.mxu0
  %v4131 = vld [vmem:[%s1958] sm:$0xff]
  %v4132 = vld [vmem:[%s1958 + $0x8] sm:$0xff]
  %v4133 = vld [vmem:[%s1958 + $0x10] sm:$0xff]
  %v4134 = vadd.f32 %v4131, %v4057
  %v4135 = vxor.u32 %v4134, 2147483648
  %v4136 = vmul.f32 %v4135, 1.442695
  %v4137 = vpow.pop %v4136
  %v4138 = vadd.f32 %v4137, 1.0
  %v4139 = vrcp.pop %v4138
  %v4140 = vmul.f32 1.0, %v4139
  %v4141 = vadd.f32 %v4132, %v4059
  %v4142 = vxor.u32 %v4141, 2147483648
  %v4143 = vmul.f32 %v4142, 1.442695
  %v4144 = vpow.pop %v4143
  %v4145 = vadd.f32 %v4144, 1.0
  %v4146 = vrcp.pop %v4145
  %v4147 = vmul.f32 1.0, %v4146
  %v4148 = vmul.f32 %v4140, %v4128
  %v4149 = vadd.f32 %v4133, %v4148
  %v4150 = vtanh.pop %v4149
  %v4151 = vsub.f32 1.0, %v4147
  %v4152 = vmul.f32 %v4151, %v4150
  %v4153 = vmul.f32 %v4147, %v3923
  %v4154 = vadd.f32 %v4152, %v4153
  %4155 = vst [vmem:[%s1983] sm:$0xff] %v4154
  %v4156 = vld [vmem:[%s2537] sm:$0xff]
  %v4157 = vld [vmem:[%s2537 + $0x8] sm:$0xff]
  %v4158 = vld [vmem:[%s2537 + $0x10] sm:$0xff]
  %v4159 = vld [vmem:[%s2537 + $0x18] sm:$0xff]
  %v4160 = vld [vmem:[%s2537 + $0x20] sm:$0xff]
  %v4161 = vld [vmem:[%s2537 + $0x28] sm:$0xff]
  %v4162 = vld [vmem:[%s2537 + $0x30] sm:$0xff]
  %v4163 = vld [vmem:[%s2537 + $0x38] sm:$0xff]
  %v4164 = vld [vmem:[%s2537 + $0x40] sm:$0xff]
  %v4165 = vld [vmem:[%s2537 + $0x48] sm:$0xff]
  %v4166 = vld [vmem:[%s2537 + $0x50] sm:$0xff]
  %v4167 = vld [vmem:[%s2537 + $0x58] sm:$0xff]
  %v4168 = vld [vmem:[%s2537 + $0x60] sm:$0xff]
  %v4169 = vld [vmem:[%s2537 + $0x68] sm:$0xff]
  %v4170 = vld [vmem:[%s2537 + $0x70] sm:$0xff]
  %v4171 = vld [vmem:[%s2537 + $0x78] sm:$0xff]
  %v4172 = vld [vmem:[%s2537 + $0x80] sm:$0xff]
  %v4173 = vld [vmem:[%s2537 + $0x88] sm:$0xff]
  %v4174 = vld [vmem:[%s2537 + $0x90] sm:$0xff]
  %v4175 = vld [vmem:[%s2537 + $0x98] sm:$0xff]
  %v4176 = vld [vmem:[%s2537 + $0xa0] sm:$0xff]
  %v4177 = vld [vmem:[%s2537 + $0xa8] sm:$0xff]
  %v4178 = vld [vmem:[%s2537 + $0xb0] sm:$0xff]
  %v4179 = vld [vmem:[%s2537 + $0xb8] sm:$0xff]
  %v4180 = vld [vmem:[%s2537 + $0xc0] sm:$0xff]
  %v4181 = vld [vmem:[%s2537 + $0xc8] sm:$0xff]
  %v4182 = vld [vmem:[%s2537 + $0xd0] sm:$0xff]
  %v4183 = vld [vmem:[%s2537 + $0xd8] sm:$0xff]
  %v4184 = vld [vmem:[%s2537 + $0xe0] sm:$0xff]
  %v4185 = vld [vmem:[%s2537 + $0xe8] sm:$0xff]
  %v4186 = vld [vmem:[%s2537 + $0xf0] sm:$0xff]
  %v4187 = vld [vmem:[%s2537 + $0xf8] sm:$0xff]
  %v4188 = vld [vmem:[%s2537 + $0x100] sm:$0xff]
  %v4189 = vld [vmem:[%s2537 + $0x108] sm:$0xff]
  %v4190 = vld [vmem:[%s2537 + $0x110] sm:$0xff]
  %v4191 = vld [vmem:[%s2537 + $0x118] sm:$0xff]
  %v4192 = vld [vmem:[%s2537 + $0x120] sm:$0xff]
  %v4193 = vld [vmem:[%s2537 + $0x128] sm:$0xff]
  %v4194 = vld [vmem:[%s2537 + $0x130] sm:$0xff]
  %v4195 = vld [vmem:[%s2537 + $0x138] sm:$0xff]
  %v4196 = vld [vmem:[%s2537 + $0x140] sm:$0xff]
  %v4197 = vld [vmem:[%s2537 + $0x148] sm:$0xff]
  %v4198 = vld [vmem:[%s2537 + $0x150] sm:$0xff]
  %v4199 = vld [vmem:[%s2537 + $0x158] sm:$0xff]
  %v4200 = vld [vmem:[%s2537 + $0x160] sm:$0xff]
  %v4201 = vld [vmem:[%s2537 + $0x168] sm:$0xff]
  %v4202 = vld [vmem:[%s2537 + $0x170] sm:$0xff]
  %v4203 = vld [vmem:[%s2537 + $0x178] sm:$0xff]
  %v4204 = vld [vmem:[%s2586] sm:$0x7]
  %v4206 = vlaneseq
  %v4207 = vshrl.u32 %v4206, 7
  %v4208 = vsub.s32 0, %v4207
  %v4209 = vrot.slane %v4204, %v4208
  %v4210 = vlaneseq
  %v4211 = vshrl.u32 %v4210, 7
  %v4212 = vsub.s32 1, %v4211
  %v4213 = vrot.slane %v4204, %v4212
  %v4214 = vlaneseq
  %v4215 = vshrl.u32 %v4214, 7
  %v4216 = vsub.s32 2, %v4215
  %v4217 = vrot.slane %v4204, %v4216
  %4221 = vmatprep.subr.mxu0 %v4202
  %4222 = vmatpush1.msra.mxu0 %v4201
  %4223 = vmatprep.subr.mxu0 %v4199
  %4224 = vmatpush1.msra.mxu0 %v4198
  %4225 = vmatprep.subr.mxu0 %v4196
  %4226 = vmatpush1.msra.mxu0 %v4195
  %4227 = vmatprep.subr.mxu0 %v4193
  %4228 = vmatpush1.msra.mxu0 %v4192
  %4229 = vmatprep.subr.mxu0 %v4190
  %4230 = vmatpush1.msra.mxu0 %v4189
  %4231 = vmatprep.subr.mxu0 %v4187
  %4232 = vmatpush1.msra.mxu0 %v4186
  %4233 = vmatprep.subr.mxu0 %v4184
  %4234 = vmatpush1.msra.mxu0 %v4183
  %4235 = vmatprep.subr.mxu0 %v4181
  %4236 = vmatpush1.msra.mxu0 %v4180
  %4237 = vmatprep.subr.mxu0 %v4178
  %4238 = vmatpush1.msra.mxu0 %v4177
  %4239 = vmatprep.subr.mxu0 %v4175
  %4240 = vmatpush1.msra.mxu0 %v4174
  %4241 = vmatprep.subr.mxu0 %v4172
  %4242 = vmatpush1.msra.mxu0 %v4171
  %4243 = vmatprep.subr.mxu0 %v4169
  %4244 = vmatpush1.msra.mxu0 %v4168
  %4245 = vmatprep.subr.mxu0 %v4166
  %4246 = vmatpush1.msra.mxu0 %v4165
  %4247 = vmatprep.subr.mxu0 %v4163
  %4248 = vmatpush1.msra.mxu0 %v4162
  %4249 = vmatprep.subr.mxu0 %v4160
  %4250 = vmatpush1.msra.mxu0 %v4159
  %4251 = vmatprep.subr.mxu0 %v4157
  %4252 = vmatpush1.msra.mxu0 %v4156
  %4253 = vmatprep.subr.mxu0 0.0
  %4254 = vmatpush2.msra.mxu0 0.0
  %4255 = vmatprep.subr.mxu0 0.0
  %4256 = vmatpush2.msra.mxu0 0.0
  %4257 = vmatprep.subr.mxu0 0.0
  %4258 = vmatpush2.msra.mxu0 0.0
  %4259 = vmatprep.subr.mxu0 0.0
  %4260 = vmatpush2.msra.mxu0 0.0
  %4261 = vmatprep.subr.mxu0 0.0
  %4262 = vmatpush2.msra.mxu0 0.0
  %4263 = vmatprep.subr.mxu0 0.0
  %4264 = vmatpush2.msra.mxu0 0.0
  %4265 = vmatprep.subr.mxu0 0.0
  %4266 = vmatpush2.msra.mxu0 0.0
  %4267 = vmatprep.subr.mxu0 0.0
  %4268 = vmatpush2.msra.mxu0 0.0
  %4269 = vmatprep.subr.mxu0 0.0
  %4270 = vmatpush2.msra.mxu0 0.0
  %4271 = vmatprep.subr.mxu0 0.0
  %4272 = vmatpush2.msra.mxu0 0.0
  %4273 = vmatprep.subr.mxu0 0.0
  %4274 = vmatpush2.msra.mxu0 0.0
  %4275 = vmatprep.subr.mxu0 0.0
  %4276 = vmatpush2.msra.mxu0 0.0
  %4277 = vmatprep.subr.mxu0 0.0
  %4278 = vmatpush2.msra.mxu0 0.0
  %4279 = vmatprep.subr.mxu0 0.0
  %4280 = vmatpush2.msra.mxu0 0.0
  %4281 = vmatprep.subr.mxu0 0.0
  %4282 = vmatpush2.msra.mxu0 0.0
  %4283 = vmatprep.subr.mxu0 0.0
  %4284 = vmatpush2.msra.mxu0 0.0
  %4285 = vmatprep.mubr.f32.mxu0 0.0
  %4286 = vmatmul.mubr.f32.gmra.mxu0 %v4154
  %v4287 = vpop.f32.mrf.mxu0
  %v4288 = vadd.f32 %v4209, %v4287
  %v4289 = vpop.f32.mrf.mxu0
  %v4290 = vadd.f32 %v4213, %v4289
  %4291 = vdwg.mxu0
  %4292 = vmatprep.subr.mxu0 0.0
  %4293 = vmatpush1.msra.mxu0 %v4203
  %4294 = vmatprep.subr.mxu0 0.0
  %4295 = vmatpush1.msra.mxu0 %v4200
  %4296 = vmatprep.subr.mxu0 0.0
  %4297 = vmatpush1.msra.mxu0 %v4197
  %4298 = vmatprep.subr.mxu0 0.0
  %4299 = vmatpush1.msra.mxu0 %v4194
  %4300 = vmatprep.subr.mxu0 0.0
  %4301 = vmatpush1.msra.mxu0 %v4191
  %4302 = vmatprep.subr.mxu0 0.0
  %4303 = vmatpush1.msra.mxu0 %v4188
  %4304 = vmatprep.subr.mxu0 0.0
  %4305 = vmatpush1.msra.mxu0 %v4185
  %4306 = vmatprep.subr.mxu0 0.0
  %4307 = vmatpush1.msra.mxu0 %v4182
  %4308 = vmatprep.subr.mxu0 0.0
  %4309 = vmatpush1.msra.mxu0 %v4179
  %4310 = vmatprep.subr.mxu0 0.0
  %4311 = vmatpush1.msra.mxu0 %v4176
  %4312 = vmatprep.subr.mxu0 0.0
  %4313 = vmatpush1.msra.mxu0 %v4173
  %4314 = vmatprep.subr.mxu0 0.0
  %4315 = vmatpush1.msra.mxu0 %v4170
  %4316 = vmatprep.subr.mxu0 0.0
  %4317 = vmatpush1.msra.mxu0 %v4167
  %4318 = vmatprep.subr.mxu0 0.0
  %4319 = vmatpush1.msra.mxu0 %v4164
  %4320 = vmatprep.subr.mxu0 0.0
  %4321 = vmatpush1.msra.mxu0 %v4161
  %4322 = vmatprep.subr.mxu0 0.0
  %4323 = vmatpush1.msra.mxu0 %v4158
  %4324 = vmatprep.subr.mxu0 0.0
  %4325 = vmatpush2.msra.mxu0 0.0
  %4326 = vmatprep.subr.mxu0 0.0
  %4327 = vmatpush2.msra.mxu0 0.0
  %4328 = vmatprep.subr.mxu0 0.0
  %4329 = vmatpush2.msra.mxu0 0.0
  %4330 = vmatprep.subr.mxu0 0.0
  %4331 = vmatpush2.msra.mxu0 0.0
  %4332 = vmatprep.subr.mxu0 0.0
  %4333 = vmatpush2.msra.mxu0 0.0
  %4334 = vmatprep.subr.mxu0 0.0
  %4335 = vmatpush2.msra.mxu0 0.0
  %4336 = vmatprep.subr.mxu0 0.0
  %4337 = vmatpush2.msra.mxu0 0.0
  %4338 = vmatprep.subr.mxu0 0.0
  %4339 = vmatpush2.msra.mxu0 0.0
  %4340 = vmatprep.subr.mxu0 0.0
  %4341 = vmatpush2.msra.mxu0 0.0
  %4342 = vmatprep.subr.mxu0 0.0
  %4343 = vmatpush2.msra.mxu0 0.0
  %4344 = vmatprep.subr.mxu0 0.0
  %4345 = vmatpush2.msra.mxu0 0.0
  %4346 = vmatprep.subr.mxu0 0.0
  %4347 = vmatpush2.msra.mxu0 0.0
  %4348 = vmatprep.subr.mxu0 0.0
  %4349 = vmatpush2.msra.mxu0 0.0
  %4350 = vmatprep.subr.mxu0 0.0
  %4351 = vmatpush2.msra.mxu0 0.0
  %4352 = vmatprep.subr.mxu0 0.0
  %4353 = vmatpush2.msra.mxu0 0.0
  %4354 = vmatprep.subr.mxu0 0.0
  %4355 = vmatpush2.msra.mxu0 0.0
  %4356 = vmatprep.mubr.f32.mxu0 0.0
  %4357 = vmatmul.mubr.f32.gmra.mxu0 %v4154
  %v4358 = vpop.f32.mrf.mxu0
  %v4359 = vadd.f32 %v4217, %v4358
  %v4360 = vpop.f32.mrf.mxu0
  %4361 = vdwg.mxu0
  %v4362 = vld [vmem:[%s2193] sm:$0xff]
  %v4363 = vld [vmem:[%s2193 + $0x8] sm:$0xff]
  %v4364 = vld [vmem:[%s2193 + $0x10] sm:$0xff]
  %v4365 = vadd.f32 %v4362, %v4288
  %v4366 = vxor.u32 %v4365, 2147483648
  %v4367 = vmul.f32 %v4366, 1.442695
  %v4368 = vpow.pop %v4367
  %v4369 = vadd.f32 %v4368, 1.0
  %v4370 = vrcp.pop %v4369
  %v4371 = vmul.f32 1.0, %v4370
  %v4372 = vadd.f32 %v4363, %v4290
  %v4373 = vxor.u32 %v4372, 2147483648
  %v4374 = vmul.f32 %v4373, 1.442695
  %v4375 = vpow.pop %v4374
  %v4376 = vadd.f32 %v4375, 1.0
  %v4377 = vrcp.pop %v4376
  %v4378 = vmul.f32 1.0, %v4377
  %v4379 = vmul.f32 %v4371, %v4359
  %v4380 = vadd.f32 %v4364, %v4379
  %v4381 = vtanh.pop %v4380
  %v4382 = vsub.f32 1.0, %v4378
  %v4383 = vmul.f32 %v4382, %v4381
  %v4384 = vmul.f32 %v4378, %v4154
  %v4385 = vadd.f32 %v4383, %v4384
  %4386 = vst [vmem:[%s2218] sm:$0xff] %v4385
  %v4387 = vld [vmem:[#allocation2] sm:$0xff]
  %v4388 = vld [vmem:[#allocation2 + $0x8] sm:$0xff]
  %v4389 = vld [vmem:[#allocation2 + $0x10] sm:$0xff]
  %v4390 = vld [vmem:[#allocation2 + $0x18] sm:$0xff]
  %v4391 = vld [vmem:[#allocation2 + $0x20] sm:$0xff]
  %v4392 = vld [vmem:[#allocation2 + $0x28] sm:$0xff]
  %v4393 = vld [vmem:[#allocation2 + $0x30] sm:$0xff]
  %v4394 = vld [vmem:[#allocation2 + $0x38] sm:$0xff]
  %v4395 = vld [vmem:[%s5] sm:$0xff]
  %v4396 = vld [vmem:[%s5 + $0x8] sm:$0xff]
  %v4397 = vld [vmem:[%s5 + $0x10] sm:$0xff]
  %v4398 = vld [vmem:[%s5 + $0x18] sm:$0xff]
  %v4399 = vld [vmem:[%s5 + $0x20] sm:$0xff]
  %v4400 = vld [vmem:[%s5 + $0x28] sm:$0xff]
  %v4401 = vld [vmem:[%s5 + $0x30] sm:$0xff]
  %v4402 = vld [vmem:[%s5 + $0x38] sm:$0xff]
  %v4403 = vld [vmem:[%s5 + $0x40] sm:$0xff]
  %v4404 = vld [vmem:[%s5 + $0x48] sm:$0xff]
  %v4405 = vld [vmem:[%s5 + $0x50] sm:$0xff]
  %v4406 = vld [vmem:[%s5 + $0x58] sm:$0xff]
  %v4407 = vld [vmem:[%s5 + $0x60] sm:$0xff]
  %v4408 = vld [vmem:[%s5 + $0x68] sm:$0xff]
  %v4409 = vld [vmem:[%s5 + $0x70] sm:$0xff]
  %v4410 = vld [vmem:[%s5 + $0x78] sm:$0xff]
  %v4411 = vld [vmem:[%s6] sm:$0x1]
  %v4413 = vlaneseq
  %v4414 = vshrl.u32 %v4413, 7
  %v4415 = vsub.s32 0, %v4414
  %v4416 = vrot.slane %v4411, %v4415
  %4418 = vmatprep.subr.mxu0 0.0
  %4419 = vmatpush1.msra.mxu0 %v4410
  %4420 = vmatprep.subr.mxu0 0.0
  %4421 = vmatpush1.msra.mxu0 %v4409
  %4422 = vmatprep.subr.mxu0 0.0
  %4423 = vmatpush1.msra.mxu0 %v4408
  %4424 = vmatprep.subr.mxu0 0.0
  %4425 = vmatpush1.msra.mxu0 %v4407
  %4426 = vmatprep.subr.mxu0 0.0
  %4427 = vmatpush1.msra.mxu0 %v4406
  %4428 = vmatprep.subr.mxu0 0.0
  %4429 = vmatpush1.msra.mxu0 %v4405
  %4430 = vmatprep.subr.mxu0 0.0
  %4431 = vmatpush1.msra.mxu0 %v4404
  %4432 = vmatprep.subr.mxu0 0.0
  %4433 = vmatpush1.msra.mxu0 %v4403
  %4434 = vmatprep.subr.mxu0 0.0
  %4435 = vmatpush1.msra.mxu0 %v4402
  %4436 = vmatprep.subr.mxu0 0.0
  %4437 = vmatpush1.msra.mxu0 %v4401
  %4438 = vmatprep.subr.mxu0 0.0
  %4439 = vmatpush1.msra.mxu0 %v4400
  %4440 = vmatprep.subr.mxu0 0.0
  %4441 = vmatpush1.msra.mxu0 %v4399
  %4442 = vmatprep.subr.mxu0 0.0
  %4443 = vmatpush1.msra.mxu0 %v4398
  %4444 = vmatprep.subr.mxu0 0.0
  %4445 = vmatpush1.msra.mxu0 %v4397
  %4446 = vmatprep.subr.mxu0 0.0
  %4447 = vmatpush1.msra.mxu0 %v4396
  %4448 = vmatprep.subr.mxu0 0.0
  %4449 = vmatpush1.msra.mxu0 %v4395
  %4450 = vmatprep.subr.mxu0 0.0
  %4451 = vmatpush2.msra.mxu0 0.0
  %4452 = vmatprep.subr.mxu0 0.0
  %4453 = vmatpush2.msra.mxu0 0.0
  %4454 = vmatprep.subr.mxu0 0.0
  %4455 = vmatpush2.msra.mxu0 0.0
  %4456 = vmatprep.subr.mxu0 0.0
  %4457 = vmatpush2.msra.mxu0 0.0
  %4458 = vmatprep.subr.mxu0 0.0
  %4459 = vmatpush2.msra.mxu0 0.0
  %4460 = vmatprep.subr.mxu0 0.0
  %4461 = vmatpush2.msra.mxu0 0.0
  %4462 = vmatprep.subr.mxu0 0.0
  %4463 = vmatpush2.msra.mxu0 0.0
  %4464 = vmatprep.subr.mxu0 0.0
  %4465 = vmatpush2.msra.mxu0 0.0
  %4466 = vmatprep.subr.mxu0 0.0
  %4467 = vmatpush2.msra.mxu0 0.0
  %4468 = vmatprep.subr.mxu0 0.0
  %4469 = vmatpush2.msra.mxu0 0.0
  %4470 = vmatprep.subr.mxu0 0.0
  %4471 = vmatpush2.msra.mxu0 0.0
  %4472 = vmatprep.subr.mxu0 0.0
  %4473 = vmatpush2.msra.mxu0 0.0
  %4474 = vmatprep.subr.mxu0 0.0
  %4475 = vmatpush2.msra.mxu0 0.0
  %4476 = vmatprep.subr.mxu0 0.0
  %4477 = vmatpush2.msra.mxu0 0.0
  %4478 = vmatprep.subr.mxu0 0.0
  %4479 = vmatpush2.msra.mxu0 0.0
  %4480 = vmatprep.subr.mxu0 0.0
  %4481 = vmatpush2.msra.mxu0 0.0
  %4482 = vmatprep.mubr.f32.mxu0 0.0
  %4483 = vmatmul.mubr.f32.gmra.mxu0 %v4387
  %v4484 = vpop.f32.mrf.mxu0
  %v4485 = vadd.f32 %v4416, %v4484
  %v4486 = vpop.f32.mrf.mxu0
  %4487 = vmatprep.mubr.f32.mxu0 0.0
  %4488 = vmatmul.mubr.f32.gmra.mxu0 %v4388
  %v4489 = vpop.f32.mrf.mxu0
  %v4490 = vadd.f32 %v4416, %v4489
  %v4491 = vpop.f32.mrf.mxu0
  %4492 = vmatprep.mubr.f32.mxu0 0.0
  %4493 = vmatmul.mubr.f32.gmra.mxu0 %v4389
  %v4494 = vpop.f32.mrf.mxu0
  %v4495 = vadd.f32 %v4416, %v4494
  %v4496 = vpop.f32.mrf.mxu0
  %4497 = vmatprep.mubr.f32.mxu0 0.0
  %4498 = vmatmul.mubr.f32.gmra.mxu0 %v4390
  %v4499 = vpop.f32.mrf.mxu0
  %v4500 = vadd.f32 %v4416, %v4499
  %v4501 = vpop.f32.mrf.mxu0
  %4502 = vmatprep.mubr.f32.mxu0 0.0
  %4503 = vmatmul.mubr.f32.gmra.mxu0 %v4391
  %v4504 = vpop.f32.mrf.mxu0
  %v4505 = vadd.f32 %v4416, %v4504
  %v4506 = vpop.f32.mrf.mxu0
  %4507 = vmatprep.mubr.f32.mxu0 0.0
  %4508 = vmatmul.mubr.f32.gmra.mxu0 %v4392
  %v4509 = vpop.f32.mrf.mxu0
  %v4510 = vadd.f32 %v4416, %v4509
  %v4511 = vpop.f32.mrf.mxu0
  %4512 = vmatprep.mubr.f32.mxu0 0.0
  %4513 = vmatmul.mubr.f32.gmra.mxu0 %v4393
  %v4514 = vpop.f32.mrf.mxu0
  %v4515 = vadd.f32 %v4416, %v4514
  %v4516 = vpop.f32.mrf.mxu0
  %4517 = vmatprep.mubr.f32.mxu0 0.0
  %4518 = vmatmul.mubr.f32.gmra.mxu0 %v4394
  %v4519 = vpop.f32.mrf.mxu0
  %v4520 = vadd.f32 %v4416, %v4519
  %v4521 = vpop.f32.mrf.mxu0
  %4522 = vdwg.mxu0
  %v4523 = vxor.u32 %v4485, 2147483648
  %v4524 = vxor.u32 %v4490, 2147483648
  %v4525 = vxor.u32 %v4495, 2147483648
  %v4526 = vxor.u32 %v4500, 2147483648
  %v4527 = vxor.u32 %v4505, 2147483648
  %v4528 = vxor.u32 %v4510, 2147483648
  %v4529 = vxor.u32 %v4515, 2147483648
  %v4530 = vxor.u32 %v4520, 2147483648
  %v4531 = vmul.f32 %v4523, 1.442695
  %v4532 = vpow.pop %v4531
  %v4533 = vmul.f32 %v4524, 1.442695
  %v4534 = vpow.pop %v4533
  %v4535 = vmul.f32 %v4525, 1.442695
  %v4536 = vpow.pop %v4535
  %v4537 = vmul.f32 %v4526, 1.442695
  %v4538 = vpow.pop %v4537
  %v4539 = vmul.f32 %v4527, 1.442695
  %v4540 = vpow.pop %v4539
  %v4541 = vmul.f32 %v4528, 1.442695
  %v4542 = vpow.pop %v4541
  %v4543 = vmul.f32 %v4529, 1.442695
  %v4544 = vpow.pop %v4543
  %v4545 = vmul.f32 %v4530, 1.442695
  %v4546 = vpow.pop %v4545
  %v4547 = vadd.f32 %v4532, 1.0
  %v4548 = vadd.f32 %v4534, 1.0
  %v4549 = vadd.f32 %v4536, 1.0
  %v4550 = vadd.f32 %v4538, 1.0
  %v4551 = vadd.f32 %v4540, 1.0
  %v4552 = vadd.f32 %v4542, 1.0
  %v4553 = vadd.f32 %v4544, 1.0
  %v4554 = vadd.f32 %v4546, 1.0
  %v4555 = vrcp.pop %v4547
  %v4556 = vmul.f32 1.0, %v4555
  %v4557 = vrcp.pop %v4548
  %v4558 = vmul.f32 1.0, %v4557
  %v4559 = vrcp.pop %v4549
  %v4560 = vmul.f32 1.0, %v4559
  %v4561 = vrcp.pop %v4550
  %v4562 = vmul.f32 1.0, %v4561
  %v4563 = vrcp.pop %v4551
  %v4564 = vmul.f32 1.0, %v4563
  %v4565 = vrcp.pop %v4552
  %v4566 = vmul.f32 1.0, %v4565
  %v4567 = vrcp.pop %v4553
  %v4568 = vmul.f32 1.0, %v4567
  %v4569 = vrcp.pop %v4554
  %v4570 = vmul.f32 1.0, %v4569
  %4571 = vst [vmem:[%s7] sm:$0xff] %v4556
  %4572 = vst [vmem:[%s7 + $0x8] sm:$0xff] %v4558
  %4573 = vst [vmem:[%s7 + $0x10] sm:$0xff] %v4560
  %4574 = vst [vmem:[%s7 + $0x18] sm:$0xff] %v4562
  %4575 = vst [vmem:[%s7 + $0x20] sm:$0xff] %v4564
  %4576 = vst [vmem:[%s7 + $0x28] sm:$0xff] %v4566
  %4577 = vst [vmem:[%s7 + $0x30] sm:$0xff] %v4568
  %4578 = vst [vmem:[%s7 + $0x38] sm:$0xff] %v4570
  // Predicated region
  $region30: #{generator_forward.1} parent=0 // pred_check
    _
  $region31: #{generator_forward.1} parent=0 // pred_check_branch
    %4580 = sbr.rel (0) target = $region33
  $region32: #{generator_forward.1} parent=0 // pred_region
    _
  $region33: #{generator_forward.1} parent=0 // pred_fallthru
    _
  // Predicated region
  $region34: #{generator_forward.1} parent=0 // pred_check
    _
  $region35: #{generator_forward.1} parent=0 // pred_check_branch
    %4582 = sbr.rel (0) target = $region37
  $region36: #{generator_forward.1} parent=0 // pred_region
    _
  $region37: #{generator_forward.1} parent=0 // pred_fallthru
    _

</llo_original>
